<compile_context>
chip_gen: v5e
topology: v5e:2x2
jax: 0.10.0
libtpu: 0.0.40
codegen_flags: <defaults>
</compile_context>

<pallas_src>
import math

import jax
import jax.numpy as jnp
from jax.experimental import pallas as pl
from jax.experimental.pallas import tpu as pltpu

# ---- config (mirrors ColorModelConfig defaults) ----
HIDDEN    = 32                      # hidden_features
SH_DEGREE = 5
COLOR_CH  = 3                       # color_channels
N_OUT     = COLOR_CH + 1            # rgb + log-luminance channel
SH_DIM    = (SH_DEGREE + 1) ** 2    # 36
SH_PAD    = 40                      # SH_DIM rounded up to a multiple of 8 (sublane align)
BASE_ROW  = N_OUT * SH_PAD          # 160: row offset of the base (diffuse) rgbl in fused layer-2
R2        = BASE_ROW + 8            # 168: fused layer-2 output rows (8-aligned)
H2        = 2 * HIDDEN              # 64:  fused hidden width (base ++ directional)
LN_EPS    = 1e-5                    # torch.nn.LayerNorm default eps


def _sh_norm_constants(degree):
    """Per-basis normalization alpha_j with sh_j = alpha_j * ub_j, where ub_j is the
    unnormalized basis produced by `_sh_unnorm_basis_list` (Q[(m,m)] seeded to 1).
    Folded into the packed W2 / b2 at pack time (zero runtime cost)."""
    alphas = []
    for l in range(degree + 1):
        for m in range(-l, l + 1):
            am = abs(m)
            dfact = 1.0
            for k in range(1, 2 * am, 2):
                dfact *= k
            K = math.sqrt((2 * l + 1) * math.factorial(l - am)
                          / (4.0 * math.pi * math.factorial(l + am)))
            a = K * ((-1.0) ** am) * dfact
            if m != 0:
                a *= math.sqrt(2.0)
            alphas.append(a)
    return alphas


def _sh_unnorm_basis_list(x, y, z, degree):
    """Unnormalized real-SH basis at unit direction (x, y, z): minimal elementwise ops.

    x, y, z: arrays of identical shape.  Returns (degree+1)**2 arrays of that shape.
    Seeds Q[(m,m)] = 1 (true double-factorial / sign / K(l,m) / sqrt(2) factors are
    folded into the weights by the caller).  Recursion divisors folded into Python
    constants.  Pure elementwise VPU ops."""
    one = jnp.ones_like(z)
    # A_m = Re[(x + i y)^m], B_m = Im[(x + i y)^m]
    A, B = [one], [jnp.zeros_like(z)]
    for m in range(1, degree + 1):
        if m == 1:
            A.append(x)
            B.append(y)
        else:
            A.append(x * A[m - 1] - y * B[m - 1])
            B.append(x * B[m - 1] + y * A[m - 1])
    Q = {}
    for m in range(degree + 1):
        Q[(m, m)] = one
        if m + 1 <= degree:
            Q[(m + 1, m)] = (2.0 * m + 1.0) * z
        for l in range(m + 2, degree + 1):
            c1 = (2.0 * l - 1.0) / float(l - m)
            c2 = (l + m - 1.0) / float(l - m)
            Q[(l, m)] = c1 * z * Q[(l - 1, m)] - c2 * Q[(l - 2, m)]

    cols = []
    for l in range(degree + 1):
        for m in range(-l, l + 1):
            if m == 0:
                cols.append(Q[(l, 0)])
            elif m > 0:
                cols.append(A[m] if l == m else Q[(l, m)] * A[m])
            else:
                cols.append(B[-m] if l == -m else Q[(l, -m)] * B[-m])
    return cols


def _color_kernel(pf_ref, glo_ref, pos_ref, cam_ref, w_ref, b_ref, out_ref):
    PF, T = pf_ref.shape
    GF = glo_ref.shape[0]
    F = PF + GF

    # ---- feature = LayerNorm(concat(point_features, glo)), channel-major [F, T] ----
    glo = jnp.broadcast_to(glo_ref[...], (GF, T))
    feat = jnp.concatenate([pf_ref[...], glo], axis=0)                    # [F, T] f32
    mean = jnp.mean(feat, axis=0, keepdims=True)                          # [1, T]
    cent = feat - mean
    var = jnp.mean(cent * cent, axis=0, keepdims=True)
    featb = (cent * jax.lax.rsqrt(var + LN_EPS)).astype(jnp.bfloat16)     # bf16 for MXU

    # ---- fused MLPs (base ++ directional), block-diagonal packed weights ----
    w0 = w_ref[0:H2, 0:F]                  # [64, F]   bf16
    w1 = w_ref[H2:2 * H2, 0:H2]            # [64, 64]  bf16 (block-diag)
    w2 = w_ref[2 * H2:2 * H2 + R2, 0:H2]   # [168, 64] bf16 (SH coeff proj + base head)
    b0 = b_ref[0:H2, :]                    # [64, 1]   f32
    b1 = b_ref[H2:2 * H2, :]
    b2 = b_ref[2 * H2:2 * H2 + R2, :]      # [168, 1]  f32

    h = jnp.dot(w0, featb, preferred_element_type=jnp.float32) + b0       # [64, T]
    h = jnp.maximum(h, 0.0).astype(jnp.bfloat16)
    h = jnp.dot(w1, h, preferred_element_type=jnp.float32) + b1
    h = jnp.maximum(h, 0.0).astype(jnp.bfloat16)
    out2 = jnp.dot(w2, h, preferred_element_type=jnp.float32) + b2        # [168, T] f32

    # ---- diffuse = luminance_activation(base rgbl), intensity_bias = 0 ----
    base = out2[BASE_ROW:BASE_ROW + 8, :]
    lum_d = jnp.exp(base[0:1, :])                                         # [1, T]
    diffuse_rows = jax.nn.sigmoid(base[1:1 + COLOR_CH, :]) * lum_d        # [3, T]

    # ---- view direction: normalize(positions - cam_pos), lane-dense [3, T] ----
    d = pos_ref[...] - cam_ref[...]                                       # [3, T]
    inv = jax.lax.rsqrt(jnp.maximum(jnp.sum(d * d, axis=0, keepdims=True), 1e-24))
    dn = d * inv
    cols = _sh_unnorm_basis_list(dn[0:1, :], dn[1:2, :], dn[2:3, :], SH_DEGREE)
    zero1 = jnp.zeros((1, T), jnp.float32)

    # ---- SH contraction: dense [8, T] groups, register resident (no scratch) ----
    # SH normalization constants are already folded into the out2 coefficient rows.
    acc = [None] * N_OUT
    for g in range(SH_PAD // 8):
        rows = cols[8 * g:8 * g + 8]
        rows = rows + [zero1] * (8 - len(rows))           # pad last group (coeffs are 0)
        grp = jnp.concatenate(rows, axis=0)                               # [8, T]
        for c in range(N_OUT):
            prod = out2[c * SH_PAD + 8 * g:c * SH_PAD + 8 * g + 8, :] * grp
            acc[c] = prod if acc[c] is None else acc[c] + prod
    logits = [jnp.sum(a, axis=0, keepdims=True) for a in acc]             # 4 x [1, T]

    # ---- specular = luminance_activation(SH-contracted coeffs), intensity_bias = -2 ----
    lum_s = jnp.exp(logits[0] - 2.0)
    spec_rows = jnp.concatenate(
        [jax.nn.sigmoid(logits[c]) for c in range(1, N_OUT)], axis=0) * lum_s   # [3, T]

    # ---- one unmasked, lane-dense [8, T] store ----
    out_ref[...] = jnp.concatenate([diffuse_rows, zero1, spec_rows, zero1], axis=0)


def pack_params(params, feature_size):
    """Pack the 12 torch-style [in, out] weights into one bf16 weight slab and one f32
    bias column: fused/block-diagonal, channel-major, with the SH normalization
    constants folded into the SH-coefficient rows."""
    (bw0, bb0, bw1, bb1, bw2, bb2, dw0, db0, dw1, db1, pw, pb) = params
    H = HIDDEN
    W = max(H2, feature_size)   # pack width (lane dim)
    alpha = jnp.asarray(_sh_norm_constants(SH_DEGREE), jnp.float32)       # [36]

    W0 = jnp.zeros((H2, W), jnp.float32)
    W0 = W0.at[0:H, 0:feature_size].set(bw0.T)
    W0 = W0.at[H:H2, 0:feature_size].set(dw0.T)

    W1 = jnp.zeros((H2, W), jnp.float32)
    W1 = W1.at[0:H, 0:H].set(bw1.T)
    W1 = W1.at[H:H2, H:H2].set(dw1.T)

    W2 = jnp.zeros((R2, W), jnp.float32)
    b2 = jnp.zeros((R2,), jnp.float32)
    pbf = pb.reshape(-1)
    for c in range(N_OUT):
        r = c * SH_PAD
        wc = pw[:, c * SH_DIM:(c + 1) * SH_DIM].T * alpha[:, None]        # fold alpha_j
        bc = pbf[c * SH_DIM:(c + 1) * SH_DIM] * alpha
        W2 = W2.at[r:r + SH_DIM, H:H2].set(wc)
        b2 = b2.at[r:r + SH_DIM].set(bc)
    W2 = W2.at[BASE_ROW:BASE_ROW + N_OUT, 0:H].set(bw2.T)
    b2 = b2.at[BASE_ROW:BASE_ROW + N_OUT].set(bb2.reshape(-1))

    b0 = jnp.concatenate([bb0.reshape(-1), db0.reshape(-1)])
    b1 = jnp.concatenate([bb1.reshape(-1), db1.reshape(-1)])

    Wpack = jnp.concatenate([W0, W1, W2], axis=0).astype(jnp.bfloat16)    # [296, W] bf16
    Bpack = jnp.concatenate([b0, b1, b2], axis=0).reshape(-1, 1).astype(jnp.float32)
    return Wpack, Bpack


def color_model_forward(point_features, positions, cam_pos, glo_feature, params, *, tile=4096):
    """Returns (diffuse [N,3], specular [N,3]) — the Colors tensorclass fields."""
    N, PF = point_features.shape
    GF = glo_feature.shape[1]
    F = PF + GF

    Wpack, Bpack = pack_params(params, F)

    # Large tile amortizes per-grid-step overhead.  Cap at 8192 (~14 MB of live VMEM
    # intermediates, safe under the 32 MiB scoped limit requested below on every
    # generation incl. v7x's 64 MiB physical VMEM) and keep >=2 grid steps so the
    # "parallel" axis can still be sharded across both v7x TensorCores.
    tile = min(tile, 8192, pl.cdiv(pl.cdiv(N, 2), 128) * 128)
    tile = max(128, (tile // 128) * 128)
    n_pad = pl.cdiv(N, tile) * tile

    # Transpose to channel-major [C, N] (lane-dense point axis) and zero-pad the tail.
    pf_t = jnp.pad(point_features.astype(jnp.float32).T, ((0, 0), (0, n_pad - N)))
    pos_t = jnp.pad(positions.astype(jnp.float32).T, ((0, 0), (0, n_pad - N)))
    glo_t = glo_feature.astype(jnp.float32).T          # [GF, 1]
    cam = cam_pos.astype(jnp.float32).reshape(3, 1)    # [3, 1]

    flops = 2 * n_pad * (H2 * F + H2 * H2 + R2 * H2)
    cost = pl.CostEstimate(
        flops=int(flops),
        transcendentals=int(10 * n_pad),
        bytes_accessed=int(n_pad * (PF * 4 + 3 * 4 + 8 * 4)
                           + Wpack.size * 2 + Bpack.size * 4),
    )

    out = pl.pallas_call(
        _color_kernel,
        out_shape=jax.ShapeDtypeStruct((8, n_pad), jnp.float32),
        grid_spec=pltpu.PrefetchScalarGridSpec(
            num_scalar_prefetch=0,
            grid=(n_pad // tile,),
            in_specs=[
                pl.BlockSpec((PF, tile), lambda i: (0, i)),       # point_features [PF, N]
                pl.BlockSpec((GF, 1), lambda i: (0, 0)),          # glo_feature (broadcast)
                pl.BlockSpec((3, tile), lambda i: (0, i)),        # positions [3, N]
                pl.BlockSpec((3, 1), lambda i: (0, 0)),           # cam_pos
                pl.BlockSpec(Wpack.shape, lambda i: (0, 0)),      # packed weights (resident)
                pl.BlockSpec(Bpack.shape, lambda i: (0, 0)),      # packed biases (resident)
            ],
            out_specs=pl.BlockSpec((8, tile), lambda i: (0, i)),  # lane-dense [8, N] slab
        ),
        compiler_params=pltpu.CompilerParams(
            dimension_semantics=("parallel",),
            vmem_limit_bytes=32 * 1024 * 1024,
        ),
        cost_estimate=cost,
    )(pf_t, glo_t, pos_t, cam, Wpack, Bpack)

    diffuse = out[0:COLOR_CH, :N].T
    specular = out[N_OUT:N_OUT + COLOR_CH, :N].T
    return diffuse, specular


def init_params(key, feature_size):
    """Deterministic synthetic weights (PyTorch-Linear-style uniform init), [in, out]."""
    def linear(k, fin, fout):
        kw, kb = jax.random.split(k)
        lim = 1.0 / math.sqrt(fin)
        w = jax.random.uniform(kw, (fin, fout), jnp.float32, -lim, lim)
        b = jax.random.uniform(kb, (1, fout), jnp.float32, -lim, lim)
        return w, b

    keys = jax.random.split(key, 6)
    bw0, bb0 = linear(keys[0], feature_size, HIDDEN)          # base_model layer 0
    bw1, bb1 = linear(keys[1], HIDDEN, HIDDEN)                # base_model layer 1
    bw2, bb2 = linear(keys[2], HIDDEN, N_OUT)                 # base_model output
    dw0, db0 = linear(keys[3], feature_size, HIDDEN)          # directional body 0
    dw1, db1 = linear(keys[4], HIDDEN, HIDDEN)                # directional body 1
    pw,  pb  = linear(keys[5], HIDDEN, N_OUT * SH_DIM)        # SH-coefficient projection
    return (bw0, bb0, bw1, bb1, bw2, bb2, dw0, db0, dw1, db1, pw, pb)


def reference_forward(point_features, positions, cam_pos, glo_feature, params):
    """Pure-JAX f32 reference of the same forward pass (for correctness checking)."""
    (bw0, bb0, bw1, bb1, bw2, bb2, dw0, db0, dw1, db1, pw, pb) = params
    N = positions.shape[0]
    glo = jnp.broadcast_to(glo_feature, (N, glo_feature.shape[1]))
    feat = jnp.concatenate([point_features, glo], axis=1)
    mean = feat.mean(-1, keepdims=True)
    var = jnp.square(feat - mean).mean(-1, keepdims=True)
    feat = (feat - mean) / jnp.sqrt(var + LN_EPS)

    h = jax.nn.relu(feat @ bw0 + bb0)
    h = jax.nn.relu(h @ bw1 + bb1)
    rgbl = h @ bw2 + bb2
    diffuse = jax.nn.sigmoid(rgbl[:, 1:]) * jnp.exp(rgbl[:, 0:1])

    d = positions - cam_pos[None, :]
    d = d / jnp.maximum(jnp.linalg.norm(d, axis=1, keepdims=True), 1e-12)
    alphas = _sh_norm_constants(SH_DEGREE)
    cols = _sh_unnorm_basis_list(d[:, 0:1], d[:, 1:2], d[:, 2:3], SH_DEGREE)
    sh = jnp.concatenate([a * c for a, c in zip(alphas, cols)], axis=-1)  # [N, 36]

    hd = jax.nn.relu(feat @ dw0 + db0)
    hd = jax.nn.relu(hd @ dw1 + db1)
    coeffs = hd @ pw + pb
    rgbl_s = jnp.stack(
        [jnp.sum(coeffs[:, c * SH_DIM:(c + 1) * SH_DIM] * sh, axis=-1) for c in range(N_OUT)],
        axis=-1)
    specular = jax.nn.sigmoid(rgbl_s[:, 1:]) * jnp.exp(rgbl_s[:, 0:1] - 2.0)
    return diffuse, specular


if __name__ == "__main__":
    key = jax.random.PRNGKey(0)
    k1, k2, k3, k4, k5 = jax.random.split(key, 5)

    N, PF, GF = 1000, 16, 16                 # points (not a tile multiple), point/glo features
    point_features = jax.random.normal(k1, (N, PF), jnp.float32)
    positions = jax.random.normal(k2, (N, 3), jnp.float32) * 5.0
    cam_pos = jax.random.normal(k3, (3,), jnp.float32)
    glo_feature = jax.random.normal(k4, (1, GF), jnp.float32)
    params = init_params(k5, PF + GF)

    diffuse, specular = color_model_forward(
        point_features, positions, cam_pos, glo_feature, params)
    jax.block_until_ready((diffuse, specular))

    ref_d, ref_s = reference_forward(point_features, positions, cam_pos, glo_feature, params)
    assert diffuse.shape == (N, COLOR_CH) and specular.shape == (N, COLOR_CH)
    # bf16 matmul operands (f32 accumulate) => relaxed tolerance vs the f32 reference.
    assert jnp.allclose(diffuse, ref_d, atol=3e-2, rtol=3e-2), "diffuse mismatch vs reference"
    assert jnp.allclose(specular, ref_s, atol=3e-2, rtol=3e-2), "specular mismatch vs reference"

    print("KERNEL_OK")
</pallas_src>

<mosaic_0001>
module attributes {stable_mosaic.version = 11 : i64} {
  func.func @_color_kernel(%arg0: i32, %arg1: memref<16x512xf32, #tpu.memory_space<vmem>>, %arg2: memref<16x1xf32, #tpu.memory_space<vmem>>, %arg3: memref<3x512xf32, #tpu.memory_space<vmem>>, %arg4: memref<3x1xf32, #tpu.memory_space<vmem>>, %arg5: memref<296x64xbf16, #tpu.memory_space<vmem>>, %arg6: memref<296x1xf32, #tpu.memory_space<vmem>>, %arg7: memref<8x512xf32, #tpu.memory_space<vmem>>) attributes {dimension_semantics = [#tpu.dimension_semantics<parallel>], iteration_bounds = array<i64: 2>, scalar_prefetch = 0 : i64, scratch_operands = 0 : i64, tpu.core_type = #tpu.core_type<tc>, window_params = [{transform_indices = @transform_0, window_bounds = array<i64: 16, 512>}, {pipeline_mode = #tpu.pipeline_mode<synchronous>, transform_indices = @transform_1, window_bounds = array<i64: 16, 1>}, {transform_indices = @transform_2, window_bounds = array<i64: 3, 512>}, {pipeline_mode = #tpu.pipeline_mode<synchronous>, transform_indices = @transform_3, window_bounds = array<i64: 3, 1>}, {pipeline_mode = #tpu.pipeline_mode<synchronous>, transform_indices = @transform_4, window_bounds = array<i64: 296, 64>}, {pipeline_mode = #tpu.pipeline_mode<synchronous>, transform_indices = @transform_5, window_bounds = array<i64: 296, 1>}, {transform_indices = @transform_6, window_bounds = array<i64: 8, 512>}]} {
    %c0 = arith.constant 0 : index
    %c0_0 = arith.constant 0 : index
    %0 = vector.load %arg2[%c0, %c0_0] : memref<16x1xf32, #tpu.memory_space<vmem>>, vector<16x1xf32>
    %1 = vector.shape_cast %0 : vector<16x1xf32> to vector<16x1xf32>
    %2 = vector.broadcast %1 : vector<16x1xf32> to vector<16x512xf32>
    %c0_1 = arith.constant 0 : index
    %c0_2 = arith.constant 0 : index
    %3 = vector.load %arg1[%c0_1, %c0_2] : memref<16x512xf32, #tpu.memory_space<vmem>>, vector<16x512xf32>
    %4 = tpu.concatenate %3, %2 in 0 : vector<16x512xf32>, vector<16x512xf32> -> vector<32x512xf32>
    %cst = arith.constant dense<0.000000e+00> : vector<512xf32>
    %5 = vector.multi_reduction <add>, %4, %cst [0] : vector<32x512xf32> to vector<512xf32>
    %6 = vector.shape_cast %5 : vector<512xf32> to vector<1x512xf32>
    %cst_3 = arith.constant 3.200000e+01 : f32
    %7 = vector.broadcast %cst_3 : f32 to vector<1x512xf32>
    %8 = arith.divf %6, %7 : vector<1x512xf32>
    %9 = vector.broadcast %8 : vector<1x512xf32> to vector<32x512xf32>
    %10 = arith.subf %4, %9 : vector<32x512xf32>
    %11 = arith.mulf %10, %10 : vector<32x512xf32>
    %cst_4 = arith.constant dense<0.000000e+00> : vector<512xf32>
    %12 = vector.multi_reduction <add>, %11, %cst_4 [0] : vector<32x512xf32> to vector<512xf32>
    %13 = vector.shape_cast %12 : vector<512xf32> to vector<1x512xf32>
    %cst_5 = arith.constant 3.200000e+01 : f32
    %14 = vector.broadcast %cst_5 : f32 to vector<1x512xf32>
    %15 = arith.divf %13, %14 : vector<1x512xf32>
    %cst_6 = arith.constant 9.99999974E-6 : f32
    %16 = vector.broadcast %cst_6 : f32 to vector<1x512xf32>
    %17 = arith.addf %15, %16 : vector<1x512xf32>
    %18 = math.rsqrt %17 : vector<1x512xf32>
    %19 = vector.broadcast %18 : vector<1x512xf32> to vector<32x512xf32>
    %20 = arith.mulf %10, %19 : vector<32x512xf32>
    %21 = arith.truncf %20 : vector<32x512xf32> to vector<32x512xbf16>
    %c0_7 = arith.constant 0 : index
    %c0_8 = arith.constant 0 : index
    %22 = vector.load %arg5[%c0_7, %c0_8] : memref<296x64xbf16, #tpu.memory_space<vmem>>, vector<64x32xbf16>
    %c64 = arith.constant 64 : index
    %c0_9 = arith.constant 0 : index
    %23 = vector.load %arg5[%c64, %c0_9] : memref<296x64xbf16, #tpu.memory_space<vmem>>, vector<64x64xbf16>
    %c128 = arith.constant 128 : index
    %c0_10 = arith.constant 0 : index
    %24 = vector.load %arg5[%c128, %c0_10] : memref<296x64xbf16, #tpu.memory_space<vmem>>, vector<168x64xbf16>
    %c0_11 = arith.constant 0 : index
    %c0_12 = arith.constant 0 : index
    %25 = vector.load %arg6[%c0_11, %c0_12] : memref<296x1xf32, #tpu.memory_space<vmem>>, vector<64x1xf32>
    %c64_13 = arith.constant 64 : index
    %c0_14 = arith.constant 0 : index
    %26 = vector.load %arg6[%c64_13, %c0_14] : memref<296x1xf32, #tpu.memory_space<vmem>>, vector<64x1xf32>
    %c128_15 = arith.constant 128 : index
    %c0_16 = arith.constant 0 : index
    %27 = vector.load %arg6[%c128_15, %c0_16] : memref<296x1xf32, #tpu.memory_space<vmem>>, vector<168x1xf32>
    %cst_17 = arith.constant dense<0.000000e+00> : vector<64x512xf32>
    %28 = tpu.matmul %22, %21, %cst_17 {dimension_numbers = #tpu.dot_dimension_numbers<[1], [0], [0], [1], [0, 0, 1, 1], [], []>} : vector<64x32xbf16>, vector<32x512xbf16>, vector<64x512xf32> -> vector<64x512xf32>
    %29 = vector.broadcast %25 : vector<64x1xf32> to vector<64x512xf32>
    %30 = arith.addf %28, %29 : vector<64x512xf32>
    %cst_18 = arith.constant 0.000000e+00 : f32
    %31 = vector.broadcast %cst_18 : f32 to vector<64x512xf32>
    %32 = arith.maximumf %30, %31 : vector<64x512xf32>
    %33 = arith.truncf %32 : vector<64x512xf32> to vector<64x512xbf16>
    %cst_19 = arith.constant dense<0.000000e+00> : vector<64x512xf32>
    %34 = tpu.matmul %23, %33, %cst_19 {dimension_numbers = #tpu.dot_dimension_numbers<[1], [0], [0], [1], [0, 0, 1, 1], [], []>} : vector<64x64xbf16>, vector<64x512xbf16>, vector<64x512xf32> -> vector<64x512xf32>
    %35 = vector.broadcast %26 : vector<64x1xf32> to vector<64x512xf32>
    %36 = arith.addf %34, %35 : vector<64x512xf32>
    %cst_20 = arith.constant 0.000000e+00 : f32
    %37 = vector.broadcast %cst_20 : f32 to vector<64x512xf32>
    %38 = arith.maximumf %36, %37 : vector<64x512xf32>
    %39 = arith.truncf %38 : vector<64x512xf32> to vector<64x512xbf16>
    %cst_21 = arith.constant dense<0.000000e+00> : vector<168x512xf32>
    %40 = tpu.matmul %24, %39, %cst_21 {dimension_numbers = #tpu.dot_dimension_numbers<[1], [0], [0], [1], [0, 0, 1, 1], [], []>} : vector<168x64xbf16>, vector<64x512xbf16>, vector<168x512xf32> -> vector<168x512xf32>
    %41 = vector.broadcast %27 : vector<168x1xf32> to vector<168x512xf32>
    %42 = arith.addf %40, %41 : vector<168x512xf32>
    %43 = vector.extract_strided_slice %42 {offsets = [160, 0], sizes = [8, 512], strides = [1, 1]} : vector<168x512xf32> to vector<8x512xf32>
    %44 = vector.extract_strided_slice %43 {offsets = [0, 0], sizes = [1, 512], strides = [1, 1]} : vector<8x512xf32> to vector<1x512xf32>
    %45 = math.exp %44 : vector<1x512xf32>
    %46 = vector.extract_strided_slice %43 {offsets = [1, 0], sizes = [3, 512], strides = [1, 1]} : vector<8x512xf32> to vector<3x512xf32>
    %47 = arith.negf %46 : vector<3x512xf32>
    %48 = math.exp %47 : vector<3x512xf32>
    %cst_22 = arith.constant 1.000000e+00 : f32
    %49 = vector.broadcast %cst_22 : f32 to vector<3x512xf32>
    %50 = arith.addf %49, %48 : vector<3x512xf32>
    %51 = arith.divf %49, %50 : vector<3x512xf32>
    %52 = vector.broadcast %45 : vector<1x512xf32> to vector<3x512xf32>
    %53 = arith.mulf %51, %52 : vector<3x512xf32>
    %c0_23 = arith.constant 0 : index
    %c0_24 = arith.constant 0 : index
    %54 = vector.load %arg3[%c0_23, %c0_24] : memref<3x512xf32, #tpu.memory_space<vmem>>, vector<3x512xf32>
    %c0_25 = arith.constant 0 : index
    %c0_26 = arith.constant 0 : index
    %55 = vector.load %arg4[%c0_25, %c0_26] : memref<3x1xf32, #tpu.memory_space<vmem>>, vector<3x1xf32>
    %56 = vector.broadcast %55 : vector<3x1xf32> to vector<3x512xf32>
    %57 = arith.subf %54, %56 : vector<3x512xf32>
    %58 = arith.mulf %57, %57 : vector<3x512xf32>
    %cst_27 = arith.constant dense<0.000000e+00> : vector<512xf32>
    %59 = vector.multi_reduction <add>, %58, %cst_27 [0] : vector<3x512xf32> to vector<512xf32>
    %60 = vector.shape_cast %59 : vector<512xf32> to vector<1x512xf32>
    %cst_28 = arith.constant 1.000000e-24 : f32
    %61 = vector.broadcast %cst_28 : f32 to vector<1x512xf32>
    %62 = arith.maximumf %60, %61 : vector<1x512xf32>
    %63 = math.rsqrt %62 : vector<1x512xf32>
    %64 = vector.broadcast %63 : vector<1x512xf32> to vector<3x512xf32>
    %65 = arith.mulf %57, %64 : vector<3x512xf32>
    %66 = vector.extract_strided_slice %65 {offsets = [0, 0], sizes = [1, 512], strides = [1, 1]} : vector<3x512xf32> to vector<1x512xf32>
    %67 = vector.extract_strided_slice %65 {offsets = [1, 0], sizes = [1, 512], strides = [1, 1]} : vector<3x512xf32> to vector<1x512xf32>
    %68 = vector.extract_strided_slice %65 {offsets = [2, 0], sizes = [1, 512], strides = [1, 1]} : vector<3x512xf32> to vector<1x512xf32>
    %cst_29 = arith.constant 1.000000e+00 : f32
    %69 = vector.broadcast %cst_29 : f32 to vector<1x512xf32>
    %70 = arith.mulf %66, %66 : vector<1x512xf32>
    %71 = arith.mulf %67, %67 : vector<1x512xf32>
    %72 = arith.subf %70, %71 : vector<1x512xf32>
    %73 = arith.mulf %66, %67 : vector<1x512xf32>
    %74 = arith.mulf %67, %66 : vector<1x512xf32>
    %75 = arith.addf %73, %74 : vector<1x512xf32>
    %76 = arith.mulf %66, %72 : vector<1x512xf32>
    %77 = arith.mulf %67, %75 : vector<1x512xf32>
    %78 = arith.subf %76, %77 : vector<1x512xf32>
    %79 = arith.mulf %66, %75 : vector<1x512xf32>
    %80 = arith.mulf %67, %72 : vector<1x512xf32>
    %81 = arith.addf %79, %80 : vector<1x512xf32>
    %82 = arith.mulf %66, %78 : vector<1x512xf32>
    %83 = arith.mulf %67, %81 : vector<1x512xf32>
    %84 = arith.subf %82, %83 : vector<1x512xf32>
    %85 = arith.mulf %66, %81 : vector<1x512xf32>
    %86 = arith.mulf %67, %78 : vector<1x512xf32>
    %87 = arith.addf %85, %86 : vector<1x512xf32>
    %88 = arith.mulf %66, %84 : vector<1x512xf32>
    %89 = arith.mulf %67, %87 : vector<1x512xf32>
    %90 = arith.subf %88, %89 : vector<1x512xf32>
    %91 = arith.mulf %66, %87 : vector<1x512xf32>
    %92 = arith.mulf %67, %84 : vector<1x512xf32>
    %93 = arith.addf %91, %92 : vector<1x512xf32>
    %cst_30 = arith.constant 1.000000e+00 : f32
    %94 = vector.broadcast %cst_30 : f32 to vector<1x512xf32>
    %95 = arith.mulf %94, %68 : vector<1x512xf32>
    %cst_31 = arith.constant 1.500000e+00 : f32
    %96 = vector.broadcast %cst_31 : f32 to vector<1x512xf32>
    %97 = arith.mulf %96, %68 : vector<1x512xf32>
    %98 = arith.mulf %97, %95 : vector<1x512xf32>
    %cst_32 = arith.constant 5.000000e-01 : f32
    %99 = vector.broadcast %cst_32 : f32 to vector<1x512xf32>
    %100 = arith.mulf %99, %69 : vector<1x512xf32>
    %101 = arith.subf %98, %100 : vector<1x512xf32>
    %cst_33 = arith.constant 1.66666663 : f32
    %102 = vector.broadcast %cst_33 : f32 to vector<1x512xf32>
    %103 = arith.mulf %102, %68 : vector<1x512xf32>
    %104 = arith.mulf %103, %101 : vector<1x512xf32>
    %cst_34 = arith.constant 0.666666686 : f32
    %105 = vector.broadcast %cst_34 : f32 to vector<1x512xf32>
    %106 = arith.mulf %105, %95 : vector<1x512xf32>
    %107 = arith.subf %104, %106 : vector<1x512xf32>
    %cst_35 = arith.constant 1.750000e+00 : f32
    %108 = vector.broadcast %cst_35 : f32 to vector<1x512xf32>
    %109 = arith.mulf %108, %68 : vector<1x512xf32>
    %110 = arith.mulf %109, %107 : vector<1x512xf32>
    %cst_36 = arith.constant 7.500000e-01 : f32
    %111 = vector.broadcast %cst_36 : f32 to vector<1x512xf32>
    %112 = arith.mulf %111, %101 : vector<1x512xf32>
    %113 = arith.subf %110, %112 : vector<1x512xf32>
    %cst_37 = arith.constant 1.800000e+00 : f32
    %114 = vector.broadcast %cst_37 : f32 to vector<1x512xf32>
    %115 = arith.mulf %114, %68 : vector<1x512xf32>
    %116 = arith.mulf %115, %113 : vector<1x512xf32>
    %cst_38 = arith.constant 8.000000e-01 : f32
    %117 = vector.broadcast %cst_38 : f32 to vector<1x512xf32>
    %118 = arith.mulf %117, %107 : vector<1x512xf32>
    %119 = arith.subf %116, %118 : vector<1x512xf32>
    %cst_39 = arith.constant 3.000000e+00 : f32
    %120 = vector.broadcast %cst_39 : f32 to vector<1x512xf32>
    %121 = arith.mulf %120, %68 : vector<1x512xf32>
    %cst_40 = arith.constant 2.500000e+00 : f32
    %122 = vector.broadcast %cst_40 : f32 to vector<1x512xf32>
    %123 = arith.mulf %122, %68 : vector<1x512xf32>
    %124 = arith.mulf %123, %121 : vector<1x512xf32>
    %cst_41 = arith.constant 1.500000e+00 : f32
    %125 = vector.broadcast %cst_41 : f32 to vector<1x512xf32>
    %126 = arith.mulf %125, %69 : vector<1x512xf32>
    %127 = arith.subf %124, %126 : vector<1x512xf32>
    %cst_42 = arith.constant 2.33333325 : f32
    %128 = vector.broadcast %cst_42 : f32 to vector<1x512xf32>
    %129 = arith.mulf %128, %68 : vector<1x512xf32>
    %130 = arith.mulf %129, %127 : vector<1x512xf32>
    %cst_43 = arith.constant 1.33333337 : f32
    %131 = vector.broadcast %cst_43 : f32 to vector<1x512xf32>
    %132 = arith.mulf %131, %121 : vector<1x512xf32>
    %133 = arith.subf %130, %132 : vector<1x512xf32>
    %cst_44 = arith.constant 2.250000e+00 : f32
    %134 = vector.broadcast %cst_44 : f32 to vector<1x512xf32>
    %135 = arith.mulf %134, %68 : vector<1x512xf32>
    %136 = arith.mulf %135, %133 : vector<1x512xf32>
    %cst_45 = arith.constant 1.250000e+00 : f32
    %137 = vector.broadcast %cst_45 : f32 to vector<1x512xf32>
    %138 = arith.mulf %137, %127 : vector<1x512xf32>
    %139 = arith.subf %136, %138 : vector<1x512xf32>
    %cst_46 = arith.constant 5.000000e+00 : f32
    %140 = vector.broadcast %cst_46 : f32 to vector<1x512xf32>
    %141 = arith.mulf %140, %68 : vector<1x512xf32>
    %cst_47 = arith.constant 3.500000e+00 : f32
    %142 = vector.broadcast %cst_47 : f32 to vector<1x512xf32>
    %143 = arith.mulf %142, %68 : vector<1x512xf32>
    %144 = arith.mulf %143, %141 : vector<1x512xf32>
    %cst_48 = arith.constant 2.500000e+00 : f32
    %145 = vector.broadcast %cst_48 : f32 to vector<1x512xf32>
    %146 = arith.mulf %145, %69 : vector<1x512xf32>
    %147 = arith.subf %144, %146 : vector<1x512xf32>
    %cst_49 = arith.constant 3.000000e+00 : f32
    %148 = vector.broadcast %cst_49 : f32 to vector<1x512xf32>
    %149 = arith.mulf %148, %68 : vector<1x512xf32>
    %150 = arith.mulf %149, %147 : vector<1x512xf32>
    %cst_50 = arith.constant 2.000000e+00 : f32
    %151 = vector.broadcast %cst_50 : f32 to vector<1x512xf32>
    %152 = arith.mulf %151, %141 : vector<1x512xf32>
    %153 = arith.subf %150, %152 : vector<1x512xf32>
    %cst_51 = arith.constant 7.000000e+00 : f32
    %154 = vector.broadcast %cst_51 : f32 to vector<1x512xf32>
    %155 = arith.mulf %154, %68 : vector<1x512xf32>
    %cst_52 = arith.constant 4.500000e+00 : f32
    %156 = vector.broadcast %cst_52 : f32 to vector<1x512xf32>
    %157 = arith.mulf %156, %68 : vector<1x512xf32>
    %158 = arith.mulf %157, %155 : vector<1x512xf32>
    %cst_53 = arith.constant 3.500000e+00 : f32
    %159 = vector.broadcast %cst_53 : f32 to vector<1x512xf32>
    %160 = arith.mulf %159, %69 : vector<1x512xf32>
    %161 = arith.subf %158, %160 : vector<1x512xf32>
    %cst_54 = arith.constant 9.000000e+00 : f32
    %162 = vector.broadcast %cst_54 : f32 to vector<1x512xf32>
    %163 = arith.mulf %162, %68 : vector<1x512xf32>
    %164 = arith.mulf %121, %67 : vector<1x512xf32>
    %165 = arith.mulf %121, %66 : vector<1x512xf32>
    %166 = arith.mulf %141, %75 : vector<1x512xf32>
    %167 = arith.mulf %127, %67 : vector<1x512xf32>
    %168 = arith.mulf %127, %66 : vector<1x512xf32>
    %169 = arith.mulf %141, %72 : vector<1x512xf32>
    %170 = arith.mulf %155, %81 : vector<1x512xf32>
    %171 = arith.mulf %147, %75 : vector<1x512xf32>
    %172 = arith.mulf %133, %67 : vector<1x512xf32>
    %173 = arith.mulf %133, %66 : vector<1x512xf32>
    %174 = arith.mulf %147, %72 : vector<1x512xf32>
    %175 = arith.mulf %155, %78 : vector<1x512xf32>
    %176 = arith.mulf %163, %87 : vector<1x512xf32>
    %177 = arith.mulf %161, %81 : vector<1x512xf32>
    %178 = arith.mulf %153, %75 : vector<1x512xf32>
    %179 = arith.mulf %139, %67 : vector<1x512xf32>
    %180 = arith.mulf %139, %66 : vector<1x512xf32>
    %181 = arith.mulf %153, %72 : vector<1x512xf32>
    %182 = arith.mulf %161, %78 : vector<1x512xf32>
    %183 = arith.mulf %163, %84 : vector<1x512xf32>
    %cst_55 = arith.constant 0.000000e+00 : f32
    %184 = vector.broadcast %cst_55 : f32 to vector<1x512xf32>
    %185 = tpu.concatenate %69, %67, %95, %66, %75, %164, %101, %165 in 0 : vector<1x512xf32>, vector<1x512xf32>, vector<1x512xf32>, vector<1x512xf32>, vector<1x512xf32>, vector<1x512xf32>, vector<1x512xf32>, vector<1x512xf32> -> vector<8x512xf32>
    %186 = vector.extract_strided_slice %42 {offsets = [0, 0], sizes = [8, 512], strides = [1, 1]} : vector<168x512xf32> to vector<8x512xf32>
    %187 = arith.mulf %186, %185 : vector<8x512xf32>
    %188 = vector.extract_strided_slice %42 {offsets = [40, 0], sizes = [8, 512], strides = [1, 1]} : vector<168x512xf32> to vector<8x512xf32>
    %189 = arith.mulf %188, %185 : vector<8x512xf32>
    %190 = vector.extract_strided_slice %42 {offsets = [80, 0], sizes = [8, 512], strides = [1, 1]} : vector<168x512xf32> to vector<8x512xf32>
    %191 = arith.mulf %190, %185 : vector<8x512xf32>
    %192 = vector.extract_strided_slice %42 {offsets = [120, 0], sizes = [8, 512], strides = [1, 1]} : vector<168x512xf32> to vector<8x512xf32>
    %193 = arith.mulf %192, %185 : vector<8x512xf32>
    %194 = tpu.concatenate %72, %81, %166, %167, %107, %168, %169, %78 in 0 : vector<1x512xf32>, vector<1x512xf32>, vector<1x512xf32>, vector<1x512xf32>, vector<1x512xf32>, vector<1x512xf32>, vector<1x512xf32>, vector<1x512xf32> -> vector<8x512xf32>
    %195 = vector.extract_strided_slice %42 {offsets = [8, 0], sizes = [8, 512], strides = [1, 1]} : vector<168x512xf32> to vector<8x512xf32>
    %196 = arith.mulf %195, %194 : vector<8x512xf32>
    %197 = arith.addf %187, %196 : vector<8x512xf32>
    %198 = vector.extract_strided_slice %42 {offsets = [48, 0], sizes = [8, 512], strides = [1, 1]} : vector<168x512xf32> to vector<8x512xf32>
    %199 = arith.mulf %198, %194 : vector<8x512xf32>
    %200 = arith.addf %189, %199 : vector<8x512xf32>
    %201 = vector.extract_strided_slice %42 {offsets = [88, 0], sizes = [8, 512], strides = [1, 1]} : vector<168x512xf32> to vector<8x512xf32>
    %202 = arith.mulf %201, %194 : vector<8x512xf32>
    %203 = arith.addf %191, %202 : vector<8x512xf32>
    %204 = vector.extract_strided_slice %42 {offsets = [128, 0], sizes = [8, 512], strides = [1, 1]} : vector<168x512xf32> to vector<8x512xf32>
    %205 = arith.mulf %204, %194 : vector<8x512xf32>
    %206 = arith.addf %193, %205 : vector<8x512xf32>
    %207 = tpu.concatenate %87, %170, %171, %172, %113, %173, %174, %175 in 0 : vector<1x512xf32>, vector<1x512xf32>, vector<1x512xf32>, vector<1x512xf32>, vector<1x512xf32>, vector<1x512xf32>, vector<1x512xf32>, vector<1x512xf32> -> vector<8x512xf32>
    %208 = vector.extract_strided_slice %42 {offsets = [16, 0], sizes = [8, 512], strides = [1, 1]} : vector<168x512xf32> to vector<8x512xf32>
    %209 = arith.mulf %208, %207 : vector<8x512xf32>
    %210 = arith.addf %197, %209 : vector<8x512xf32>
    %211 = vector.extract_strided_slice %42 {offsets = [56, 0], sizes = [8, 512], strides = [1, 1]} : vector<168x512xf32> to vector<8x512xf32>
    %212 = arith.mulf %211, %207 : vector<8x512xf32>
    %213 = arith.addf %200, %212 : vector<8x512xf32>
    %214 = vector.extract_strided_slice %42 {offsets = [96, 0], sizes = [8, 512], strides = [1, 1]} : vector<168x512xf32> to vector<8x512xf32>
    %215 = arith.mulf %214, %207 : vector<8x512xf32>
    %216 = arith.addf %203, %215 : vector<8x512xf32>
    %217 = vector.extract_strided_slice %42 {offsets = [136, 0], sizes = [8, 512], strides = [1, 1]} : vector<168x512xf32> to vector<8x512xf32>
    %218 = arith.mulf %217, %207 : vector<8x512xf32>
    %219 = arith.addf %206, %218 : vector<8x512xf32>
    %220 = tpu.concatenate %84, %93, %176, %177, %178, %179, %119, %180 in 0 : vector<1x512xf32>, vector<1x512xf32>, vector<1x512xf32>, vector<1x512xf32>, vector<1x512xf32>, vector<1x512xf32>, vector<1x512xf32>, vector<1x512xf32> -> vector<8x512xf32>
    %221 = vector.extract_strided_slice %42 {offsets = [24, 0], sizes = [8, 512], strides = [1, 1]} : vector<168x512xf32> to vector<8x512xf32>
    %222 = arith.mulf %221, %220 : vector<8x512xf32>
    %223 = arith.addf %210, %222 : vector<8x512xf32>
    %224 = vector.extract_strided_slice %42 {offsets = [64, 0], sizes = [8, 512], strides = [1, 1]} : vector<168x512xf32> to vector<8x512xf32>
    %225 = arith.mulf %224, %220 : vector<8x512xf32>
    %226 = arith.addf %213, %225 : vector<8x512xf32>
    %227 = vector.extract_strided_slice %42 {offsets = [104, 0], sizes = [8, 512], strides = [1, 1]} : vector<168x512xf32> to vector<8x512xf32>
    %228 = arith.mulf %227, %220 : vector<8x512xf32>
    %229 = arith.addf %216, %228 : vector<8x512xf32>
    %230 = vector.extract_strided_slice %42 {offsets = [144, 0], sizes = [8, 512], strides = [1, 1]} : vector<168x512xf32> to vector<8x512xf32>
    %231 = arith.mulf %230, %220 : vector<8x512xf32>
    %232 = arith.addf %219, %231 : vector<8x512xf32>
    %233 = tpu.concatenate %181, %182, %183, %90, %184, %184, %184, %184 in 0 : vector<1x512xf32>, vector<1x512xf32>, vector<1x512xf32>, vector<1x512xf32>, vector<1x512xf32>, vector<1x512xf32>, vector<1x512xf32>, vector<1x512xf32> -> vector<8x512xf32>
    %234 = vector.extract_strided_slice %42 {offsets = [32, 0], sizes = [8, 512], strides = [1, 1]} : vector<168x512xf32> to vector<8x512xf32>
    %235 = arith.mulf %234, %233 : vector<8x512xf32>
    %236 = arith.addf %223, %235 : vector<8x512xf32>
    %237 = vector.extract_strided_slice %42 {offsets = [72, 0], sizes = [8, 512], strides = [1, 1]} : vector<168x512xf32> to vector<8x512xf32>
    %238 = arith.mulf %237, %233 : vector<8x512xf32>
    %239 = arith.addf %226, %238 : vector<8x512xf32>
    %240 = vector.extract_strided_slice %42 {offsets = [112, 0], sizes = [8, 512], strides = [1, 1]} : vector<168x512xf32> to vector<8x512xf32>
    %241 = arith.mulf %240, %233 : vector<8x512xf32>
    %242 = arith.addf %229, %241 : vector<8x512xf32>
    %243 = vector.extract_strided_slice %42 {offsets = [152, 0], sizes = [8, 512], strides = [1, 1]} : vector<168x512xf32> to vector<8x512xf32>
    %244 = arith.mulf %243, %233 : vector<8x512xf32>
    %245 = arith.addf %232, %244 : vector<8x512xf32>
    %cst_56 = arith.constant dense<0.000000e+00> : vector<512xf32>
    %246 = vector.multi_reduction <add>, %236, %cst_56 [0] : vector<8x512xf32> to vector<512xf32>
    %247 = vector.shape_cast %246 : vector<512xf32> to vector<1x512xf32>
    %cst_57 = arith.constant dense<0.000000e+00> : vector<512xf32>
    %248 = vector.multi_reduction <add>, %239, %cst_57 [0] : vector<8x512xf32> to vector<512xf32>
    %249 = vector.shape_cast %248 : vector<512xf32> to vector<1x512xf32>
    %cst_58 = arith.constant dense<0.000000e+00> : vector<512xf32>
    %250 = vector.multi_reduction <add>, %242, %cst_58 [0] : vector<8x512xf32> to vector<512xf32>
    %251 = vector.shape_cast %250 : vector<512xf32> to vector<1x512xf32>
    %cst_59 = arith.constant dense<0.000000e+00> : vector<512xf32>
    %252 = vector.multi_reduction <add>, %245, %cst_59 [0] : vector<8x512xf32> to vector<512xf32>
    %253 = vector.shape_cast %252 : vector<512xf32> to vector<1x512xf32>
    %cst_60 = arith.constant 2.000000e+00 : f32
    %254 = vector.broadcast %cst_60 : f32 to vector<1x512xf32>
    %255 = arith.subf %247, %254 : vector<1x512xf32>
    %256 = math.exp %255 : vector<1x512xf32>
    %257 = arith.negf %249 : vector<1x512xf32>
    %258 = math.exp %257 : vector<1x512xf32>
    %cst_61 = arith.constant 1.000000e+00 : f32
    %259 = vector.broadcast %cst_61 : f32 to vector<1x512xf32>
    %260 = arith.addf %259, %258 : vector<1x512xf32>
    %261 = arith.divf %259, %260 : vector<1x512xf32>
    %262 = arith.negf %251 : vector<1x512xf32>
    %263 = math.exp %262 : vector<1x512xf32>
    %cst_62 = arith.constant 1.000000e+00 : f32
    %264 = vector.broadcast %cst_62 : f32 to vector<1x512xf32>
    %265 = arith.addf %264, %263 : vector<1x512xf32>
    %266 = arith.divf %264, %265 : vector<1x512xf32>
    %267 = arith.negf %253 : vector<1x512xf32>
    %268 = math.exp %267 : vector<1x512xf32>
    %cst_63 = arith.constant 1.000000e+00 : f32
    %269 = vector.broadcast %cst_63 : f32 to vector<1x512xf32>
    %270 = arith.addf %269, %268 : vector<1x512xf32>
    %271 = arith.divf %269, %270 : vector<1x512xf32>
    %272 = tpu.concatenate %261, %266, %271 in 0 : vector<1x512xf32>, vector<1x512xf32>, vector<1x512xf32> -> vector<3x512xf32>
    %273 = vector.broadcast %256 : vector<1x512xf32> to vector<3x512xf32>
    %274 = arith.mulf %272, %273 : vector<3x512xf32>
    %275 = tpu.concatenate %53, %184, %274, %184 in 0 : vector<3x512xf32>, vector<1x512xf32>, vector<3x512xf32>, vector<1x512xf32> -> vector<8x512xf32>
    %c0_64 = arith.constant 0 : index
    %c0_65 = arith.constant 0 : index
    %276 = vector.load %arg7[%c0_64, %c0_65] : memref<8x512xf32, #tpu.memory_space<vmem>>, vector<8x512xf32>
    tpu.vector_store %arg7[%c0_64, %c0_65], %275 {strides = array<i32>} : memref<8x512xf32, #tpu.memory_space<vmem>>, vector<8x512xf32>,
    return
  }
  func.func @transform_0(%arg0: i32) -> (i32, i32) {
    %c0_i32 = arith.constant 0 : i32
    %c0_i32_0 = arith.constant 0 : i32
    return %c0_i32, %arg0 : i32, i32
  }
  func.func @transform_1(%arg0: i32) -> (i32, i32) {
    %c0_i32 = arith.constant 0 : i32
    %c0_i32_0 = arith.constant 0 : i32
    %c0_i32_1 = arith.constant 0 : i32
    return %c0_i32, %c0_i32_0 : i32, i32
  }
  func.func @transform_2(%arg0: i32) -> (i32, i32) {
    %c0_i32 = arith.constant 0 : i32
    %c0_i32_0 = arith.constant 0 : i32
    return %c0_i32, %arg0 : i32, i32
  }
  func.func @transform_3(%arg0: i32) -> (i32, i32) {
    %c0_i32 = arith.constant 0 : i32
    %c0_i32_0 = arith.constant 0 : i32
    %c0_i32_1 = arith.constant 0 : i32
    return %c0_i32, %c0_i32_0 : i32, i32
  }
  func.func @transform_4(%arg0: i32) -> (i32, i32) {
    %c0_i32 = arith.constant 0 : i32
    %c0_i32_0 = arith.constant 0 : i32
    %c0_i32_1 = arith.constant 0 : i32
    return %c0_i32, %c0_i32_0 : i32, i32
  }
  func.func @transform_5(%arg0: i32) -> (i32, i32) {
    %c0_i32 = arith.constant 0 : i32
    %c0_i32_0 = arith.constant 0 : i32
    %c0_i32_1 = arith.constant 0 : i32
    return %c0_i32, %c0_i32_0 : i32, i32
  }
  func.func @transform_6(%arg0: i32) -> (i32, i32) {
    %c0_i32 = arith.constant 0 : i32
    %c0_i32_0 = arith.constant 0 : i32
    return %c0_i32, %arg0 : i32, i32
  }
}

</mosaic_0001>

<llo_original>
// kernel: tpu_custom_call.1
$region0: #{tpu_custom_call.1}
  #allocation0 [shape = 'u32[]', space=smem, size = 0x4, offset = 0x4, fixed_abs, tag = 'smem constant byte address 0x4 - core index']
  #allocation1 [shape = 'u32[72,128]{1,0:T(1,128)}', space=vmem, size = 0x9000, scoped, tag = 'internal scratch']
  %s0 = inlined_call_operand.vmem [shape: f32[16,1024], index: 0, kind: input, shape index: {}]
  %s1 = inlined_call_operand.vmem [shape: f32[16,1], index: 1, kind: input, shape index: {}]
  %s2 = inlined_call_operand.vmem [shape: f32[3,1024], index: 2, kind: input, shape index: {}]
  %s3 = inlined_call_operand.vmem [shape: f32[3,1], index: 3, kind: input, shape index: {}]
  %s4 = inlined_call_operand.vmem [shape: bf16[296,64], index: 4, kind: input, shape index: {}]
  %s5 = inlined_call_operand.vmem [shape: f32[296,1], index: 5, kind: input, shape index: {}]
  %s6 = inlined_call_operand.hbm [shape: f32[8,1024], index: 6, kind: output, shape index: {}]
  %s7 = sld [smem:[#allocation0]]
  $region80: #{tpu_custom_call.1} parent=0
    _
  %s9 = ssub.s32 1, %s7
  %s10 = scalar_select 0, %s9, %s7
  $region1: #{tpu_custom_call.1} parent=0
    #allocation2 [shape = 'u8[65536]{0}', space=vmem, size = 0x10000, scoped, tag = 'input window, operand 0']
    #allocation3 [shape = 'u8[32768]{0}', space=vmem, size = 0x8000, scoped, tag = 'output window, operand 0']
    #allocation4 [shape = 's32[2]{0}', space=sflag, size = 0x8, scoped, tag = 'scoped memory for tpu_custom_call.1']
    %11 = vsyncpa [#allocation4], 0
    %s12 = scalar_lea.sflag [#allocation4], 1
    %13 = vsyncpa %s12, 0
    loop: start=0, step=1, limit=4
    $region2: #{tpu_custom_call.1} parent=1 // loop_pre_header
      _
    $region3: #{tpu_custom_call.1} parent=1 // loop_header
      %s15 = sphi 0, %s19
      %p16 = scmp.ge.s32.totalorder %s15, 4
      %s25 = sphi 0, %s27
      %s28 = sphi 0, %s25
      %s29 = sphi 0, %s28
      %s45 = sphi 0, %s29
      %s49 = sphi 0, %s49
      %s51 = sphi 0, %s49
      %s52 = sphi 0, %s51
      %s66 = sphi 0, %s52
      %s72 = sphi 0, %s74
      %s75 = sphi 0, %s72
      %s76 = sphi 0, %s75
      %s92 = sphi 0, %s76
      %s96 = sphi 0, %s96
      %s98 = sphi 0, %s96
      %s99 = sphi 0, %s98
      %s113 = sphi 0, %s99
      %s117 = sphi 0, %s117
      %s119 = sphi 0, %s117
      %s120 = sphi 0, %s119
      %s134 = sphi 0, %s120
      %s138 = sphi 0, %s138
      %s140 = sphi 0, %s138
      %s141 = sphi 0, %s140
      %s155 = sphi 0, %s141
      %s161 = sphi 0, %s163
      %s164 = sphi 0, %s161
      %s165 = sphi 0, %s164
      %s181 = sphi 0, %s165
    $region4: #{tpu_custom_call.1} parent=1 // loop_header_branch
      %18 = sbr.rel (%p16) target = $region8
    $region5: #{tpu_custom_call.1} parent=1 // loop_body
      %s20 = ssub.s32 %s15, 1
      %s21 = ssub.s32 %s15, 2
      %s22 = sadd.s32 %s15, 1
      %s23 = ssub.s32 %s15, %s22
      %p24 = scmp.eq.s32.totalorder %s23, 0
      %s26 = sadd.s32 %s25, 1
      %s27 = scalar_select %p24, %s25, %s26
      %p30 = pneg %p24
      %p31 = scmp.eq.s32.totalorder %s15, 1
      %p32 = por %p30, %p31
      %p33 = scmp.ne.s32.totalorder %s25, %s28
      %p34 = scmp.eq.s32.totalorder %s15, 0
      %p35 = por %p33, %p34
      %p36 = scmp.ne.s32.totalorder %s25, %s28
      %p37 = scmp.eq.s32.totalorder %s20, 1
      %p38 = por %p36, %p37
      %p39 = scmp.ne.s32.totalorder %s28, %s29
      %p40 = scmp.eq.s32.totalorder %s20, 0
      %p41 = por %p39, %p40
      %p42 = scmp.ne.s32.totalorder %s28, %s29
      %p43 = scmp.eq.s32.totalorder %s21, 1
      %p44 = por %p42, %p43
      %p46 = scmp.ne.s32.totalorder %s29, %s45
      %p47 = scmp.eq.s32.totalorder %s21, 0
      %p48 = por %p46, %p47
      %s50 = sadd.s32 %s49, 1
      %p53 = scmp.eq.s32.totalorder %s15, 1
      %p54 = scmp.ne.s32.totalorder %s49, %s51
      %p55 = scmp.eq.s32.totalorder %s15, 0
      %p56 = por %p54, %p55
      %p57 = scmp.ne.s32.totalorder %s49, %s51
      %p58 = scmp.eq.s32.totalorder %s20, 1
      %p59 = por %p57, %p58
      %p60 = scmp.ne.s32.totalorder %s51, %s52
      %p61 = scmp.eq.s32.totalorder %s20, 0
      %p62 = por %p60, %p61
      %p63 = scmp.ne.s32.totalorder %s51, %s52
      %p64 = scmp.eq.s32.totalorder %s21, 1
      %p65 = por %p63, %p64
      %p67 = scmp.ne.s32.totalorder %s52, %s66
      %p68 = scmp.eq.s32.totalorder %s21, 0
      %p69 = por %p67, %p68
      %s70 = ssub.s32 %s15, %s22
      %p71 = scmp.eq.s32.totalorder %s70, 0
      %s73 = sadd.s32 %s72, 1
      %s74 = scalar_select %p71, %s72, %s73
      %p77 = pneg %p71
      %p78 = scmp.eq.s32.totalorder %s15, 1
      %p79 = por %p77, %p78
      %p80 = scmp.ne.s32.totalorder %s72, %s75
      %p81 = scmp.eq.s32.totalorder %s15, 0
      %p82 = por %p80, %p81
      %p83 = scmp.ne.s32.totalorder %s72, %s75
      %p84 = scmp.eq.s32.totalorder %s20, 1
      %p85 = por %p83, %p84
      %p86 = scmp.ne.s32.totalorder %s75, %s76
      %p87 = scmp.eq.s32.totalorder %s20, 0
      %p88 = por %p86, %p87
      %p89 = scmp.ne.s32.totalorder %s75, %s76
      %p90 = scmp.eq.s32.totalorder %s21, 1
      %p91 = por %p89, %p90
      %p93 = scmp.ne.s32.totalorder %s76, %s92
      %p94 = scmp.eq.s32.totalorder %s21, 0
      %p95 = por %p93, %p94
      %s97 = sadd.s32 %s96, 1
      %p100 = scmp.eq.s32.totalorder %s15, 1
      %p101 = scmp.ne.s32.totalorder %s96, %s98
      %p102 = scmp.eq.s32.totalorder %s15, 0
      %p103 = por %p101, %p102
      %p104 = scmp.ne.s32.totalorder %s96, %s98
      %p105 = scmp.eq.s32.totalorder %s20, 1
      %p106 = por %p104, %p105
      %p107 = scmp.ne.s32.totalorder %s98, %s99
      %p108 = scmp.eq.s32.totalorder %s20, 0
      %p109 = por %p107, %p108
      %p110 = scmp.ne.s32.totalorder %s98, %s99
      %p111 = scmp.eq.s32.totalorder %s21, 1
      %p112 = por %p110, %p111
      %p114 = scmp.ne.s32.totalorder %s99, %s113
      %p115 = scmp.eq.s32.totalorder %s21, 0
      %p116 = por %p114, %p115
      %s118 = sadd.s32 %s117, 1
      %p121 = scmp.eq.s32.totalorder %s15, 1
      %p122 = scmp.ne.s32.totalorder %s117, %s119
      %p123 = scmp.eq.s32.totalorder %s15, 0
      %p124 = por %p122, %p123
      %p125 = scmp.ne.s32.totalorder %s117, %s119
      %p126 = scmp.eq.s32.totalorder %s20, 1
      %p127 = por %p125, %p126
      %p128 = scmp.ne.s32.totalorder %s119, %s120
      %p129 = scmp.eq.s32.totalorder %s20, 0
      %p130 = por %p128, %p129
      %p131 = scmp.ne.s32.totalorder %s119, %s120
      %p132 = scmp.eq.s32.totalorder %s21, 1
      %p133 = por %p131, %p132
      %p135 = scmp.ne.s32.totalorder %s120, %s134
      %p136 = scmp.eq.s32.totalorder %s21, 0
      %p137 = por %p135, %p136
      %s139 = sadd.s32 %s138, 1
      %p142 = scmp.eq.s32.totalorder %s15, 1
      %p143 = scmp.ne.s32.totalorder %s138, %s140
      %p144 = scmp.eq.s32.totalorder %s15, 0
      %p145 = por %p143, %p144
      %p146 = scmp.ne.s32.totalorder %s138, %s140
      %p147 = scmp.eq.s32.totalorder %s20, 1
      %p148 = por %p146, %p147
      %p149 = scmp.ne.s32.totalorder %s140, %s141
      %p150 = scmp.eq.s32.totalorder %s20, 0
      %p151 = por %p149, %p150
      %p152 = scmp.ne.s32.totalorder %s140, %s141
      %p153 = scmp.eq.s32.totalorder %s21, 1
      %p154 = por %p152, %p153
      %p156 = scmp.ne.s32.totalorder %s141, %s155
      %p157 = scmp.eq.s32.totalorder %s21, 0
      %p158 = por %p156, %p157
      %s159 = ssub.s32 %s15, %s22
      %p160 = scmp.eq.s32.totalorder %s159, 0
      %s162 = sadd.s32 %s161, 1
      %s163 = scalar_select %p160, %s161, %s162
      %p166 = pneg %p160
      %p167 = scmp.eq.s32.totalorder %s15, 1
      %p168 = por %p166, %p167
      %p169 = scmp.ne.s32.totalorder %s161, %s164
      %p170 = scmp.eq.s32.totalorder %s15, 0
      %p171 = por %p169, %p170
      %p172 = scmp.ne.s32.totalorder %s161, %s164
      %p173 = scmp.eq.s32.totalorder %s20, 1
      %p174 = por %p172, %p173
      %p175 = scmp.ne.s32.totalorder %s164, %s165
      %p176 = scmp.eq.s32.totalorder %s20, 0
      %p177 = por %p175, %p176
      %p178 = scmp.ne.s32.totalorder %s164, %s165
      %p179 = scmp.eq.s32.totalorder %s21, 1
      %p180 = por %p178, %p179
      %p182 = scmp.ne.s32.totalorder %s165, %s181
      %p183 = scmp.eq.s32.totalorder %s21, 0
      %p184 = por %p182, %p183
      %p185 = scmp.le.s32.totalorder 1, %s15
      %p186 = scmp.lt.s32.totalorder %s15, 3
      %p187 = pnand %p185, %p186
      %p188 = pneg %p187
      // Predicated region
      $region9: #{tpu_custom_call.1} parent=5 // pred_check
        _
      $region10: #{tpu_custom_call.1} parent=5 // pred_check_branch
        %190 = sbr.rel (%p187) target = $region12
      $region11: #{tpu_custom_call.1} parent=5 // pred_region
        %s191 = ssub.s32 %s15, 1
        // Predicated region
        $region13: #{tpu_custom_call.1} parent=11 // pred_check
          %p192 = pneg %p62
        $region14: #{tpu_custom_call.1} parent=11 // pred_check_branch
          %194 = sbr.rel (%p192) target = $region16
        $region15: #{tpu_custom_call.1} parent=11 // pred_region
          _
        $region16: #{tpu_custom_call.1} parent=11 // pred_fallthru
          _
        // Predicated region
        $region17: #{tpu_custom_call.1} parent=11 // pred_check
          %p195 = pneg %p109
        $region18: #{tpu_custom_call.1} parent=11 // pred_check_branch
          %197 = sbr.rel (%p195) target = $region20
        $region19: #{tpu_custom_call.1} parent=11 // pred_region
          _
        $region20: #{tpu_custom_call.1} parent=11 // pred_fallthru
          _
        // Predicated region
        $region21: #{tpu_custom_call.1} parent=11 // pred_check
          %p198 = pneg %p130
        $region22: #{tpu_custom_call.1} parent=11 // pred_check_branch
          %200 = sbr.rel (%p198) target = $region24
        $region23: #{tpu_custom_call.1} parent=11 // pred_region
          _
        $region24: #{tpu_custom_call.1} parent=11 // pred_fallthru
          _
        // Predicated region
        $region25: #{tpu_custom_call.1} parent=11 // pred_check
          %p201 = pneg %p151
        $region26: #{tpu_custom_call.1} parent=11 // pred_check_branch
          %203 = sbr.rel (%p201) target = $region28
        $region27: #{tpu_custom_call.1} parent=11 // pred_region
          _
        $region28: #{tpu_custom_call.1} parent=11 // pred_fallthru
          _
      $region12: #{tpu_custom_call.1} parent=5 // pred_fallthru
        _
      %p204 = scmp.lt.s32.totalorder %s15, 2
      // Predicated region
      $region29: #{tpu_custom_call.1} parent=5 // pred_check
        %p205 = pneg %p204
      $region30: #{tpu_custom_call.1} parent=5 // pred_check_branch
        %207 = sbr.rel (%p205) target = $region32
      $region31: #{tpu_custom_call.1} parent=5 // pred_region
        // Predicated region
        $region33: #{tpu_custom_call.1} parent=31 // pred_check
          %p208 = pneg %p35
        $region34: #{tpu_custom_call.1} parent=31 // pred_check_branch
          %210 = sbr.rel (%p208) target = $region36
        $region35: #{tpu_custom_call.1} parent=31 // pred_region
          %s211 = sand.u32 %s25, 1
          %s212 = sand.u32 %s25, 1
          %s213 = smul.addr %s212, 64
          %s214 = scalar_lea.vmem [#allocation2], %s213
          %s215 = smul.u32 4, %s15
          %s216 = smul.addr %s215, 8
          %s217 = scalar_lea.vmem %s0, %s216
          // Predicated region
          $region37: #{tpu_custom_call.1} parent=35 // pred_check
            _
          $region38: #{tpu_custom_call.1} parent=35 // pred_check_branch
            %219 = sbr.rel (0) target = $region40
          $region39: #{tpu_custom_call.1} parent=35 // pred_region
            // Predicated region
            $region41: #{tpu_custom_call.1} parent=39 // pred_check
              _
            $region42: #{tpu_custom_call.1} parent=39 // pred_check_branch
              %221 = sbr.rel (0) target = $region44
            $region43: #{tpu_custom_call.1} parent=39 // pred_region
              loop: start=0, step=1, limit=1
              $region45: #{tpu_custom_call.1} parent=43 // loop_pre_header
                _
              $region46: #{tpu_custom_call.1} parent=43 // loop_header
                %s223 = sphi 0, %s227
                %p224 = scmp.ge.s32.totalorder %s223, 1
                %s228 = sphi %s217, %s217
                %s229 = sphi %s214, %s214
              $region47: #{tpu_custom_call.1} parent=43 // loop_header_branch
                %226 = sbr.rel (%p224) target = $region51
              $region48: #{tpu_custom_call.1} parent=43 // loop_body
                %v230 = vld [vmem:[%s228] sm:$0xff]
                %231 = vst [vmem:[%s229] sm:$0xff] %v230
                %v232 = vld [vmem:[%s228 + $0x8] sm:$0xff]
                %233 = vst [vmem:[%s229 + $0x8] sm:$0xff] %v232
                %v234 = vld [vmem:[%s228 + $0x10] sm:$0xff]
                %235 = vst [vmem:[%s229 + $0x10] sm:$0xff] %v234
                %v236 = vld [vmem:[%s228 + $0x18] sm:$0xff]
                %237 = vst [vmem:[%s229 + $0x18] sm:$0xff] %v236
                %v238 = vld [vmem:[%s228 + $0x40] sm:$0xff]
                %239 = vst [vmem:[%s229 + $0x20] sm:$0xff] %v238
                %v240 = vld [vmem:[%s228 + $0x48] sm:$0xff]
                %241 = vst [vmem:[%s229 + $0x28] sm:$0xff] %v240
                %v242 = vld [vmem:[%s228 + $0x50] sm:$0xff]
                %243 = vst [vmem:[%s229 + $0x30] sm:$0xff] %v242
                %v244 = vld [vmem:[%s228 + $0x58] sm:$0xff]
                %245 = vst [vmem:[%s229 + $0x38] sm:$0xff] %v244
              $region49: #{tpu_custom_call.1} parent=43 // loop_footer
                %s227 = sadd.s32 1, %s223
              $region50: #{tpu_custom_call.1} parent=43 // loop_footer_branch
                %222 = sbr.rel target = $region46
              $region51: #{tpu_custom_call.1} parent=43 // loop_exit
                _
            $region44: #{tpu_custom_call.1} parent=39 // pred_fallthru
              _
            // Predicated region
            $region52: #{tpu_custom_call.1} parent=39 // pred_check
              _
            $region53: #{tpu_custom_call.1} parent=39 // pred_check_branch
              %247 = sbr.rel target = $region55
            $region54: #{tpu_custom_call.1} parent=39 // pred_region
              _
            $region55: #{tpu_custom_call.1} parent=39 // pred_fallthru
              _
          $region40: #{tpu_custom_call.1} parent=35 // pred_fallthru
            _
          %248 = vnop
        $region36: #{tpu_custom_call.1} parent=31 // pred_fallthru
          _
        // Predicated region
        $region56: #{tpu_custom_call.1} parent=31 // pred_check
          %p249 = pneg %p82
        $region57: #{tpu_custom_call.1} parent=31 // pred_check_branch
          %251 = sbr.rel (%p249) target = $region59
        $region58: #{tpu_custom_call.1} parent=31 // pred_region
          %s252 = smul.u32 4, %s15
          %p253 = scmp.lt.s32.totalorder %s252, 7
          %s254 = scalar_select %p253, %s252, 7
          %s255 = smul.addr %s254, 4
          %s256 = scalar_lea.vmem %s2, %s255
          %s257 = smul.u32 4, %s15
        $region59: #{tpu_custom_call.1} parent=31 // pred_fallthru
          _
      $region32: #{tpu_custom_call.1} parent=5 // pred_fallthru
        _
      %p258 = scmp.le.s32.totalorder 1, %s15
      %p259 = scmp.lt.s32.totalorder %s15, 3
      %p260 = pnand %p258, %p259
      %p261 = pneg %p260
      // Predicated region
      $region60: #{tpu_custom_call.1} parent=5 // pred_check
        _
      $region61: #{tpu_custom_call.1} parent=5 // pred_check_branch
        %263 = sbr.rel (%p260) target = $region63
      $region62: #{tpu_custom_call.1} parent=5 // pred_region
        %s264 = ssub.s32 %s15, 1
        %s265 = sand.u32 %s28, 1
        %s266 = sand.u32 %s28, 1
        %s267 = smul.addr %s266, 64
        %s268 = scalar_lea.vmem [#allocation2], %s267
        // Predicated region
        $region64: #{tpu_custom_call.1} parent=62 // pred_check
          %p269 = pneg %p41
        $region65: #{tpu_custom_call.1} parent=62 // pred_check_branch
          %271 = sbr.rel (%p269) target = $region67
        $region66: #{tpu_custom_call.1} parent=62 // pred_region
          _
        $region67: #{tpu_custom_call.1} parent=62 // pred_fallthru
          _
        %s272 = sand.u32 %s28, 1
        %s273 = sand.u32 %s28, 1
        %s274 = smul.addr %s273, 64
        %s275 = scalar_lea.vmem [#allocation2], %s274
        %p276 = pneg %p41
        %p277 = pneg %p38
        %p278 = pneg %p62
        %p279 = pneg %p59
        %s280 = smul.u32 4, %s20
        %p281 = scmp.lt.s32.totalorder %s280, 7
        %s282 = scalar_select %p281, %s280, 7
        %s283 = smul.addr %s282, 4
        %s284 = scalar_lea.vmem %s2, %s283
        %p285 = pneg %p88
        %p286 = pneg %p85
        %p287 = pneg %p109
        %p288 = pneg %p106
        %p289 = pneg %p130
        %p290 = pneg %p127
        %p291 = pneg %p151
        %p292 = pneg %p148
        %p293 = pneg %p177
        %p294 = pneg %p174
        %s295 = sand.u32 %s164, 1
        %s296 = scalar_lea.sflag [#allocation4], %s295
        %s297 = sand.u32 %s164, 1
        %s298 = smul.addr %s297, 32
        %s299 = scalar_lea.vmem [#allocation3], %s298
        %s300 = smul.u32 4, %s20
        %s301 = smul.u32 4, %s20
        %p302 = scmp.lt.s32.totalorder %s301, 7
        %s303 = scalar_select %p302, %s301, 7
        %s304 = smul.addr %s303, 4
        %s305 = scalar_lea.vmem %s2, %s304
        %s306 = smul.u32 4, %s20
        %s307 = smul.u32 4, %s20
        %v309 = vld [vmem:[%s1] sm:$0xff]
        %v310 = vld [vmem:[%s1 + $0x8] sm:$0xff]
        %312 = vset.pattern.permute.xlu0 0
        %313 = vperm.xlu0 %312, %v309
        %v314 = vpop.permute.xlu0 %313
        %317 = vset.pattern.permute.xlu0 0
        %318 = vperm.xlu0 %317, %v310
        %v319 = vpop.permute.xlu0 %318
        %v321 = vld [vmem:[%s268] sm:$0xff]
        %v322 = vld [vmem:[%s268 + $0x8] sm:$0xff]
        %v323 = vld [vmem:[%s268 + $0x10] sm:$0xff]
        %v324 = vld [vmem:[%s268 + $0x18] sm:$0xff]
        %v325 = vld [vmem:[%s268 + $0x20] sm:$0xff]
        %v326 = vld [vmem:[%s268 + $0x28] sm:$0xff]
        %v327 = vld [vmem:[%s268 + $0x30] sm:$0xff]
        %v328 = vld [vmem:[%s268 + $0x38] sm:$0xff]
        %v329 = vadd.f32 %v321, %v325
        %v330 = vadd.f32 %v329, %v314
        %v331 = vadd.f32 %v330, %v319
        %v332 = vrot.slane %v331, 4
        %v333 = vadd.f32 %v331, %v332
        %v334 = vrot.slane %v333, 2
        %v335 = vadd.f32 %v333, %v334
        %v336 = vrot.slane %v335, 1
        %v337 = vadd.f32 %v335, %v336
        %v338 = vadd.f32 %v322, %v326
        %v339 = vadd.f32 %v338, %v314
        %v340 = vadd.f32 %v339, %v319
        %v341 = vrot.slane %v340, 4
        %v342 = vadd.f32 %v340, %v341
        %v343 = vrot.slane %v342, 2
        %v344 = vadd.f32 %v342, %v343
        %v345 = vrot.slane %v344, 1
        %v346 = vadd.f32 %v344, %v345
        %v347 = vadd.f32 %v323, %v327
        %v348 = vadd.f32 %v347, %v314
        %v349 = vadd.f32 %v348, %v319
        %v350 = vrot.slane %v349, 4
        %v351 = vadd.f32 %v349, %v350
        %v352 = vrot.slane %v351, 2
        %v353 = vadd.f32 %v351, %v352
        %v354 = vrot.slane %v353, 1
        %v355 = vadd.f32 %v353, %v354
        %v356 = vadd.f32 %v324, %v328
        %v357 = vadd.f32 %v356, %v314
        %v358 = vadd.f32 %v357, %v319
        %v359 = vrot.slane %v358, 4
        %v360 = vadd.f32 %v358, %v359
        %v361 = vrot.slane %v360, 2
        %v362 = vadd.f32 %v360, %v361
        %v363 = vrot.slane %v362, 1
        %v364 = vadd.f32 %v362, %v363
        %v365 = vrcp.pop 32.0
        %v366 = vmul.f32 32.0, %v365
        %v367 = vsub.f32 1.0, %v366
        %v368 = vmul.f32 %v365, %v367
        %v369 = vadd.f32 %v365, %v368
        %vm370 = vweird.f32 %v365
        %v371 = vsel %vm370, %v365, %v369
        %v372 = vmul.f32 %v337, %v371
        %v373 = vmul.f32 %v346, %v371
        %v374 = vmul.f32 %v355, %v371
        %v375 = vmul.f32 %v364, %v371
        %v376 = vsub.f32 %v321, %v372
        %v377 = vsub.f32 %v322, %v373
        %v378 = vsub.f32 %v323, %v374
        %v379 = vsub.f32 %v324, %v375
        %v380 = vsub.f32 %v325, %v372
        %v381 = vsub.f32 %v326, %v373
        %v382 = vsub.f32 %v327, %v374
        %v383 = vsub.f32 %v328, %v375
        %v384 = vsub.f32 %v314, %v372
        %v385 = vsub.f32 %v314, %v373
        %v386 = vsub.f32 %v314, %v374
        %v387 = vsub.f32 %v314, %v375
        %v388 = vsub.f32 %v319, %v372
        %v389 = vsub.f32 %v319, %v373
        %v390 = vsub.f32 %v319, %v374
        %v391 = vsub.f32 %v319, %v375
        %v392 = vmul.f32 %v376, %v376
        %v393 = vmul.f32 %v377, %v377
        %v394 = vmul.f32 %v378, %v378
        %v395 = vmul.f32 %v379, %v379
        %v396 = vmul.f32 %v380, %v380
        %v397 = vmul.f32 %v381, %v381
        %v398 = vmul.f32 %v382, %v382
        %v399 = vmul.f32 %v383, %v383
        %v400 = vmul.f32 %v384, %v384
        %v401 = vmul.f32 %v385, %v385
        %v402 = vmul.f32 %v386, %v386
        %v403 = vmul.f32 %v387, %v387
        %v404 = vmul.f32 %v388, %v388
        %v405 = vmul.f32 %v389, %v389
        %v406 = vmul.f32 %v390, %v390
        %v407 = vmul.f32 %v391, %v391
        %v408 = vadd.f32 %v392, %v396
        %v409 = vadd.f32 %v408, %v400
        %v410 = vadd.f32 %v409, %v404
        %v411 = vrot.slane %v410, 4
        %v412 = vadd.f32 %v410, %v411
        %v413 = vrot.slane %v412, 2
        %v414 = vadd.f32 %v412, %v413
        %v415 = vrot.slane %v414, 1
        %v416 = vadd.f32 %v414, %v415
        %v417 = vadd.f32 %v393, %v397
        %v418 = vadd.f32 %v417, %v401
        %v419 = vadd.f32 %v418, %v405
        %v420 = vrot.slane %v419, 4
        %v421 = vadd.f32 %v419, %v420
        %v422 = vrot.slane %v421, 2
        %v423 = vadd.f32 %v421, %v422
        %v424 = vrot.slane %v423, 1
        %v425 = vadd.f32 %v423, %v424
        %v426 = vadd.f32 %v394, %v398
        %v427 = vadd.f32 %v426, %v402
        %v428 = vadd.f32 %v427, %v406
        %v429 = vrot.slane %v428, 4
        %v430 = vadd.f32 %v428, %v429
        %v431 = vrot.slane %v430, 2
        %v432 = vadd.f32 %v430, %v431
        %v433 = vrot.slane %v432, 1
        %v434 = vadd.f32 %v432, %v433
        %v435 = vadd.f32 %v395, %v399
        %v436 = vadd.f32 %v435, %v403
        %v437 = vadd.f32 %v436, %v407
        %v438 = vrot.slane %v437, 4
        %v439 = vadd.f32 %v437, %v438
        %v440 = vrot.slane %v439, 2
        %v441 = vadd.f32 %v439, %v440
        %v442 = vrot.slane %v441, 1
        %v443 = vadd.f32 %v441, %v442
        %v444 = vmul.f32 %v416, %v371
        %v445 = vmul.f32 %v425, %v371
        %v446 = vmul.f32 %v434, %v371
        %v447 = vmul.f32 %v443, %v371
        %v448 = vadd.f32 %v444, 1e-05
        %v449 = vadd.f32 %v445, 1e-05
        %v450 = vadd.f32 %v446, 1e-05
        %v451 = vadd.f32 %v447, 1e-05
        %v452 = vrsqrt.pop %v448
        %v453 = vmul.f32 %v452, %v448
        %v454 = vmul.f32 %v453, %v452
        %v455 = vmul.f32 0.5, %v454
        %v456 = vsub.f32 1.5, %v455
        %v457 = vmul.f32 %v452, %v456
        %vm458 = vweird.f32 %v448
        %vm459 = vweird.f32 %v452
        %vm460 = vmor %vm458, %vm459
        %v461 = vsel %vm460, %v452, %v457
        %v462 = vrsqrt.pop %v449
        %v463 = vmul.f32 %v462, %v449
        %v464 = vmul.f32 %v463, %v462
        %v465 = vmul.f32 0.5, %v464
        %v466 = vsub.f32 1.5, %v465
        %v467 = vmul.f32 %v462, %v466
        %vm468 = vweird.f32 %v449
        %vm469 = vweird.f32 %v462
        %vm470 = vmor %vm468, %vm469
        %v471 = vsel %vm470, %v462, %v467
        %v472 = vrsqrt.pop %v450
        %v473 = vmul.f32 %v472, %v450
        %v474 = vmul.f32 %v473, %v472
        %v475 = vmul.f32 0.5, %v474
        %v476 = vsub.f32 1.5, %v475
        %v477 = vmul.f32 %v472, %v476
        %vm478 = vweird.f32 %v450
        %vm479 = vweird.f32 %v472
        %vm480 = vmor %vm478, %vm479
        %v481 = vsel %vm480, %v472, %v477
        %v482 = vrsqrt.pop %v451
        %v483 = vmul.f32 %v482, %v451
        %v484 = vmul.f32 %v483, %v482
        %v485 = vmul.f32 0.5, %v484
        %v486 = vsub.f32 1.5, %v485
        %v487 = vmul.f32 %v482, %v486
        %vm488 = vweird.f32 %v451
        %vm489 = vweird.f32 %v482
        %vm490 = vmor %vm488, %vm489
        %v491 = vsel %vm490, %v482, %v487
        %v492 = vmul.f32 %v376, %v461
        %v493 = vmul.f32 %v377, %v471
        %v494 = vmul.f32 %v378, %v481
        %v495 = vmul.f32 %v379, %v491
        %v496 = vmul.f32 %v380, %v461
        %v497 = vmul.f32 %v381, %v471
        %v498 = vmul.f32 %v382, %v481
        %v499 = vmul.f32 %v383, %v491
        %v500 = vmul.f32 %v384, %v461
        %v501 = vmul.f32 %v385, %v471
        %v502 = vmul.f32 %v386, %v481
        %v503 = vmul.f32 %v387, %v491
        %v504 = vmul.f32 %v388, %v461
        %v505 = vmul.f32 %v389, %v471
        %v506 = vmul.f32 %v390, %v481
        %v507 = vmul.f32 %v391, %v491
        %v508 = vpack.c.bf16 %v496, %v492
        %v509 = vpack.c.bf16 %v497, %v493
        %v510 = vpack.c.bf16 %v498, %v494
        %v511 = vpack.c.bf16 %v499, %v495
        %v512 = vpack.c.bf16 %v504, %v500
        %v513 = vpack.c.bf16 %v505, %v501
        %v514 = vpack.c.bf16 %v506, %v502
        %v515 = vpack.c.bf16 %v507, %v503
        %v516 = vld [vmem:[%s4] sm:$0xf]
        %v517 = vld [vmem:[%s4 + $0x4] sm:$0xf]
        %v518 = vld [vmem:[%s4 + $0x8] sm:$0xf]
        %v519 = vld [vmem:[%s4 + $0xc] sm:$0xf]
        %v520 = vld [vmem:[%s4 + $0x10] sm:$0xf]
        %v521 = vld [vmem:[%s4 + $0x14] sm:$0xf]
        %v522 = vld [vmem:[%s4 + $0x18] sm:$0xf]
        %v523 = vld [vmem:[%s4 + $0x1c] sm:$0xf]
        %v524 = vld [vmem:[%s4 + $0x20] sm:$0xf]
        %v525 = vld [vmem:[%s4 + $0x24] sm:$0xf]
        %v526 = vld [vmem:[%s4 + $0x28] sm:$0xf]
        %v527 = vld [vmem:[%s4 + $0x2c] sm:$0xf]
        %v528 = vld [vmem:[%s4 + $0x30] sm:$0xf]
        %v529 = vld [vmem:[%s4 + $0x34] sm:$0xf]
        %v530 = vld [vmem:[%s4 + $0x38] sm:$0xf]
        %v531 = vld [vmem:[%s4 + $0x3c] sm:$0xf]
        %v532 = vld [vmem:[%s4 + $0x40] sm:$0xf]
        %v533 = vld [vmem:[%s4 + $0x44] sm:$0xf]
        %v534 = vld [vmem:[%s4 + $0x48] sm:$0xf]
        %v535 = vld [vmem:[%s4 + $0x4c] sm:$0xf]
        %v536 = vld [vmem:[%s4 + $0x50] sm:$0xf]
        %v537 = vld [vmem:[%s4 + $0x54] sm:$0xf]
        %v538 = vld [vmem:[%s4 + $0x58] sm:$0xf]
        %v539 = vld [vmem:[%s4 + $0x5c] sm:$0xf]
        %v540 = vld [vmem:[%s4 + $0x60] sm:$0xf]
        %v541 = vld [vmem:[%s4 + $0x64] sm:$0xf]
        %v542 = vld [vmem:[%s4 + $0x68] sm:$0xf]
        %v543 = vld [vmem:[%s4 + $0x6c] sm:$0xf]
        %v544 = vld [vmem:[%s4 + $0x70] sm:$0xf]
        %v545 = vld [vmem:[%s4 + $0x74] sm:$0xf]
        %v546 = vld [vmem:[%s4 + $0x78] sm:$0xf]
        %v547 = vld [vmem:[%s4 + $0x7c] sm:$0xf]
        %v548 = vld [vmem:[%s4 + $0x80] sm:$0xf]
        %v549 = vld [vmem:[%s4 + $0x84] sm:$0xf]
        %v550 = vld [vmem:[%s4 + $0x88] sm:$0xf]
        %v551 = vld [vmem:[%s4 + $0x8c] sm:$0xf]
        %v552 = vld [vmem:[%s4 + $0x90] sm:$0xf]
        %v553 = vld [vmem:[%s5] sm:$0xff]
        %v554 = vld [vmem:[%s5 + $0x8] sm:$0xff]
        %v555 = vld [vmem:[%s5 + $0x10] sm:$0xff]
        %v556 = vld [vmem:[%s5 + $0x18] sm:$0xff]
        %v557 = vld [vmem:[%s5 + $0x20] sm:$0xff]
        %v558 = vld [vmem:[%s5 + $0x28] sm:$0xff]
        %v559 = vld [vmem:[%s5 + $0x30] sm:$0xff]
        %v560 = vld [vmem:[%s5 + $0x38] sm:$0xff]
        %v561 = vld [vmem:[%s5 + $0x40] sm:$0xff]
        %v562 = vld [vmem:[%s5 + $0x48] sm:$0xff]
        %v563 = vld [vmem:[%s5 + $0x50] sm:$0xff]
        %v564 = vld [vmem:[%s5 + $0x58] sm:$0xff]
        %v565 = vld [vmem:[%s5 + $0x60] sm:$0xff]
        %v566 = vld [vmem:[%s5 + $0x68] sm:$0xff]
        %v567 = vld [vmem:[%s5 + $0x70] sm:$0xff]
        %v568 = vld [vmem:[%s5 + $0x78] sm:$0xff]
        %v569 = vld [vmem:[%s5 + $0x80] sm:$0xff]
        %v570 = vld [vmem:[%s5 + $0x88] sm:$0xff]
        %v571 = vld [vmem:[%s5 + $0x90] sm:$0xff]
        %v572 = vld [vmem:[%s5 + $0x98] sm:$0xff]
        %v573 = vld [vmem:[%s5 + $0xa0] sm:$0xff]
        %v574 = vld [vmem:[%s5 + $0xa8] sm:$0xff]
        %v575 = vld [vmem:[%s5 + $0xb0] sm:$0xff]
        %v576 = vld [vmem:[%s5 + $0xb8] sm:$0xff]
        %v577 = vld [vmem:[%s5 + $0xc0] sm:$0xff]
        %v578 = vld [vmem:[%s5 + $0xc8] sm:$0xff]
        %v579 = vld [vmem:[%s5 + $0xd0] sm:$0xff]
        %v580 = vld [vmem:[%s5 + $0xd8] sm:$0xff]
        %v581 = vld [vmem:[%s5 + $0xe0] sm:$0xff]
        %v582 = vld [vmem:[%s5 + $0xe8] sm:$0xff]
        %v583 = vld [vmem:[%s5 + $0xf0] sm:$0xff]
        %v584 = vld [vmem:[%s5 + $0xf8] sm:$0xff]
        %v585 = vld [vmem:[%s5 + $0x100] sm:$0xff]
        %v586 = vld [vmem:[%s5 + $0x108] sm:$0xff]
        %v587 = vld [vmem:[%s5 + $0x110] sm:$0xff]
        %v588 = vld [vmem:[%s5 + $0x118] sm:$0xff]
        %v589 = vld [vmem:[%s5 + $0x120] sm:$0xff]
        %591 = vset.pattern.permute.xlu0 0
        %592 = vperm.xlu0 %591, %v553
        %v593 = vpop.permute.xlu0 %592
        %596 = vset.pattern.permute.xlu0 0
        %597 = vperm.xlu0 %596, %v554
        %v598 = vpop.permute.xlu0 %597
        %601 = vset.pattern.permute.xlu0 0
        %602 = vperm.xlu0 %601, %v555
        %v603 = vpop.permute.xlu0 %602
        %606 = vset.pattern.permute.xlu0 0
        %607 = vperm.xlu0 %606, %v556
        %v608 = vpop.permute.xlu0 %607
        %611 = vset.pattern.permute.xlu0 0
        %612 = vperm.xlu0 %611, %v557
        %v613 = vpop.permute.xlu0 %612
        %616 = vset.pattern.permute.xlu0 0
        %617 = vperm.xlu0 %616, %v558
        %v618 = vpop.permute.xlu0 %617
        %621 = vset.pattern.permute.xlu0 0
        %622 = vperm.xlu0 %621, %v559
        %v623 = vpop.permute.xlu0 %622
        %626 = vset.pattern.permute.xlu0 0
        %627 = vperm.xlu0 %626, %v560
        %v628 = vpop.permute.xlu0 %627
        %v638 = vunpack.c.l.b16 %v516
        %v639 = vunpack.c.l.b16 %v517
        %v640 = vunpack.c.l.b16 %v518
        %v641 = vunpack.c.l.b16 %v519
        %v642 = vunpack.c.l.b16 %v520
        %v643 = vunpack.c.l.b16 %v521
        %v644 = vunpack.c.l.b16 %v522
        %v645 = vunpack.c.l.b16 %v523
        %v646 = vpack.c.b16 %v639, %v638
        %v647 = vpack.c.b16 %v641, %v640
        %v648 = vpack.c.b16 %v643, %v642
        %v649 = vpack.c.b16 %v645, %v644
        %vm650 = vcmask 261120
        %v652 = vsel %vm650, %v646, 0
        %v655 = vsel %vm650, %v647, 0
        %v658 = vsel %vm650, %v648, 0
        %v661 = vsel %vm650, %v649, 0
        %663 = vmatpush.bf16.msra.mxu0 0
        %664 = vmatpush.bf16.msra.mxu0 0
        %665 = vmatpush.bf16.msra.mxu0 0
        %666 = vmatpush.bf16.msra.mxu0 0
        %667 = vmatpush.bf16.msra.mxu0 0
        %668 = vmatpush.bf16.msra.mxu0 0
        %669 = vmatpush.bf16.msra.mxu0 %v512
        %670 = vmatpush.bf16.msra.mxu0 %v508
        %671 = vmatmul.bf16.gmra.mxu0 %v652
        %v672 = vpop.f32.mrf.mxu0
        %v673 = vadd.f32 %v593, %v672
        %v674 = vpop.f32.mrf.mxu0
        %v675 = vadd.f32 %v598, %v674
        %676 = vmatmul.bf16.gmra.mxu0 %v655
        %v677 = vpop.f32.mrf.mxu0
        %v678 = vadd.f32 %v603, %v677
        %v679 = vpop.f32.mrf.mxu0
        %v680 = vadd.f32 %v608, %v679
        %681 = vmatmul.bf16.gmra.mxu0 %v658
        %v682 = vpop.f32.mrf.mxu0
        %v683 = vadd.f32 %v613, %v682
        %v684 = vpop.f32.mrf.mxu0
        %v685 = vadd.f32 %v618, %v684
        %686 = vmatmul.bf16.gmra.mxu0 %v661
        %v687 = vpop.f32.mrf.mxu0
        %v688 = vadd.f32 %v623, %v687
        %v689 = vpop.f32.mrf.mxu0
        %v690 = vadd.f32 %v628, %v689
        %691 = vdwg.mxu0
        %692 = vmatpush.bf16.msra.mxu0 0
        %693 = vmatpush.bf16.msra.mxu0 0
        %694 = vmatpush.bf16.msra.mxu0 0
        %695 = vmatpush.bf16.msra.mxu0 0
        %696 = vmatpush.bf16.msra.mxu0 0
        %697 = vmatpush.bf16.msra.mxu0 0
        %698 = vmatpush.bf16.msra.mxu0 %v513
        %699 = vmatpush.bf16.msra.mxu0 %v509
        %700 = vmatmul.bf16.gmra.mxu0 %v652
        %v701 = vpop.f32.mrf.mxu0
        %v702 = vadd.f32 %v593, %v701
        %v703 = vpop.f32.mrf.mxu0
        %v704 = vadd.f32 %v598, %v703
        %705 = vmatmul.bf16.gmra.mxu0 %v655
        %v706 = vpop.f32.mrf.mxu0
        %v707 = vadd.f32 %v603, %v706
        %v708 = vpop.f32.mrf.mxu0
        %v709 = vadd.f32 %v608, %v708
        %710 = vmatmul.bf16.gmra.mxu0 %v658
        %v711 = vpop.f32.mrf.mxu0
        %v712 = vadd.f32 %v613, %v711
        %v713 = vpop.f32.mrf.mxu0
        %v714 = vadd.f32 %v618, %v713
        %715 = vmatmul.bf16.gmra.mxu0 %v661
        %v716 = vpop.f32.mrf.mxu0
        %v717 = vadd.f32 %v623, %v716
        %v718 = vpop.f32.mrf.mxu0
        %v719 = vadd.f32 %v628, %v718
        %720 = vdwg.mxu0
        %721 = vmatpush.bf16.msra.mxu0 0
        %722 = vmatpush.bf16.msra.mxu0 0
        %723 = vmatpush.bf16.msra.mxu0 0
        %724 = vmatpush.bf16.msra.mxu0 0
        %725 = vmatpush.bf16.msra.mxu0 0
        %726 = vmatpush.bf16.msra.mxu0 0
        %727 = vmatpush.bf16.msra.mxu0 %v514
        %728 = vmatpush.bf16.msra.mxu0 %v510
        %729 = vmatmul.bf16.gmra.mxu0 %v652
        %v730 = vpop.f32.mrf.mxu0
        %v731 = vadd.f32 %v593, %v730
        %v732 = vpop.f32.mrf.mxu0
        %v733 = vadd.f32 %v598, %v732
        %734 = vmatmul.bf16.gmra.mxu0 %v655
        %v735 = vpop.f32.mrf.mxu0
        %v736 = vadd.f32 %v603, %v735
        %v737 = vpop.f32.mrf.mxu0
        %v738 = vadd.f32 %v608, %v737
        %739 = vmatmul.bf16.gmra.mxu0 %v658
        %v740 = vpop.f32.mrf.mxu0
        %v741 = vadd.f32 %v613, %v740
        %v742 = vpop.f32.mrf.mxu0
        %v743 = vadd.f32 %v618, %v742
        %744 = vmatmul.bf16.gmra.mxu0 %v661
        %v745 = vpop.f32.mrf.mxu0
        %v746 = vadd.f32 %v623, %v745
        %v747 = vpop.f32.mrf.mxu0
        %v748 = vadd.f32 %v628, %v747
        %749 = vdwg.mxu0
        %750 = vmatpush.bf16.msra.mxu0 0
        %751 = vmatpush.bf16.msra.mxu0 0
        %752 = vmatpush.bf16.msra.mxu0 0
        %753 = vmatpush.bf16.msra.mxu0 0
        %754 = vmatpush.bf16.msra.mxu0 0
        %755 = vmatpush.bf16.msra.mxu0 0
        %756 = vmatpush.bf16.msra.mxu0 %v515
        %757 = vmatpush.bf16.msra.mxu0 %v511
        %758 = vmatmul.bf16.gmra.mxu0 %v652
        %v759 = vpop.f32.mrf.mxu0
        %v760 = vadd.f32 %v593, %v759
        %v761 = vpop.f32.mrf.mxu0
        %v762 = vadd.f32 %v598, %v761
        %763 = vmatmul.bf16.gmra.mxu0 %v655
        %v764 = vpop.f32.mrf.mxu0
        %v765 = vadd.f32 %v603, %v764
        %v766 = vpop.f32.mrf.mxu0
        %v767 = vadd.f32 %v608, %v766
        %768 = vmatmul.bf16.gmra.mxu0 %v658
        %v769 = vpop.f32.mrf.mxu0
        %v770 = vadd.f32 %v613, %v769
        %v771 = vpop.f32.mrf.mxu0
        %v772 = vadd.f32 %v618, %v771
        %773 = vmatmul.bf16.gmra.mxu0 %v661
        %v774 = vpop.f32.mrf.mxu0
        %v775 = vadd.f32 %v623, %v774
        %v776 = vpop.f32.mrf.mxu0
        %v777 = vadd.f32 %v628, %v776
        %778 = vdwg.mxu0
        %v779 = vmax.f32 %v673, 0.0
        %v780 = vmax.f32 %v702, 0.0
        %v781 = vmax.f32 %v731, 0.0
        %v782 = vmax.f32 %v760, 0.0
        %v783 = vmax.f32 %v675, 0.0
        %v784 = vmax.f32 %v704, 0.0
        %v785 = vmax.f32 %v733, 0.0
        %v786 = vmax.f32 %v762, 0.0
        %v787 = vmax.f32 %v678, 0.0
        %v788 = vmax.f32 %v707, 0.0
        %v789 = vmax.f32 %v736, 0.0
        %v790 = vmax.f32 %v765, 0.0
        %v791 = vmax.f32 %v680, 0.0
        %v792 = vmax.f32 %v709, 0.0
        %v793 = vmax.f32 %v738, 0.0
        %v794 = vmax.f32 %v767, 0.0
        %v795 = vmax.f32 %v683, 0.0
        %v796 = vmax.f32 %v712, 0.0
        %v797 = vmax.f32 %v741, 0.0
        %v798 = vmax.f32 %v770, 0.0
        %v799 = vmax.f32 %v685, 0.0
        %v800 = vmax.f32 %v714, 0.0
        %v801 = vmax.f32 %v743, 0.0
        %v802 = vmax.f32 %v772, 0.0
        %v803 = vmax.f32 %v688, 0.0
        %v804 = vmax.f32 %v717, 0.0
        %v805 = vmax.f32 %v746, 0.0
        %v806 = vmax.f32 %v775, 0.0
        %v807 = vmax.f32 %v690, 0.0
        %v808 = vmax.f32 %v719, 0.0
        %v809 = vmax.f32 %v748, 0.0
        %v810 = vmax.f32 %v777, 0.0
        %v811 = vpack.c.bf16 %v783, %v779
        %v812 = vpack.c.bf16 %v784, %v780
        %v813 = vpack.c.bf16 %v785, %v781
        %v814 = vpack.c.bf16 %v786, %v782
        %v815 = vpack.c.bf16 %v791, %v787
        %v816 = vpack.c.bf16 %v792, %v788
        %v817 = vpack.c.bf16 %v793, %v789
        %v818 = vpack.c.bf16 %v794, %v790
        %v819 = vpack.c.bf16 %v799, %v795
        %v820 = vpack.c.bf16 %v800, %v796
        %v821 = vpack.c.bf16 %v801, %v797
        %v822 = vpack.c.bf16 %v802, %v798
        %v823 = vpack.c.bf16 %v807, %v803
        %v824 = vpack.c.bf16 %v808, %v804
        %v825 = vpack.c.bf16 %v809, %v805
        %v826 = vpack.c.bf16 %v810, %v806
        %828 = vset.pattern.permute.xlu0 0
        %829 = vperm.xlu0 %828, %v561
        %v830 = vpop.permute.xlu0 %829
        %833 = vset.pattern.permute.xlu0 0
        %834 = vperm.xlu0 %833, %v562
        %v835 = vpop.permute.xlu0 %834
        %838 = vset.pattern.permute.xlu0 0
        %839 = vperm.xlu0 %838, %v563
        %v840 = vpop.permute.xlu0 %839
        %843 = vset.pattern.permute.xlu0 0
        %844 = vperm.xlu0 %843, %v564
        %v845 = vpop.permute.xlu0 %844
        %848 = vset.pattern.permute.xlu0 0
        %849 = vperm.xlu0 %848, %v565
        %v850 = vpop.permute.xlu0 %849
        %853 = vset.pattern.permute.xlu0 0
        %854 = vperm.xlu0 %853, %v566
        %v855 = vpop.permute.xlu0 %854
        %858 = vset.pattern.permute.xlu0 0
        %859 = vperm.xlu0 %858, %v567
        %v860 = vpop.permute.xlu0 %859
        %863 = vset.pattern.permute.xlu0 0
        %864 = vperm.xlu0 %863, %v568
        %v865 = vpop.permute.xlu0 %864
        %v875 = vunpack.c.l.b16 %v524
        %v876 = vunpack.c.l.b16 %v525
        %v877 = vunpack.c.l.b16 %v526
        %v878 = vunpack.c.l.b16 %v527
        %v879 = vunpack.c.l.b16 %v528
        %v880 = vunpack.c.l.b16 %v529
        %v881 = vunpack.c.l.b16 %v530
        %v882 = vunpack.c.l.b16 %v531
        %v883 = vpack.c.b16 %v876, %v875
        %v884 = vpack.c.b16 %v878, %v877
        %v885 = vpack.c.b16 %v880, %v879
        %v886 = vpack.c.b16 %v882, %v881
        %vm887 = vcmask 523264
        %v889 = vsel %vm887, %v883, 0
        %v892 = vsel %vm887, %v884, 0
        %v895 = vsel %vm887, %v885, 0
        %v898 = vsel %vm887, %v886, 0
        %900 = vmatpush.bf16.msra.mxu0 0
        %901 = vmatpush.bf16.msra.mxu0 0
        %902 = vmatpush.bf16.msra.mxu0 0
        %903 = vmatpush.bf16.msra.mxu0 0
        %904 = vmatpush.bf16.msra.mxu0 %v823
        %905 = vmatpush.bf16.msra.mxu0 %v819
        %906 = vmatpush.bf16.msra.mxu0 %v815
        %907 = vmatpush.bf16.msra.mxu0 %v811
        %908 = vmatmul.bf16.gmra.mxu0 %v889
        %v909 = vpop.f32.mrf.mxu0
        %v910 = vadd.f32 %v830, %v909
        %v911 = vpop.f32.mrf.mxu0
        %v912 = vadd.f32 %v835, %v911
        %913 = vmatmul.bf16.gmra.mxu0 %v892
        %v914 = vpop.f32.mrf.mxu0
        %v915 = vadd.f32 %v840, %v914
        %v916 = vpop.f32.mrf.mxu0
        %v917 = vadd.f32 %v845, %v916
        %918 = vmatmul.bf16.gmra.mxu0 %v895
        %v919 = vpop.f32.mrf.mxu0
        %v920 = vadd.f32 %v850, %v919
        %v921 = vpop.f32.mrf.mxu0
        %v922 = vadd.f32 %v855, %v921
        %923 = vmatmul.bf16.gmra.mxu0 %v898
        %v924 = vpop.f32.mrf.mxu0
        %v925 = vadd.f32 %v860, %v924
        %v926 = vpop.f32.mrf.mxu0
        %v927 = vadd.f32 %v865, %v926
        %928 = vdwg.mxu0
        %929 = vmatpush.bf16.msra.mxu0 0
        %930 = vmatpush.bf16.msra.mxu0 0
        %931 = vmatpush.bf16.msra.mxu0 0
        %932 = vmatpush.bf16.msra.mxu0 0
        %933 = vmatpush.bf16.msra.mxu0 %v824
        %934 = vmatpush.bf16.msra.mxu0 %v820
        %935 = vmatpush.bf16.msra.mxu0 %v816
        %936 = vmatpush.bf16.msra.mxu0 %v812
        %937 = vmatmul.bf16.gmra.mxu0 %v889
        %v938 = vpop.f32.mrf.mxu0
        %v939 = vadd.f32 %v830, %v938
        %v940 = vpop.f32.mrf.mxu0
        %v941 = vadd.f32 %v835, %v940
        %942 = vmatmul.bf16.gmra.mxu0 %v892
        %v943 = vpop.f32.mrf.mxu0
        %v944 = vadd.f32 %v840, %v943
        %v945 = vpop.f32.mrf.mxu0
        %v946 = vadd.f32 %v845, %v945
        %947 = vmatmul.bf16.gmra.mxu0 %v895
        %v948 = vpop.f32.mrf.mxu0
        %v949 = vadd.f32 %v850, %v948
        %v950 = vpop.f32.mrf.mxu0
        %v951 = vadd.f32 %v855, %v950
        %952 = vmatmul.bf16.gmra.mxu0 %v898
        %v953 = vpop.f32.mrf.mxu0
        %v954 = vadd.f32 %v860, %v953
        %v955 = vpop.f32.mrf.mxu0
        %v956 = vadd.f32 %v865, %v955
        %957 = vdwg.mxu0
        %958 = vmatpush.bf16.msra.mxu0 0
        %959 = vmatpush.bf16.msra.mxu0 0
        %960 = vmatpush.bf16.msra.mxu0 0
        %961 = vmatpush.bf16.msra.mxu0 0
        %962 = vmatpush.bf16.msra.mxu0 %v825
        %963 = vmatpush.bf16.msra.mxu0 %v821
        %964 = vmatpush.bf16.msra.mxu0 %v817
        %965 = vmatpush.bf16.msra.mxu0 %v813
        %966 = vmatmul.bf16.gmra.mxu0 %v889
        %v967 = vpop.f32.mrf.mxu0
        %v968 = vadd.f32 %v830, %v967
        %v969 = vpop.f32.mrf.mxu0
        %v970 = vadd.f32 %v835, %v969
        %971 = vmatmul.bf16.gmra.mxu0 %v892
        %v972 = vpop.f32.mrf.mxu0
        %v973 = vadd.f32 %v840, %v972
        %v974 = vpop.f32.mrf.mxu0
        %v975 = vadd.f32 %v845, %v974
        %976 = vmatmul.bf16.gmra.mxu0 %v895
        %v977 = vpop.f32.mrf.mxu0
        %v978 = vadd.f32 %v850, %v977
        %v979 = vpop.f32.mrf.mxu0
        %v980 = vadd.f32 %v855, %v979
        %981 = vmatmul.bf16.gmra.mxu0 %v898
        %v982 = vpop.f32.mrf.mxu0
        %v983 = vadd.f32 %v860, %v982
        %v984 = vpop.f32.mrf.mxu0
        %v985 = vadd.f32 %v865, %v984
        %986 = vdwg.mxu0
        %987 = vmatpush.bf16.msra.mxu0 0
        %988 = vmatpush.bf16.msra.mxu0 0
        %989 = vmatpush.bf16.msra.mxu0 0
        %990 = vmatpush.bf16.msra.mxu0 0
        %991 = vmatpush.bf16.msra.mxu0 %v826
        %992 = vmatpush.bf16.msra.mxu0 %v822
        %993 = vmatpush.bf16.msra.mxu0 %v818
        %994 = vmatpush.bf16.msra.mxu0 %v814
        %995 = vmatmul.bf16.gmra.mxu0 %v889
        %v996 = vpop.f32.mrf.mxu0
        %v997 = vadd.f32 %v830, %v996
        %v998 = vpop.f32.mrf.mxu0
        %v999 = vadd.f32 %v835, %v998
        %1000 = vmatmul.bf16.gmra.mxu0 %v892
        %v1001 = vpop.f32.mrf.mxu0
        %v1002 = vadd.f32 %v840, %v1001
        %v1003 = vpop.f32.mrf.mxu0
        %v1004 = vadd.f32 %v845, %v1003
        %1005 = vmatmul.bf16.gmra.mxu0 %v895
        %v1006 = vpop.f32.mrf.mxu0
        %v1007 = vadd.f32 %v850, %v1006
        %v1008 = vpop.f32.mrf.mxu0
        %v1009 = vadd.f32 %v855, %v1008
        %1010 = vmatmul.bf16.gmra.mxu0 %v898
        %v1011 = vpop.f32.mrf.mxu0
        %v1012 = vadd.f32 %v860, %v1011
        %v1013 = vpop.f32.mrf.mxu0
        %v1014 = vadd.f32 %v865, %v1013
        %1015 = vdwg.mxu0
        %v1016 = vmax.f32 %v910, 0.0
        %v1017 = vmax.f32 %v939, 0.0
        %v1018 = vmax.f32 %v968, 0.0
        %v1019 = vmax.f32 %v997, 0.0
        %v1020 = vmax.f32 %v912, 0.0
        %v1021 = vmax.f32 %v941, 0.0
        %v1022 = vmax.f32 %v970, 0.0
        %v1023 = vmax.f32 %v999, 0.0
        %v1024 = vmax.f32 %v915, 0.0
        %v1025 = vmax.f32 %v944, 0.0
        %v1026 = vmax.f32 %v973, 0.0
        %v1027 = vmax.f32 %v1002, 0.0
        %v1028 = vmax.f32 %v917, 0.0
        %v1029 = vmax.f32 %v946, 0.0
        %v1030 = vmax.f32 %v975, 0.0
        %v1031 = vmax.f32 %v1004, 0.0
        %v1032 = vmax.f32 %v920, 0.0
        %v1033 = vmax.f32 %v949, 0.0
        %v1034 = vmax.f32 %v978, 0.0
        %v1035 = vmax.f32 %v1007, 0.0
        %v1036 = vmax.f32 %v922, 0.0
        %v1037 = vmax.f32 %v951, 0.0
        %v1038 = vmax.f32 %v980, 0.0
        %v1039 = vmax.f32 %v1009, 0.0
        %v1040 = vmax.f32 %v925, 0.0
        %v1041 = vmax.f32 %v954, 0.0
        %v1042 = vmax.f32 %v983, 0.0
        %v1043 = vmax.f32 %v1012, 0.0
        %v1044 = vmax.f32 %v927, 0.0
        %v1045 = vmax.f32 %v956, 0.0
        %v1046 = vmax.f32 %v985, 0.0
        %v1047 = vmax.f32 %v1014, 0.0
        %v1048 = vpack.c.bf16 %v1020, %v1016
        %v1049 = vpack.c.bf16 %v1021, %v1017
        %v1050 = vpack.c.bf16 %v1022, %v1018
        %v1051 = vpack.c.bf16 %v1023, %v1019
        %v1052 = vpack.c.bf16 %v1028, %v1024
        %v1053 = vpack.c.bf16 %v1029, %v1025
        %v1054 = vpack.c.bf16 %v1030, %v1026
        %v1055 = vpack.c.bf16 %v1031, %v1027
        %v1056 = vpack.c.bf16 %v1036, %v1032
        %v1057 = vpack.c.bf16 %v1037, %v1033
        %v1058 = vpack.c.bf16 %v1038, %v1034
        %v1059 = vpack.c.bf16 %v1039, %v1035
        %v1060 = vpack.c.bf16 %v1044, %v1040
        %v1061 = vpack.c.bf16 %v1045, %v1041
        %v1062 = vpack.c.bf16 %v1046, %v1042
        %v1063 = vpack.c.bf16 %v1047, %v1043
        %1065 = vset.pattern.permute.xlu0 0
        %1066 = vperm.xlu0 %1065, %v569
        %v1067 = vpop.permute.xlu0 %1066
        %1070 = vset.pattern.permute.xlu0 0
        %1071 = vperm.xlu0 %1070, %v570
        %v1072 = vpop.permute.xlu0 %1071
        %1075 = vset.pattern.permute.xlu0 0
        %1076 = vperm.xlu0 %1075, %v571
        %v1077 = vpop.permute.xlu0 %1076
        %1080 = vset.pattern.permute.xlu0 0
        %1081 = vperm.xlu0 %1080, %v572
        %v1082 = vpop.permute.xlu0 %1081
        %1085 = vset.pattern.permute.xlu0 0
        %1086 = vperm.xlu0 %1085, %v573
        %v1087 = vpop.permute.xlu0 %1086
        %1090 = vset.pattern.permute.xlu0 0
        %1091 = vperm.xlu0 %1090, %v574
        %v1092 = vpop.permute.xlu0 %1091
        %1095 = vset.pattern.permute.xlu0 0
        %1096 = vperm.xlu0 %1095, %v575
        %v1097 = vpop.permute.xlu0 %1096
        %1100 = vset.pattern.permute.xlu0 0
        %1101 = vperm.xlu0 %1100, %v576
        %v1102 = vpop.permute.xlu0 %1101
        %1105 = vset.pattern.permute.xlu0 0
        %1106 = vperm.xlu0 %1105, %v577
        %v1107 = vpop.permute.xlu0 %1106
        %1110 = vset.pattern.permute.xlu0 0
        %1111 = vperm.xlu0 %1110, %v578
        %v1112 = vpop.permute.xlu0 %1111
        %1115 = vset.pattern.permute.xlu0 0
        %1116 = vperm.xlu0 %1115, %v579
        %v1117 = vpop.permute.xlu0 %1116
        %1120 = vset.pattern.permute.xlu0 0
        %1121 = vperm.xlu0 %1120, %v580
        %v1122 = vpop.permute.xlu0 %1121
        %1125 = vset.pattern.permute.xlu0 0
        %1126 = vperm.xlu0 %1125, %v581
        %v1127 = vpop.permute.xlu0 %1126
        %1130 = vset.pattern.permute.xlu0 0
        %1131 = vperm.xlu0 %1130, %v582
        %v1132 = vpop.permute.xlu0 %1131
        %1135 = vset.pattern.permute.xlu0 0
        %1136 = vperm.xlu0 %1135, %v583
        %v1137 = vpop.permute.xlu0 %1136
        %1140 = vset.pattern.permute.xlu0 0
        %1141 = vperm.xlu0 %1140, %v584
        %v1142 = vpop.permute.xlu0 %1141
        %1145 = vset.pattern.permute.xlu0 0
        %1146 = vperm.xlu0 %1145, %v585
        %v1147 = vpop.permute.xlu0 %1146
        %1150 = vset.pattern.permute.xlu0 0
        %1151 = vperm.xlu0 %1150, %v586
        %v1152 = vpop.permute.xlu0 %1151
        %1155 = vset.pattern.permute.xlu0 0
        %1156 = vperm.xlu0 %1155, %v587
        %v1157 = vpop.permute.xlu0 %1156
        %1160 = vset.pattern.permute.xlu0 0
        %1161 = vperm.xlu0 %1160, %v588
        %v1162 = vpop.permute.xlu0 %1161
        %1165 = vset.pattern.permute.xlu0 0
        %1166 = vperm.xlu0 %1165, %v589
        %v1167 = vpop.permute.xlu0 %1166
        %v1190 = vunpack.c.l.b16 %v532
        %v1191 = vunpack.c.l.b16 %v533
        %v1192 = vunpack.c.l.b16 %v534
        %v1193 = vunpack.c.l.b16 %v535
        %v1194 = vunpack.c.l.b16 %v536
        %v1195 = vunpack.c.l.b16 %v537
        %v1196 = vunpack.c.l.b16 %v538
        %v1197 = vunpack.c.l.b16 %v539
        %v1198 = vunpack.c.l.b16 %v540
        %v1199 = vunpack.c.l.b16 %v541
        %v1200 = vunpack.c.l.b16 %v542
        %v1201 = vunpack.c.l.b16 %v543
        %v1202 = vunpack.c.l.b16 %v544
        %v1203 = vunpack.c.l.b16 %v545
        %v1204 = vunpack.c.l.b16 %v546
        %v1205 = vunpack.c.l.b16 %v547
        %v1206 = vunpack.c.l.b16 %v548
        %v1207 = vunpack.c.l.b16 %v549
        %v1208 = vunpack.c.l.b16 %v550
        %v1209 = vunpack.c.l.b16 %v551
        %v1210 = vunpack.c.l.b16 %v552
        %v1211 = vpack.c.b16 %v1191, %v1190
        %v1212 = vpack.c.b16 %v1193, %v1192
        %v1213 = vpack.c.b16 %v1195, %v1194
        %v1214 = vpack.c.b16 %v1197, %v1196
        %v1215 = vpack.c.b16 %v1199, %v1198
        %v1216 = vpack.c.b16 %v1201, %v1200
        %v1217 = vpack.c.b16 %v1203, %v1202
        %v1218 = vpack.c.b16 %v1205, %v1204
        %v1219 = vpack.c.b16 %v1207, %v1206
        %v1220 = vpack.c.b16 %v1209, %v1208
        %v1221 = vpack.c.b16 %v1210, %v1210
        %v1223 = vsel %vm887, %v1211, 0
        %v1226 = vsel %vm887, %v1212, 0
        %v1229 = vsel %vm887, %v1213, 0
        %v1232 = vsel %vm887, %v1214, 0
        %v1235 = vsel %vm887, %v1215, 0
        %v1238 = vsel %vm887, %v1216, 0
        %v1241 = vsel %vm887, %v1217, 0
        %v1244 = vsel %vm887, %v1218, 0
        %v1247 = vsel %vm887, %v1219, 0
        %v1250 = vsel %vm887, %v1220, 0
        %v1253 = vsel %vm887, %v1221, 0
        %1255 = vmatpush.bf16.msra.mxu0 0
        %1256 = vmatpush.bf16.msra.mxu0 0
        %1257 = vmatpush.bf16.msra.mxu0 0
        %1258 = vmatpush.bf16.msra.mxu0 0
        %1259 = vmatpush.bf16.msra.mxu0 %v1060
        %1260 = vmatpush.bf16.msra.mxu0 %v1056
        %1261 = vmatpush.bf16.msra.mxu0 %v1052
        %1262 = vmatpush.bf16.msra.mxu0 %v1048
        %1263 = vmatmul.bf16.gmra.mxu0 %v1223
        %v1264 = vpop.f32.mrf.mxu0
        %v1265 = vadd.f32 %v1067, %v1264
        %v1266 = vpop.f32.mrf.mxu0
        %v1267 = vadd.f32 %v1072, %v1266
        %1268 = vmatmul.bf16.gmra.mxu0 %v1226
        %v1269 = vpop.f32.mrf.mxu0
        %v1270 = vadd.f32 %v1077, %v1269
        %v1271 = vpop.f32.mrf.mxu0
        %v1272 = vadd.f32 %v1082, %v1271
        %1273 = vmatmul.bf16.gmra.mxu0 %v1229
        %v1274 = vpop.f32.mrf.mxu0
        %v1275 = vadd.f32 %v1087, %v1274
        %v1276 = vpop.f32.mrf.mxu0
        %v1277 = vadd.f32 %v1092, %v1276
        %1278 = vmatmul.bf16.gmra.mxu0 %v1232
        %v1279 = vpop.f32.mrf.mxu0
        %v1280 = vadd.f32 %v1097, %v1279
        %v1281 = vpop.f32.mrf.mxu0
        %v1282 = vadd.f32 %v1102, %v1281
        %1283 = vmatmul.bf16.gmra.mxu0 %v1235
        %v1284 = vpop.f32.mrf.mxu0
        %v1285 = vadd.f32 %v1107, %v1284
        %v1286 = vpop.f32.mrf.mxu0
        %v1287 = vadd.f32 %v1112, %v1286
        %1288 = vmatmul.bf16.gmra.mxu0 %v1238
        %v1289 = vpop.f32.mrf.mxu0
        %v1290 = vadd.f32 %v1117, %v1289
        %v1291 = vpop.f32.mrf.mxu0
        %v1292 = vadd.f32 %v1122, %v1291
        %1293 = vmatmul.bf16.gmra.mxu0 %v1241
        %v1294 = vpop.f32.mrf.mxu0
        %v1295 = vadd.f32 %v1127, %v1294
        %v1296 = vpop.f32.mrf.mxu0
        %v1297 = vadd.f32 %v1132, %v1296
        %1298 = vmatmul.bf16.gmra.mxu0 %v1244
        %v1299 = vpop.f32.mrf.mxu0
        %v1300 = vadd.f32 %v1137, %v1299
        %v1301 = vpop.f32.mrf.mxu0
        %v1302 = vadd.f32 %v1142, %v1301
        %1303 = vmatmul.bf16.gmra.mxu0 %v1247
        %v1304 = vpop.f32.mrf.mxu0
        %v1305 = vadd.f32 %v1147, %v1304
        %v1306 = vpop.f32.mrf.mxu0
        %v1307 = vadd.f32 %v1152, %v1306
        %1308 = vmatmul.bf16.gmra.mxu0 %v1250
        %v1309 = vpop.f32.mrf.mxu0
        %v1310 = vadd.f32 %v1157, %v1309
        %v1311 = vpop.f32.mrf.mxu0
        %v1312 = vadd.f32 %v1162, %v1311
        %1313 = vmatmul.bf16.gmra.mxu0 %v1253
        %v1314 = vpop.f32.mrf.mxu0
        %v1315 = vadd.f32 %v1167, %v1314
        %v1316 = vpop.f32.mrf.mxu0
        %1317 = vdwg.mxu0
        %1318 = vmatpush.bf16.msra.mxu0 0
        %1319 = vmatpush.bf16.msra.mxu0 0
        %1320 = vmatpush.bf16.msra.mxu0 0
        %1321 = vmatpush.bf16.msra.mxu0 0
        %1322 = vmatpush.bf16.msra.mxu0 %v1061
        %1323 = vmatpush.bf16.msra.mxu0 %v1057
        %1324 = vmatpush.bf16.msra.mxu0 %v1053
        %1325 = vmatpush.bf16.msra.mxu0 %v1049
        %1326 = vmatmul.bf16.gmra.mxu0 %v1223
        %v1327 = vpop.f32.mrf.mxu0
        %v1328 = vadd.f32 %v1067, %v1327
        %v1329 = vpop.f32.mrf.mxu0
        %v1330 = vadd.f32 %v1072, %v1329
        %1331 = vmatmul.bf16.gmra.mxu0 %v1226
        %v1332 = vpop.f32.mrf.mxu0
        %v1333 = vadd.f32 %v1077, %v1332
        %v1334 = vpop.f32.mrf.mxu0
        %v1335 = vadd.f32 %v1082, %v1334
        %1336 = vmatmul.bf16.gmra.mxu0 %v1229
        %v1337 = vpop.f32.mrf.mxu0
        %v1338 = vadd.f32 %v1087, %v1337
        %v1339 = vpop.f32.mrf.mxu0
        %v1340 = vadd.f32 %v1092, %v1339
        %1341 = vmatmul.bf16.gmra.mxu0 %v1232
        %v1342 = vpop.f32.mrf.mxu0
        %v1343 = vadd.f32 %v1097, %v1342
        %v1344 = vpop.f32.mrf.mxu0
        %v1345 = vadd.f32 %v1102, %v1344
        %1346 = vmatmul.bf16.gmra.mxu0 %v1235
        %v1347 = vpop.f32.mrf.mxu0
        %v1348 = vadd.f32 %v1107, %v1347
        %v1349 = vpop.f32.mrf.mxu0
        %v1350 = vadd.f32 %v1112, %v1349
        %1351 = vmatmul.bf16.gmra.mxu0 %v1238
        %v1352 = vpop.f32.mrf.mxu0
        %v1353 = vadd.f32 %v1117, %v1352
        %v1354 = vpop.f32.mrf.mxu0
        %v1355 = vadd.f32 %v1122, %v1354
        %1356 = vmatmul.bf16.gmra.mxu0 %v1241
        %v1357 = vpop.f32.mrf.mxu0
        %v1358 = vadd.f32 %v1127, %v1357
        %v1359 = vpop.f32.mrf.mxu0
        %v1360 = vadd.f32 %v1132, %v1359
        %1361 = vmatmul.bf16.gmra.mxu0 %v1244
        %v1362 = vpop.f32.mrf.mxu0
        %v1363 = vadd.f32 %v1137, %v1362
        %v1364 = vpop.f32.mrf.mxu0
        %v1365 = vadd.f32 %v1142, %v1364
        %1366 = vmatmul.bf16.gmra.mxu0 %v1247
        %v1367 = vpop.f32.mrf.mxu0
        %v1368 = vadd.f32 %v1147, %v1367
        %v1369 = vpop.f32.mrf.mxu0
        %v1370 = vadd.f32 %v1152, %v1369
        %1371 = vmatmul.bf16.gmra.mxu0 %v1250
        %v1372 = vpop.f32.mrf.mxu0
        %v1373 = vadd.f32 %v1157, %v1372
        %v1374 = vpop.f32.mrf.mxu0
        %v1375 = vadd.f32 %v1162, %v1374
        %1376 = vmatmul.bf16.gmra.mxu0 %v1253
        %v1377 = vpop.f32.mrf.mxu0
        %v1378 = vadd.f32 %v1167, %v1377
        %v1379 = vpop.f32.mrf.mxu0
        %1380 = vdwg.mxu0
        %1381 = vmatpush.bf16.msra.mxu0 0
        %1382 = vmatpush.bf16.msra.mxu0 0
        %1383 = vmatpush.bf16.msra.mxu0 0
        %1384 = vmatpush.bf16.msra.mxu0 0
        %1385 = vmatpush.bf16.msra.mxu0 %v1062
        %1386 = vmatpush.bf16.msra.mxu0 %v1058
        %1387 = vmatpush.bf16.msra.mxu0 %v1054
        %1388 = vmatpush.bf16.msra.mxu0 %v1050
        %1389 = vmatmul.bf16.gmra.mxu0 %v1223
        %v1390 = vpop.f32.mrf.mxu0
        %v1391 = vadd.f32 %v1067, %v1390
        %v1392 = vpop.f32.mrf.mxu0
        %v1393 = vadd.f32 %v1072, %v1392
        %1394 = vmatmul.bf16.gmra.mxu0 %v1226
        %v1395 = vpop.f32.mrf.mxu0
        %v1396 = vadd.f32 %v1077, %v1395
        %v1397 = vpop.f32.mrf.mxu0
        %v1398 = vadd.f32 %v1082, %v1397
        %1399 = vmatmul.bf16.gmra.mxu0 %v1229
        %v1400 = vpop.f32.mrf.mxu0
        %v1401 = vadd.f32 %v1087, %v1400
        %v1402 = vpop.f32.mrf.mxu0
        %v1403 = vadd.f32 %v1092, %v1402
        %1404 = vmatmul.bf16.gmra.mxu0 %v1232
        %v1405 = vpop.f32.mrf.mxu0
        %v1406 = vadd.f32 %v1097, %v1405
        %v1407 = vpop.f32.mrf.mxu0
        %v1408 = vadd.f32 %v1102, %v1407
        %1409 = vmatmul.bf16.gmra.mxu0 %v1235
        %v1410 = vpop.f32.mrf.mxu0
        %v1411 = vadd.f32 %v1107, %v1410
        %v1412 = vpop.f32.mrf.mxu0
        %v1413 = vadd.f32 %v1112, %v1412
        %1414 = vmatmul.bf16.gmra.mxu0 %v1238
        %v1415 = vpop.f32.mrf.mxu0
        %v1416 = vadd.f32 %v1117, %v1415
        %v1417 = vpop.f32.mrf.mxu0
        %v1418 = vadd.f32 %v1122, %v1417
        %1419 = vmatmul.bf16.gmra.mxu0 %v1241
        %v1420 = vpop.f32.mrf.mxu0
        %v1421 = vadd.f32 %v1127, %v1420
        %v1422 = vpop.f32.mrf.mxu0
        %v1423 = vadd.f32 %v1132, %v1422
        %1424 = vmatmul.bf16.gmra.mxu0 %v1244
        %v1425 = vpop.f32.mrf.mxu0
        %v1426 = vadd.f32 %v1137, %v1425
        %v1427 = vpop.f32.mrf.mxu0
        %v1428 = vadd.f32 %v1142, %v1427
        %1429 = vmatmul.bf16.gmra.mxu0 %v1247
        %v1430 = vpop.f32.mrf.mxu0
        %v1431 = vadd.f32 %v1147, %v1430
        %v1432 = vpop.f32.mrf.mxu0
        %v1433 = vadd.f32 %v1152, %v1432
        %1434 = vmatmul.bf16.gmra.mxu0 %v1250
        %v1435 = vpop.f32.mrf.mxu0
        %v1436 = vadd.f32 %v1157, %v1435
        %v1437 = vpop.f32.mrf.mxu0
        %v1438 = vadd.f32 %v1162, %v1437
        %1439 = vmatmul.bf16.gmra.mxu0 %v1253
        %v1440 = vpop.f32.mrf.mxu0
        %v1441 = vadd.f32 %v1167, %v1440
        %v1442 = vpop.f32.mrf.mxu0
        %1443 = vdwg.mxu0
        %1444 = vmatpush.bf16.msra.mxu0 0
        %1445 = vmatpush.bf16.msra.mxu0 0
        %1446 = vmatpush.bf16.msra.mxu0 0
        %1447 = vmatpush.bf16.msra.mxu0 0
        %1448 = vmatpush.bf16.msra.mxu0 %v1063
        %1449 = vmatpush.bf16.msra.mxu0 %v1059
        %1450 = vmatpush.bf16.msra.mxu0 %v1055
        %1451 = vmatpush.bf16.msra.mxu0 %v1051
        %1452 = vmatmul.bf16.gmra.mxu0 %v1223
        %v1453 = vpop.f32.mrf.mxu0
        %v1454 = vadd.f32 %v1067, %v1453
        %v1455 = vpop.f32.mrf.mxu0
        %v1456 = vadd.f32 %v1072, %v1455
        %1457 = vmatmul.bf16.gmra.mxu0 %v1226
        %v1458 = vpop.f32.mrf.mxu0
        %v1459 = vadd.f32 %v1077, %v1458
        %v1460 = vpop.f32.mrf.mxu0
        %v1461 = vadd.f32 %v1082, %v1460
        %1462 = vmatmul.bf16.gmra.mxu0 %v1229
        %v1463 = vpop.f32.mrf.mxu0
        %v1464 = vadd.f32 %v1087, %v1463
        %v1465 = vpop.f32.mrf.mxu0
        %v1466 = vadd.f32 %v1092, %v1465
        %1467 = vmatmul.bf16.gmra.mxu0 %v1232
        %v1468 = vpop.f32.mrf.mxu0
        %v1469 = vadd.f32 %v1097, %v1468
        %v1470 = vpop.f32.mrf.mxu0
        %v1471 = vadd.f32 %v1102, %v1470
        %1472 = vmatmul.bf16.gmra.mxu0 %v1235
        %v1473 = vpop.f32.mrf.mxu0
        %v1474 = vadd.f32 %v1107, %v1473
        %v1475 = vpop.f32.mrf.mxu0
        %v1476 = vadd.f32 %v1112, %v1475
        %1477 = vmatmul.bf16.gmra.mxu0 %v1238
        %v1478 = vpop.f32.mrf.mxu0
        %v1479 = vadd.f32 %v1117, %v1478
        %v1480 = vpop.f32.mrf.mxu0
        %v1481 = vadd.f32 %v1122, %v1480
        %1482 = vmatmul.bf16.gmra.mxu0 %v1241
        %v1483 = vpop.f32.mrf.mxu0
        %v1484 = vadd.f32 %v1127, %v1483
        %v1485 = vpop.f32.mrf.mxu0
        %v1486 = vadd.f32 %v1132, %v1485
        %1487 = vmatmul.bf16.gmra.mxu0 %v1244
        %v1488 = vpop.f32.mrf.mxu0
        %v1489 = vadd.f32 %v1137, %v1488
        %v1490 = vpop.f32.mrf.mxu0
        %v1491 = vadd.f32 %v1142, %v1490
        %1492 = vmatmul.bf16.gmra.mxu0 %v1247
        %v1493 = vpop.f32.mrf.mxu0
        %v1494 = vadd.f32 %v1147, %v1493
        %v1495 = vpop.f32.mrf.mxu0
        %v1496 = vadd.f32 %v1152, %v1495
        %1497 = vmatmul.bf16.gmra.mxu0 %v1250
        %v1498 = vpop.f32.mrf.mxu0
        %v1499 = vadd.f32 %v1157, %v1498
        %v1500 = vpop.f32.mrf.mxu0
        %v1501 = vadd.f32 %v1162, %v1500
        %1502 = vmatmul.bf16.gmra.mxu0 %v1253
        %v1503 = vpop.f32.mrf.mxu0
        %v1504 = vadd.f32 %v1167, %v1503
        %v1505 = vpop.f32.mrf.mxu0
        %1506 = vdwg.mxu0
        %v1507 = vmul.f32 %v1315, 1.442695
        %v1508 = vpow.pop %v1507
        %v1509 = vmul.f32 %v1378, 1.442695
        %v1510 = vpow.pop %v1509
        %v1511 = vmul.f32 %v1441, 1.442695
        %v1512 = vpow.pop %v1511
        %v1513 = vmul.f32 %v1504, 1.442695
        %v1514 = vpow.pop %v1513
        %v1515 = vxor.u32 %v1315, 2147483648
        %v1516 = vxor.u32 %v1378, 2147483648
        %v1517 = vxor.u32 %v1441, 2147483648
        %v1518 = vxor.u32 %v1504, 2147483648
        %v1519 = vmul.f32 %v1515, 1.442695
        %v1520 = vpow.pop %v1519
        %v1521 = vmul.f32 %v1516, 1.442695
        %v1522 = vpow.pop %v1521
        %v1523 = vmul.f32 %v1517, 1.442695
        %v1524 = vpow.pop %v1523
        %v1525 = vmul.f32 %v1518, 1.442695
        %v1526 = vpow.pop %v1525
        %v1527 = vadd.f32 %v1520, 1.0
        %v1528 = vadd.f32 %v1522, 1.0
        %v1529 = vadd.f32 %v1524, 1.0
        %v1530 = vadd.f32 %v1526, 1.0
        %v1531 = vrcp.pop %v1527
        %v1532 = vmul.f32 %v1527, %v1531
        %v1533 = vsub.f32 1.0, %v1532
        %v1534 = vmul.f32 %v1531, %v1533
        %v1535 = vadd.f32 %v1531, %v1534
        %vm1536 = vweird.f32 %v1527
        %vm1537 = vweird.f32 %v1531
        %vm1538 = vmor %vm1536, %vm1537
        %v1539 = vsel %vm1538, %v1531, %v1535
        %v1540 = vand.u32 2147483647, %v1527
        %vm1541 = vcmp.eq.f32.partialorder %v1540, 8.507059e+37
        %v1542 = vand.u32 %v1527, 2147483648
        %v1543 = vor.u32 1.1754944e-38, %v1542
        %v1544 = vsel %vm1541, %v1543, %v1539
        %v1545 = vmul.f32 1.0, %v1544
        %v1546 = vrcp.pop %v1528
        %v1547 = vmul.f32 %v1528, %v1546
        %v1548 = vsub.f32 1.0, %v1547
        %v1549 = vmul.f32 %v1546, %v1548
        %v1550 = vadd.f32 %v1546, %v1549
        %vm1551 = vweird.f32 %v1528
        %vm1552 = vweird.f32 %v1546
        %vm1553 = vmor %vm1551, %vm1552
        %v1554 = vsel %vm1553, %v1546, %v1550
        %v1555 = vand.u32 2147483647, %v1528
        %vm1556 = vcmp.eq.f32.partialorder %v1555, 8.507059e+37
        %v1557 = vand.u32 %v1528, 2147483648
        %v1558 = vor.u32 1.1754944e-38, %v1557
        %v1559 = vsel %vm1556, %v1558, %v1554
        %v1560 = vmul.f32 1.0, %v1559
        %v1561 = vrcp.pop %v1529
        %v1562 = vmul.f32 %v1529, %v1561
        %v1563 = vsub.f32 1.0, %v1562
        %v1564 = vmul.f32 %v1561, %v1563
        %v1565 = vadd.f32 %v1561, %v1564
        %vm1566 = vweird.f32 %v1529
        %vm1567 = vweird.f32 %v1561
        %vm1568 = vmor %vm1566, %vm1567
        %v1569 = vsel %vm1568, %v1561, %v1565
        %v1570 = vand.u32 2147483647, %v1529
        %vm1571 = vcmp.eq.f32.partialorder %v1570, 8.507059e+37
        %v1572 = vand.u32 %v1529, 2147483648
        %v1573 = vor.u32 1.1754944e-38, %v1572
        %v1574 = vsel %vm1571, %v1573, %v1569
        %v1575 = vmul.f32 1.0, %v1574
        %v1576 = vrcp.pop %v1530
        %v1577 = vmul.f32 %v1530, %v1576
        %v1578 = vsub.f32 1.0, %v1577
        %v1579 = vmul.f32 %v1576, %v1578
        %v1580 = vadd.f32 %v1576, %v1579
        %vm1581 = vweird.f32 %v1530
        %vm1582 = vweird.f32 %v1576
        %vm1583 = vmor %vm1581, %vm1582
        %v1584 = vsel %vm1583, %v1576, %v1580
        %v1585 = vand.u32 2147483647, %v1530
        %vm1586 = vcmp.eq.f32.partialorder %v1585, 8.507059e+37
        %v1587 = vand.u32 %v1530, 2147483648
        %v1588 = vor.u32 1.1754944e-38, %v1587
        %v1589 = vsel %vm1586, %v1588, %v1584
        %v1590 = vmul.f32 1.0, %v1589
        %v1591 = vperm.slane %v1508, 0
        %v1592 = vperm.slane %v1510, 0
        %v1593 = vperm.slane %v1512, 0
        %v1594 = vperm.slane %v1514, 0
        %v1595 = vmul.f32 %v1545, %v1591
        %v1596 = vmul.f32 %v1560, %v1592
        %v1597 = vmul.f32 %v1575, %v1593
        %v1598 = vmul.f32 %v1590, %v1594
        %v1599 = vld [vmem:[%s305] sm:$0x77]
        %v1600 = vld [vmem:[%s305 + $0x8] sm:$0x77]
        %v1601 = vld [vmem:[%s3] sm:$0x7]
        %1603 = vset.pattern.permute.xlu0 0
        %1604 = vperm.xlu0 %1603, %v1601
        %v1605 = vpop.permute.xlu0 %1604
        %v1607 = vunpack.c.l.s4 839922192
        %v1608 = vunpack.c.0.s8 %v1607
        %v1609 = vperm.slane %v1605, %v1608
        %v1611 = vsub.f32 %v1599, %v1609
        %v1612 = vsub.f32 %v1600, %v1609
        %v1613 = vmul.f32 %v1611, %v1611
        %v1614 = vmul.f32 %v1612, %v1612
        %1617 = vst [vmem:[#allocation1] ss:$2 sm:$0xff] %v1613
        %s1618 = scalar_lea.vmem [#allocation1], 16
        %1619 = vst [vmem:[%s1618] ss:$2 sm:$0xff] %v1614
        %v1620 = vld.sshfl [vmem:[#allocation1] sm:$0xff pattern:$0x75316420]
        %v1621 = vld.sshfl [vmem:[#allocation1 + $0x8] sm:$0xff pattern:$0x75316420]
        %v1622 = vld.sshfl [vmem:[#allocation1 + $0x10] sm:$0xff pattern:$0x75316420]
        %v1623 = vld.sshfl [vmem:[#allocation1 + $0x18] sm:$0xff pattern:$0x75316420]
        %vm1628 = vcmask 1042432
        %v1629 = vsel %vm1628, %v1620, 0.0
        %v1630 = vrot.slane %v1629, 4
        %v1631 = vadd.f32 %v1629, %v1630
        %v1632 = vrot.slane %v1631, 2
        %v1633 = vadd.f32 %v1631, %v1632
        %v1634 = vrot.slane %v1633, 1
        %v1635 = vadd.f32 %v1633, %v1634
        %v1636 = vsel %vm1628, %v1621, 0.0
        %v1637 = vrot.slane %v1636, 4
        %v1638 = vadd.f32 %v1636, %v1637
        %v1639 = vrot.slane %v1638, 2
        %v1640 = vadd.f32 %v1638, %v1639
        %v1641 = vrot.slane %v1640, 1
        %v1642 = vadd.f32 %v1640, %v1641
        %v1643 = vsel %vm1628, %v1622, 0.0
        %v1644 = vrot.slane %v1643, 4
        %v1645 = vadd.f32 %v1643, %v1644
        %v1646 = vrot.slane %v1645, 2
        %v1647 = vadd.f32 %v1645, %v1646
        %v1648 = vrot.slane %v1647, 1
        %v1649 = vadd.f32 %v1647, %v1648
        %v1650 = vsel %vm1628, %v1623, 0.0
        %v1651 = vrot.slane %v1650, 4
        %v1652 = vadd.f32 %v1650, %v1651
        %v1653 = vrot.slane %v1652, 2
        %v1654 = vadd.f32 %v1652, %v1653
        %v1655 = vrot.slane %v1654, 1
        %v1656 = vadd.f32 %v1654, %v1655
        %v1657 = vmax.f32 %v1635, 1e-24
        %v1658 = vmax.f32 %v1642, 1e-24
        %v1659 = vmax.f32 %v1649, 1e-24
        %v1660 = vmax.f32 %v1656, 1e-24
        %v1661 = vrsqrt.pop %v1657
        %v1662 = vmul.f32 %v1661, %v1657
        %v1663 = vmul.f32 %v1662, %v1661
        %v1664 = vmul.f32 0.5, %v1663
        %v1665 = vsub.f32 1.5, %v1664
        %v1666 = vmul.f32 %v1661, %v1665
        %vm1667 = vweird.f32 %v1657
        %vm1668 = vweird.f32 %v1661
        %vm1669 = vmor %vm1667, %vm1668
        %v1670 = vsel %vm1669, %v1661, %v1666
        %v1671 = vrsqrt.pop %v1658
        %v1672 = vmul.f32 %v1671, %v1658
        %v1673 = vmul.f32 %v1672, %v1671
        %v1674 = vmul.f32 0.5, %v1673
        %v1675 = vsub.f32 1.5, %v1674
        %v1676 = vmul.f32 %v1671, %v1675
        %vm1677 = vweird.f32 %v1658
        %vm1678 = vweird.f32 %v1671
        %vm1679 = vmor %vm1677, %vm1678
        %v1680 = vsel %vm1679, %v1671, %v1676
        %v1681 = vrsqrt.pop %v1659
        %v1682 = vmul.f32 %v1681, %v1659
        %v1683 = vmul.f32 %v1682, %v1681
        %v1684 = vmul.f32 0.5, %v1683
        %v1685 = vsub.f32 1.5, %v1684
        %v1686 = vmul.f32 %v1681, %v1685
        %vm1687 = vweird.f32 %v1659
        %vm1688 = vweird.f32 %v1681
        %vm1689 = vmor %vm1687, %vm1688
        %v1690 = vsel %vm1689, %v1681, %v1686
        %v1691 = vrsqrt.pop %v1660
        %v1692 = vmul.f32 %v1691, %v1660
        %v1693 = vmul.f32 %v1692, %v1691
        %v1694 = vmul.f32 0.5, %v1693
        %v1695 = vsub.f32 1.5, %v1694
        %v1696 = vmul.f32 %v1691, %v1695
        %vm1697 = vweird.f32 %v1660
        %vm1698 = vweird.f32 %v1691
        %vm1699 = vmor %vm1697, %vm1698
        %v1700 = vsel %vm1699, %v1691, %v1696
        %v1705 = vrot.slane %v1680, 4
        %v1706 = vrot.slane %v1700, 4
        %vm1707 = vcmask 1043456
        %v1708 = vsel %vm1707, %v1670, %v1705
        %v1709 = vsel %vm1707, %v1690, %v1706
        %v1712 = vmul.f32 %v1611, %v1708
        %v1713 = vmul.f32 %v1612, %v1709
        %v1714 = vmul.f32 %v1712, %v1712
        %v1715 = vmul.f32 %v1713, %v1713
        %v1718 = vrot.slane %v1714, 5
        %v1719 = vrot.slane %v1718, 4
        %v1720 = vrot.slane %v1715, 5
        %v1721 = vrot.slane %v1720, 4
        %v1724 = vsub.f32 %v1714, %v1719
        %v1725 = vsub.f32 %v1715, %v1721
        %v1728 = vrot.slane %v1712, 5
        %v1729 = vrot.slane %v1728, 4
        %v1730 = vrot.slane %v1713, 5
        %v1731 = vrot.slane %v1730, 4
        %v1734 = vmul.f32 %v1712, %v1729
        %v1735 = vmul.f32 %v1713, %v1731
        %v1736 = vadd.f32 %v1734, %v1734
        %v1737 = vadd.f32 %v1735, %v1735
        %v1738 = vmul.f32 %v1712, %v1724
        %v1739 = vmul.f32 %v1713, %v1725
        %v1742 = vrot.slane %v1736, 7
        %v1743 = vrot.slane %v1737, 7
        %v1746 = vmul.f32 %v1712, %v1742
        %v1747 = vmul.f32 %v1713, %v1743
        %v1750 = vrot.slane %v1746, 5
        %v1751 = vrot.slane %v1750, 4
        %v1752 = vrot.slane %v1747, 5
        %v1753 = vrot.slane %v1752, 4
        %v1756 = vsub.f32 %v1738, %v1751
        %v1757 = vsub.f32 %v1739, %v1753
        %v1758 = vmul.f32 %v1712, %v1736
        %v1759 = vmul.f32 %v1713, %v1737
        %v1762 = vrot.slane %v1724, 7
        %v1763 = vrot.slane %v1725, 7
        %v1766 = vmul.f32 %v1712, %v1762
        %v1767 = vmul.f32 %v1713, %v1763
        %v1770 = vrot.slane %v1766, 5
        %v1771 = vrot.slane %v1770, 4
        %v1772 = vrot.slane %v1767, 5
        %v1773 = vrot.slane %v1772, 4
        %v1776 = vadd.f32 %v1758, %v1771
        %v1777 = vadd.f32 %v1759, %v1773
        %v1778 = vmul.f32 %v1712, %v1756
        %v1779 = vmul.f32 %v1713, %v1757
        %v1782 = vrot.slane %v1776, 7
        %v1783 = vrot.slane %v1777, 7
        %v1786 = vmul.f32 %v1712, %v1782
        %v1787 = vmul.f32 %v1713, %v1783
        %v1790 = vrot.slane %v1786, 5
        %v1791 = vrot.slane %v1790, 4
        %v1792 = vrot.slane %v1787, 5
        %v1793 = vrot.slane %v1792, 4
        %v1796 = vsub.f32 %v1778, %v1791
        %v1797 = vsub.f32 %v1779, %v1793
        %v1798 = vmul.f32 %v1712, %v1776
        %v1799 = vmul.f32 %v1713, %v1777
        %v1802 = vrot.slane %v1756, 7
        %v1803 = vrot.slane %v1757, 7
        %v1806 = vmul.f32 %v1712, %v1802
        %v1807 = vmul.f32 %v1713, %v1803
        %v1810 = vrot.slane %v1806, 5
        %v1811 = vrot.slane %v1810, 4
        %v1812 = vrot.slane %v1807, 5
        %v1813 = vrot.slane %v1812, 4
        %v1816 = vadd.f32 %v1798, %v1811
        %v1817 = vadd.f32 %v1799, %v1813
        %v1818 = vmul.f32 %v1712, %v1796
        %v1819 = vmul.f32 %v1713, %v1797
        %v1822 = vrot.slane %v1816, 7
        %v1823 = vrot.slane %v1817, 7
        %v1826 = vmul.f32 %v1712, %v1822
        %v1827 = vmul.f32 %v1713, %v1823
        %v1830 = vrot.slane %v1826, 5
        %v1831 = vrot.slane %v1830, 4
        %v1832 = vrot.slane %v1827, 5
        %v1833 = vrot.slane %v1832, 4
        %v1836 = vsub.f32 %v1818, %v1831
        %v1837 = vsub.f32 %v1819, %v1833
        %v1838 = vmul.f32 %v1712, %v1816
        %v1839 = vmul.f32 %v1713, %v1817
        %v1842 = vrot.slane %v1796, 7
        %v1843 = vrot.slane %v1797, 7
        %v1846 = vmul.f32 %v1712, %v1842
        %v1847 = vmul.f32 %v1713, %v1843
        %v1850 = vrot.slane %v1846, 5
        %v1851 = vrot.slane %v1850, 4
        %v1852 = vrot.slane %v1847, 5
        %v1853 = vrot.slane %v1852, 4
        %v1856 = vadd.f32 %v1838, %v1851
        %v1857 = vadd.f32 %v1839, %v1853
        %v1858 = vmul.f32 %v1712, 1.5
        %v1859 = vmul.f32 %v1713, 1.5
        %v1860 = vmul.f32 %v1858, %v1712
        %v1861 = vmul.f32 %v1859, %v1713
        %v1862 = vsub.f32 %v1860, 0.5
        %v1863 = vsub.f32 %v1861, 0.5
        %v1864 = vmul.f32 %v1712, 1.6666666
        %v1865 = vmul.f32 %v1713, 1.6666666
        %v1866 = vmul.f32 %v1864, %v1862
        %v1867 = vmul.f32 %v1865, %v1863
        %v1868 = vmul.f32 %v1712, 0.6666667
        %v1869 = vmul.f32 %v1713, 0.6666667
        %v1870 = vsub.f32 %v1866, %v1868
        %v1871 = vsub.f32 %v1867, %v1869
        %v1872 = vmul.f32 %v1712, 1.75
        %v1873 = vmul.f32 %v1713, 1.75
        %v1874 = vmul.f32 %v1872, %v1870
        %v1875 = vmul.f32 %v1873, %v1871
        %v1876 = vmul.f32 %v1862, 0.75
        %v1877 = vmul.f32 %v1863, 0.75
        %v1878 = vsub.f32 %v1874, %v1876
        %v1879 = vsub.f32 %v1875, %v1877
        %v1880 = vmul.f32 %v1712, 1.8
        %v1881 = vmul.f32 %v1713, 1.8
        %v1882 = vmul.f32 %v1880, %v1878
        %v1883 = vmul.f32 %v1881, %v1879
        %v1884 = vmul.f32 %v1870, 0.8
        %v1885 = vmul.f32 %v1871, 0.8
        %v1886 = vsub.f32 %v1882, %v1884
        %v1887 = vsub.f32 %v1883, %v1885
        %v1888 = vmul.f32 %v1712, 3.0
        %v1889 = vmul.f32 %v1713, 3.0
        %v1890 = vmul.f32 %v1712, 2.5
        %v1891 = vmul.f32 %v1713, 2.5
        %v1892 = vmul.f32 %v1890, %v1888
        %v1893 = vmul.f32 %v1891, %v1889
        %v1894 = vsub.f32 %v1892, 1.5
        %v1895 = vsub.f32 %v1893, 1.5
        %v1896 = vmul.f32 %v1712, 2.3333333
        %v1897 = vmul.f32 %v1713, 2.3333333
        %v1898 = vmul.f32 %v1896, %v1894
        %v1899 = vmul.f32 %v1897, %v1895
        %v1900 = vmul.f32 %v1888, 1.3333334
        %v1901 = vmul.f32 %v1889, 1.3333334
        %v1902 = vsub.f32 %v1898, %v1900
        %v1903 = vsub.f32 %v1899, %v1901
        %v1904 = vmul.f32 %v1712, 2.25
        %v1905 = vmul.f32 %v1713, 2.25
        %v1906 = vmul.f32 %v1904, %v1902
        %v1907 = vmul.f32 %v1905, %v1903
        %v1908 = vmul.f32 %v1894, 1.25
        %v1909 = vmul.f32 %v1895, 1.25
        %v1910 = vsub.f32 %v1906, %v1908
        %v1911 = vsub.f32 %v1907, %v1909
        %v1912 = vmul.f32 %v1712, 5.0
        %v1913 = vmul.f32 %v1713, 5.0
        %v1914 = vmul.f32 %v1712, 3.5
        %v1915 = vmul.f32 %v1713, 3.5
        %v1916 = vmul.f32 %v1914, %v1912
        %v1917 = vmul.f32 %v1915, %v1913
        %v1918 = vsub.f32 %v1916, 2.5
        %v1919 = vsub.f32 %v1917, 2.5
        %v1920 = vmul.f32 %v1888, %v1918
        %v1921 = vmul.f32 %v1889, %v1919
        %v1922 = vmul.f32 %v1912, 2.0
        %v1923 = vmul.f32 %v1913, 2.0
        %v1924 = vsub.f32 %v1920, %v1922
        %v1925 = vsub.f32 %v1921, %v1923
        %v1926 = vmul.f32 %v1712, 7.0
        %v1927 = vmul.f32 %v1713, 7.0
        %v1928 = vmul.f32 %v1712, 4.5
        %v1929 = vmul.f32 %v1713, 4.5
        %v1930 = vmul.f32 %v1928, %v1926
        %v1931 = vmul.f32 %v1929, %v1927
        %v1932 = vsub.f32 %v1930, 3.5
        %v1933 = vsub.f32 %v1931, 3.5
        %v1934 = vmul.f32 %v1712, 9.0
        %v1935 = vmul.f32 %v1713, 9.0
        %v1936 = vrot.slane %v1712, 7
        %v1937 = vrot.slane %v1713, 7
        %v1940 = vmul.f32 %v1888, %v1936
        %v1941 = vmul.f32 %v1889, %v1937
        %v1942 = vrot.slane %v1712, 6
        %v1943 = vrot.slane %v1713, 6
        %v1946 = vmul.f32 %v1888, %v1942
        %v1947 = vmul.f32 %v1889, %v1943
        %v1948 = vrot.slane %v1736, 6
        %v1949 = vrot.slane %v1737, 6
        %v1952 = vmul.f32 %v1912, %v1948
        %v1953 = vmul.f32 %v1913, %v1949
        %v1954 = vmul.f32 %v1894, %v1936
        %v1955 = vmul.f32 %v1895, %v1937
        %v1956 = vmul.f32 %v1894, %v1942
        %v1957 = vmul.f32 %v1895, %v1943
        %v1958 = vrot.slane %v1724, 6
        %v1959 = vrot.slane %v1725, 6
        %v1962 = vmul.f32 %v1912, %v1958
        %v1963 = vmul.f32 %v1913, %v1959
        %v1964 = vrot.slane %v1776, 6
        %v1965 = vrot.slane %v1777, 6
        %v1968 = vmul.f32 %v1926, %v1964
        %v1969 = vmul.f32 %v1927, %v1965
        %v1970 = vmul.f32 %v1918, %v1948
        %v1971 = vmul.f32 %v1919, %v1949
        %v1972 = vmul.f32 %v1902, %v1936
        %v1973 = vmul.f32 %v1903, %v1937
        %v1974 = vmul.f32 %v1902, %v1942
        %v1975 = vmul.f32 %v1903, %v1943
        %v1976 = vmul.f32 %v1918, %v1958
        %v1977 = vmul.f32 %v1919, %v1959
        %v1978 = vrot.slane %v1756, 6
        %v1979 = vrot.slane %v1757, 6
        %v1982 = vmul.f32 %v1926, %v1978
        %v1983 = vmul.f32 %v1927, %v1979
        %v1984 = vrot.slane %v1816, 6
        %v1985 = vrot.slane %v1817, 6
        %v1988 = vmul.f32 %v1934, %v1984
        %v1989 = vmul.f32 %v1935, %v1985
        %v1990 = vmul.f32 %v1932, %v1964
        %v1991 = vmul.f32 %v1933, %v1965
        %v1992 = vmul.f32 %v1924, %v1948
        %v1993 = vmul.f32 %v1925, %v1949
        %v1994 = vmul.f32 %v1910, %v1936
        %v1995 = vmul.f32 %v1911, %v1937
        %v1996 = vmul.f32 %v1910, %v1942
        %v1997 = vmul.f32 %v1911, %v1943
        %v1998 = vmul.f32 %v1924, %v1958
        %v1999 = vmul.f32 %v1925, %v1959
        %v2000 = vmul.f32 %v1932, %v1978
        %v2001 = vmul.f32 %v1933, %v1979
        %v2002 = vrot.slane %v1796, 6
        %v2003 = vrot.slane %v1797, 6
        %v2006 = vmul.f32 %v1934, %v2002
        %v2007 = vmul.f32 %v1935, %v2003
        %v2008 = vperm.slane %v1712, 1
        %v2009 = vperm.slane %v1712, 5
        %v2010 = vperm.slane %v1713, 1
        %v2011 = vperm.slane %v1713, 5
        %v2016 = vperm.slane %v1712, 2
        %v2017 = vperm.slane %v1712, 6
        %v2018 = vperm.slane %v1713, 2
        %v2019 = vperm.slane %v1713, 6
        %v2024 = vperm.slane %v1712, 0
        %v2025 = vperm.slane %v1712, 4
        %v2026 = vperm.slane %v1713, 0
        %v2027 = vperm.slane %v1713, 4
        %v2032 = vperm.slane %v1736, 0
        %v2033 = vperm.slane %v1736, 4
        %v2034 = vperm.slane %v1737, 0
        %v2035 = vperm.slane %v1737, 4
        %v2042 = vperm.slane %v1940, 2
        %v2043 = vperm.slane %v1940, 6
        %v2044 = vperm.slane %v1941, 2
        %v2045 = vperm.slane %v1941, 6
        %v2052 = vperm.slane %v1862, 2
        %v2053 = vperm.slane %v1862, 6
        %v2054 = vperm.slane %v1863, 2
        %v2055 = vperm.slane %v1863, 6
        %v2062 = vperm.slane %v1946, 2
        %v2063 = vperm.slane %v1946, 6
        %v2064 = vperm.slane %v1947, 2
        %v2065 = vperm.slane %v1947, 6
        %vm2070 = vcmask 1040384
        %v2071 = vsel %vm2070, 1.0, %v2008
        %v2072 = vsel %vm2070, 1.0, %v2009
        %v2073 = vsel %vm2070, 1.0, %v2010
        %v2074 = vsel %vm2070, 1.0, %v2011
        %vm2075 = vcmask 1041408
        %v2076 = vsel %vm2075, %v2071, %v2016
        %v2077 = vsel %vm2075, %v2072, %v2017
        %v2078 = vsel %vm2075, %v2073, %v2018
        %v2079 = vsel %vm2075, %v2074, %v2019
        %v2080 = vsel %vm1628, %v2076, %v2024
        %v2081 = vsel %vm1628, %v2077, %v2025
        %v2082 = vsel %vm1628, %v2078, %v2026
        %v2083 = vsel %vm1628, %v2079, %v2027
        %v2084 = vsel %vm1707, %v2080, %v2032
        %v2085 = vsel %vm1707, %v2081, %v2033
        %v2086 = vsel %vm1707, %v2082, %v2034
        %v2087 = vsel %vm1707, %v2083, %v2035
        %vm2088 = vcmask 1044480
        %v2089 = vsel %vm2088, %v2084, %v2042
        %v2090 = vsel %vm2088, %v2085, %v2043
        %v2091 = vsel %vm2088, %v2086, %v2044
        %v2092 = vsel %vm2088, %v2087, %v2045
        %vm2093 = vcmask 1045504
        %v2094 = vsel %vm2093, %v2089, %v2052
        %v2095 = vsel %vm2093, %v2090, %v2053
        %v2096 = vsel %vm2093, %v2091, %v2054
        %v2097 = vsel %vm2093, %v2092, %v2055
        %vm2098 = vcmask 1046528
        %v2099 = vsel %vm2098, %v2094, %v2062
        %v2100 = vsel %vm2098, %v2095, %v2063
        %v2101 = vsel %vm2098, %v2096, %v2064
        %v2102 = vsel %vm2098, %v2097, %v2065
        %v2103 = vmul.f32 %v1265, %v2099
        %v2104 = vmul.f32 %v1328, %v2100
        %v2105 = vmul.f32 %v1391, %v2101
        %v2106 = vmul.f32 %v1454, %v2102
        %v2107 = vmul.f32 %v1277, %v2099
        %v2108 = vmul.f32 %v1340, %v2100
        %v2109 = vmul.f32 %v1403, %v2101
        %v2110 = vmul.f32 %v1466, %v2102
        %v2111 = vmul.f32 %v1290, %v2099
        %v2112 = vmul.f32 %v1353, %v2100
        %v2113 = vmul.f32 %v1416, %v2101
        %v2114 = vmul.f32 %v1479, %v2102
        %v2115 = vmul.f32 %v1302, %v2099
        %v2116 = vmul.f32 %v1365, %v2100
        %v2117 = vmul.f32 %v1428, %v2101
        %v2118 = vmul.f32 %v1491, %v2102
        %v2119 = vperm.slane %v1724, 0
        %v2120 = vperm.slane %v1724, 4
        %v2121 = vperm.slane %v1725, 0
        %v2122 = vperm.slane %v1725, 4
        %v2127 = vperm.slane %v1776, 0
        %v2128 = vperm.slane %v1776, 4
        %v2129 = vperm.slane %v1777, 0
        %v2130 = vperm.slane %v1777, 4
        %v2137 = vperm.slane %v1952, 2
        %v2138 = vperm.slane %v1952, 6
        %v2139 = vperm.slane %v1953, 2
        %v2140 = vperm.slane %v1953, 6
        %v2147 = vperm.slane %v1954, 2
        %v2148 = vperm.slane %v1954, 6
        %v2149 = vperm.slane %v1955, 2
        %v2150 = vperm.slane %v1955, 6
        %v2157 = vperm.slane %v1870, 2
        %v2158 = vperm.slane %v1870, 6
        %v2159 = vperm.slane %v1871, 2
        %v2160 = vperm.slane %v1871, 6
        %v2167 = vperm.slane %v1956, 2
        %v2168 = vperm.slane %v1956, 6
        %v2169 = vperm.slane %v1957, 2
        %v2170 = vperm.slane %v1957, 6
        %v2177 = vperm.slane %v1962, 2
        %v2178 = vperm.slane %v1962, 6
        %v2179 = vperm.slane %v1963, 2
        %v2180 = vperm.slane %v1963, 6
        %v2185 = vperm.slane %v1756, 0
        %v2186 = vperm.slane %v1756, 4
        %v2187 = vperm.slane %v1757, 0
        %v2188 = vperm.slane %v1757, 4
        %v2193 = vsel %vm2070, %v2119, %v2127
        %v2194 = vsel %vm2070, %v2120, %v2128
        %v2195 = vsel %vm2070, %v2121, %v2129
        %v2196 = vsel %vm2070, %v2122, %v2130
        %v2197 = vsel %vm2075, %v2193, %v2137
        %v2198 = vsel %vm2075, %v2194, %v2138
        %v2199 = vsel %vm2075, %v2195, %v2139
        %v2200 = vsel %vm2075, %v2196, %v2140
        %v2201 = vsel %vm1628, %v2197, %v2147
        %v2202 = vsel %vm1628, %v2198, %v2148
        %v2203 = vsel %vm1628, %v2199, %v2149
        %v2204 = vsel %vm1628, %v2200, %v2150
        %v2205 = vsel %vm1707, %v2201, %v2157
        %v2206 = vsel %vm1707, %v2202, %v2158
        %v2207 = vsel %vm1707, %v2203, %v2159
        %v2208 = vsel %vm1707, %v2204, %v2160
        %v2209 = vsel %vm2088, %v2205, %v2167
        %v2210 = vsel %vm2088, %v2206, %v2168
        %v2211 = vsel %vm2088, %v2207, %v2169
        %v2212 = vsel %vm2088, %v2208, %v2170
        %v2213 = vsel %vm2093, %v2209, %v2177
        %v2214 = vsel %vm2093, %v2210, %v2178
        %v2215 = vsel %vm2093, %v2211, %v2179
        %v2216 = vsel %vm2093, %v2212, %v2180
        %v2217 = vsel %vm2098, %v2213, %v2185
        %v2218 = vsel %vm2098, %v2214, %v2186
        %v2219 = vsel %vm2098, %v2215, %v2187
        %v2220 = vsel %vm2098, %v2216, %v2188
        %v2221 = vmul.f32 %v1267, %v2217
        %v2222 = vmul.f32 %v1330, %v2218
        %v2223 = vmul.f32 %v1393, %v2219
        %v2224 = vmul.f32 %v1456, %v2220
        %v2225 = vadd.f32 %v2103, %v2221
        %v2226 = vadd.f32 %v2104, %v2222
        %v2227 = vadd.f32 %v2105, %v2223
        %v2228 = vadd.f32 %v2106, %v2224
        %v2229 = vmul.f32 %v1280, %v2217
        %v2230 = vmul.f32 %v1343, %v2218
        %v2231 = vmul.f32 %v1406, %v2219
        %v2232 = vmul.f32 %v1469, %v2220
        %v2233 = vadd.f32 %v2107, %v2229
        %v2234 = vadd.f32 %v2108, %v2230
        %v2235 = vadd.f32 %v2109, %v2231
        %v2236 = vadd.f32 %v2110, %v2232
        %v2237 = vmul.f32 %v1292, %v2217
        %v2238 = vmul.f32 %v1355, %v2218
        %v2239 = vmul.f32 %v1418, %v2219
        %v2240 = vmul.f32 %v1481, %v2220
        %v2241 = vadd.f32 %v2111, %v2237
        %v2242 = vadd.f32 %v2112, %v2238
        %v2243 = vadd.f32 %v2113, %v2239
        %v2244 = vadd.f32 %v2114, %v2240
        %v2245 = vmul.f32 %v1305, %v2217
        %v2246 = vmul.f32 %v1368, %v2218
        %v2247 = vmul.f32 %v1431, %v2219
        %v2248 = vmul.f32 %v1494, %v2220
        %v2249 = vadd.f32 %v2115, %v2245
        %v2250 = vadd.f32 %v2116, %v2246
        %v2251 = vadd.f32 %v2117, %v2247
        %v2252 = vadd.f32 %v2118, %v2248
        %v2253 = vperm.slane %v1816, 0
        %v2254 = vperm.slane %v1816, 4
        %v2255 = vperm.slane %v1817, 0
        %v2256 = vperm.slane %v1817, 4
        %v2263 = vperm.slane %v1968, 2
        %v2264 = vperm.slane %v1968, 6
        %v2265 = vperm.slane %v1969, 2
        %v2266 = vperm.slane %v1969, 6
        %v2273 = vperm.slane %v1970, 2
        %v2274 = vperm.slane %v1970, 6
        %v2275 = vperm.slane %v1971, 2
        %v2276 = vperm.slane %v1971, 6
        %v2283 = vperm.slane %v1972, 2
        %v2284 = vperm.slane %v1972, 6
        %v2285 = vperm.slane %v1973, 2
        %v2286 = vperm.slane %v1973, 6
        %v2293 = vperm.slane %v1878, 2
        %v2294 = vperm.slane %v1878, 6
        %v2295 = vperm.slane %v1879, 2
        %v2296 = vperm.slane %v1879, 6
        %v2303 = vperm.slane %v1974, 2
        %v2304 = vperm.slane %v1974, 6
        %v2305 = vperm.slane %v1975, 2
        %v2306 = vperm.slane %v1975, 6
        %v2313 = vperm.slane %v1976, 2
        %v2314 = vperm.slane %v1976, 6
        %v2315 = vperm.slane %v1977, 2
        %v2316 = vperm.slane %v1977, 6
        %v2323 = vperm.slane %v1982, 2
        %v2324 = vperm.slane %v1982, 6
        %v2325 = vperm.slane %v1983, 2
        %v2326 = vperm.slane %v1983, 6
        %v2331 = vsel %vm2070, %v2253, %v2263
        %v2332 = vsel %vm2070, %v2254, %v2264
        %v2333 = vsel %vm2070, %v2255, %v2265
        %v2334 = vsel %vm2070, %v2256, %v2266
        %v2335 = vsel %vm2075, %v2331, %v2273
        %v2336 = vsel %vm2075, %v2332, %v2274
        %v2337 = vsel %vm2075, %v2333, %v2275
        %v2338 = vsel %vm2075, %v2334, %v2276
        %v2339 = vsel %vm1628, %v2335, %v2283
        %v2340 = vsel %vm1628, %v2336, %v2284
        %v2341 = vsel %vm1628, %v2337, %v2285
        %v2342 = vsel %vm1628, %v2338, %v2286
        %v2343 = vsel %vm1707, %v2339, %v2293
        %v2344 = vsel %vm1707, %v2340, %v2294
        %v2345 = vsel %vm1707, %v2341, %v2295
        %v2346 = vsel %vm1707, %v2342, %v2296
        %v2347 = vsel %vm2088, %v2343, %v2303
        %v2348 = vsel %vm2088, %v2344, %v2304
        %v2349 = vsel %vm2088, %v2345, %v2305
        %v2350 = vsel %vm2088, %v2346, %v2306
        %v2351 = vsel %vm2093, %v2347, %v2313
        %v2352 = vsel %vm2093, %v2348, %v2314
        %v2353 = vsel %vm2093, %v2349, %v2315
        %v2354 = vsel %vm2093, %v2350, %v2316
        %v2355 = vsel %vm2098, %v2351, %v2323
        %v2356 = vsel %vm2098, %v2352, %v2324
        %v2357 = vsel %vm2098, %v2353, %v2325
        %v2358 = vsel %vm2098, %v2354, %v2326
        %v2359 = vmul.f32 %v1270, %v2355
        %v2360 = vmul.f32 %v1333, %v2356
        %v2361 = vmul.f32 %v1396, %v2357
        %v2362 = vmul.f32 %v1459, %v2358
        %v2363 = vadd.f32 %v2225, %v2359
        %v2364 = vadd.f32 %v2226, %v2360
        %v2365 = vadd.f32 %v2227, %v2361
        %v2366 = vadd.f32 %v2228, %v2362
        %v2367 = vmul.f32 %v1282, %v2355
        %v2368 = vmul.f32 %v1345, %v2356
        %v2369 = vmul.f32 %v1408, %v2357
        %v2370 = vmul.f32 %v1471, %v2358
        %v2371 = vadd.f32 %v2233, %v2367
        %v2372 = vadd.f32 %v2234, %v2368
        %v2373 = vadd.f32 %v2235, %v2369
        %v2374 = vadd.f32 %v2236, %v2370
        %v2375 = vmul.f32 %v1295, %v2355
        %v2376 = vmul.f32 %v1358, %v2356
        %v2377 = vmul.f32 %v1421, %v2357
        %v2378 = vmul.f32 %v1484, %v2358
        %v2379 = vadd.f32 %v2241, %v2375
        %v2380 = vadd.f32 %v2242, %v2376
        %v2381 = vadd.f32 %v2243, %v2377
        %v2382 = vadd.f32 %v2244, %v2378
        %v2383 = vmul.f32 %v1307, %v2355
        %v2384 = vmul.f32 %v1370, %v2356
        %v2385 = vmul.f32 %v1433, %v2357
        %v2386 = vmul.f32 %v1496, %v2358
        %v2387 = vadd.f32 %v2249, %v2383
        %v2388 = vadd.f32 %v2250, %v2384
        %v2389 = vadd.f32 %v2251, %v2385
        %v2390 = vadd.f32 %v2252, %v2386
        %v2391 = vperm.slane %v1796, 0
        %v2392 = vperm.slane %v1796, 4
        %v2393 = vperm.slane %v1797, 0
        %v2394 = vperm.slane %v1797, 4
        %v2401 = vperm.slane %v1856, 0
        %v2402 = vperm.slane %v1856, 4
        %v2403 = vperm.slane %v1857, 0
        %v2404 = vperm.slane %v1857, 4
        %v2411 = vperm.slane %v1988, 2
        %v2412 = vperm.slane %v1988, 6
        %v2413 = vperm.slane %v1989, 2
        %v2414 = vperm.slane %v1989, 6
        %v2421 = vperm.slane %v1990, 2
        %v2422 = vperm.slane %v1990, 6
        %v2423 = vperm.slane %v1991, 2
        %v2424 = vperm.slane %v1991, 6
        %v2431 = vperm.slane %v1992, 2
        %v2432 = vperm.slane %v1992, 6
        %v2433 = vperm.slane %v1993, 2
        %v2434 = vperm.slane %v1993, 6
        %v2441 = vperm.slane %v1994, 2
        %v2442 = vperm.slane %v1994, 6
        %v2443 = vperm.slane %v1995, 2
        %v2444 = vperm.slane %v1995, 6
        %v2451 = vperm.slane %v1886, 2
        %v2452 = vperm.slane %v1886, 6
        %v2453 = vperm.slane %v1887, 2
        %v2454 = vperm.slane %v1887, 6
        %v2461 = vperm.slane %v1996, 2
        %v2462 = vperm.slane %v1996, 6
        %v2463 = vperm.slane %v1997, 2
        %v2464 = vperm.slane %v1997, 6
        %v2469 = vsel %vm2070, %v2391, %v2401
        %v2470 = vsel %vm2070, %v2392, %v2402
        %v2471 = vsel %vm2070, %v2393, %v2403
        %v2472 = vsel %vm2070, %v2394, %v2404
        %v2473 = vsel %vm2075, %v2469, %v2411
        %v2474 = vsel %vm2075, %v2470, %v2412
        %v2475 = vsel %vm2075, %v2471, %v2413
        %v2476 = vsel %vm2075, %v2472, %v2414
        %v2477 = vsel %vm1628, %v2473, %v2421
        %v2478 = vsel %vm1628, %v2474, %v2422
        %v2479 = vsel %vm1628, %v2475, %v2423
        %v2480 = vsel %vm1628, %v2476, %v2424
        %v2481 = vsel %vm1707, %v2477, %v2431
        %v2482 = vsel %vm1707, %v2478, %v2432
        %v2483 = vsel %vm1707, %v2479, %v2433
        %v2484 = vsel %vm1707, %v2480, %v2434
        %v2485 = vsel %vm2088, %v2481, %v2441
        %v2486 = vsel %vm2088, %v2482, %v2442
        %v2487 = vsel %vm2088, %v2483, %v2443
        %v2488 = vsel %vm2088, %v2484, %v2444
        %v2489 = vsel %vm2093, %v2485, %v2451
        %v2490 = vsel %vm2093, %v2486, %v2452
        %v2491 = vsel %vm2093, %v2487, %v2453
        %v2492 = vsel %vm2093, %v2488, %v2454
        %v2493 = vsel %vm2098, %v2489, %v2461
        %v2494 = vsel %vm2098, %v2490, %v2462
        %v2495 = vsel %vm2098, %v2491, %v2463
        %v2496 = vsel %vm2098, %v2492, %v2464
        %v2497 = vmul.f32 %v1272, %v2493
        %v2498 = vmul.f32 %v1335, %v2494
        %v2499 = vmul.f32 %v1398, %v2495
        %v2500 = vmul.f32 %v1461, %v2496
        %v2501 = vadd.f32 %v2363, %v2497
        %v2502 = vadd.f32 %v2364, %v2498
        %v2503 = vadd.f32 %v2365, %v2499
        %v2504 = vadd.f32 %v2366, %v2500
        %v2505 = vmul.f32 %v1285, %v2493
        %v2506 = vmul.f32 %v1348, %v2494
        %v2507 = vmul.f32 %v1411, %v2495
        %v2508 = vmul.f32 %v1474, %v2496
        %v2509 = vadd.f32 %v2371, %v2505
        %v2510 = vadd.f32 %v2372, %v2506
        %v2511 = vadd.f32 %v2373, %v2507
        %v2512 = vadd.f32 %v2374, %v2508
        %v2513 = vmul.f32 %v1297, %v2493
        %v2514 = vmul.f32 %v1360, %v2494
        %v2515 = vmul.f32 %v1423, %v2495
        %v2516 = vmul.f32 %v1486, %v2496
        %v2517 = vadd.f32 %v2379, %v2513
        %v2518 = vadd.f32 %v2380, %v2514
        %v2519 = vadd.f32 %v2381, %v2515
        %v2520 = vadd.f32 %v2382, %v2516
        %v2521 = vmul.f32 %v1310, %v2493
        %v2522 = vmul.f32 %v1373, %v2494
        %v2523 = vmul.f32 %v1436, %v2495
        %v2524 = vmul.f32 %v1499, %v2496
        %v2525 = vadd.f32 %v2387, %v2521
        %v2526 = vadd.f32 %v2388, %v2522
        %v2527 = vadd.f32 %v2389, %v2523
        %v2528 = vadd.f32 %v2390, %v2524
        %v2531 = vperm.slane %v1998, 2
        %v2532 = vperm.slane %v1998, 6
        %v2533 = vperm.slane %v1999, 2
        %v2534 = vperm.slane %v1999, 6
        %v2541 = vperm.slane %v2000, 2
        %v2542 = vperm.slane %v2000, 6
        %v2543 = vperm.slane %v2001, 2
        %v2544 = vperm.slane %v2001, 6
        %v2551 = vperm.slane %v2006, 2
        %v2552 = vperm.slane %v2006, 6
        %v2553 = vperm.slane %v2007, 2
        %v2554 = vperm.slane %v2007, 6
        %v2561 = vperm.slane %v1836, 0
        %v2562 = vperm.slane %v1836, 4
        %v2563 = vperm.slane %v1837, 0
        %v2564 = vperm.slane %v1837, 4
        %v2569 = vsel %vm2070, %v2531, %v2541
        %v2570 = vsel %vm2070, %v2532, %v2542
        %v2571 = vsel %vm2070, %v2533, %v2543
        %v2572 = vsel %vm2070, %v2534, %v2544
        %v2573 = vsel %vm2075, %v2569, %v2551
        %v2574 = vsel %vm2075, %v2570, %v2552
        %v2575 = vsel %vm2075, %v2571, %v2553
        %v2576 = vsel %vm2075, %v2572, %v2554
        %v2577 = vsel %vm1628, %v2573, %v2561
        %v2578 = vsel %vm1628, %v2574, %v2562
        %v2579 = vsel %vm1628, %v2575, %v2563
        %v2580 = vsel %vm1628, %v2576, %v2564
        %v2581 = vsel %vm1707, %v2577, 0.0
        %v2582 = vsel %vm1707, %v2578, 0.0
        %v2583 = vsel %vm1707, %v2579, 0.0
        %v2584 = vsel %vm1707, %v2580, 0.0
        %v2585 = vsel %vm2088, %v2581, 0.0
        %v2586 = vsel %vm2088, %v2582, 0.0
        %v2587 = vsel %vm2088, %v2583, 0.0
        %v2588 = vsel %vm2088, %v2584, 0.0
        %v2589 = vsel %vm2093, %v2585, 0.0
        %v2590 = vsel %vm2093, %v2586, 0.0
        %v2591 = vsel %vm2093, %v2587, 0.0
        %v2592 = vsel %vm2093, %v2588, 0.0
        %v2593 = vsel %vm2098, %v2589, 0.0
        %v2594 = vsel %vm2098, %v2590, 0.0
        %v2595 = vsel %vm2098, %v2591, 0.0
        %v2596 = vsel %vm2098, %v2592, 0.0
        %v2597 = vmul.f32 %v1275, %v2593
        %v2598 = vmul.f32 %v1338, %v2594
        %v2599 = vmul.f32 %v1401, %v2595
        %v2600 = vmul.f32 %v1464, %v2596
        %v2601 = vadd.f32 %v2501, %v2597
        %v2602 = vadd.f32 %v2502, %v2598
        %v2603 = vadd.f32 %v2503, %v2599
        %v2604 = vadd.f32 %v2504, %v2600
        %v2605 = vmul.f32 %v1287, %v2593
        %v2606 = vmul.f32 %v1350, %v2594
        %v2607 = vmul.f32 %v1413, %v2595
        %v2608 = vmul.f32 %v1476, %v2596
        %v2609 = vadd.f32 %v2509, %v2605
        %v2610 = vadd.f32 %v2510, %v2606
        %v2611 = vadd.f32 %v2511, %v2607
        %v2612 = vadd.f32 %v2512, %v2608
        %v2613 = vmul.f32 %v1300, %v2593
        %v2614 = vmul.f32 %v1363, %v2594
        %v2615 = vmul.f32 %v1426, %v2595
        %v2616 = vmul.f32 %v1489, %v2596
        %v2617 = vadd.f32 %v2517, %v2613
        %v2618 = vadd.f32 %v2518, %v2614
        %v2619 = vadd.f32 %v2519, %v2615
        %v2620 = vadd.f32 %v2520, %v2616
        %v2621 = vmul.f32 %v1312, %v2593
        %v2622 = vmul.f32 %v1375, %v2594
        %v2623 = vmul.f32 %v1438, %v2595
        %v2624 = vmul.f32 %v1501, %v2596
        %v2625 = vadd.f32 %v2525, %v2621
        %v2626 = vadd.f32 %v2526, %v2622
        %v2627 = vadd.f32 %v2527, %v2623
        %v2628 = vadd.f32 %v2528, %v2624
        %v2629 = vrot.slane %v2601, 4
        %v2630 = vadd.f32 %v2601, %v2629
        %v2631 = vrot.slane %v2630, 2
        %v2632 = vadd.f32 %v2630, %v2631
        %v2633 = vrot.slane %v2632, 1
        %v2634 = vadd.f32 %v2632, %v2633
        %v2635 = vrot.slane %v2602, 4
        %v2636 = vadd.f32 %v2602, %v2635
        %v2637 = vrot.slane %v2636, 2
        %v2638 = vadd.f32 %v2636, %v2637
        %v2639 = vrot.slane %v2638, 1
        %v2640 = vadd.f32 %v2638, %v2639
        %v2641 = vrot.slane %v2603, 4
        %v2642 = vadd.f32 %v2603, %v2641
        %v2643 = vrot.slane %v2642, 2
        %v2644 = vadd.f32 %v2642, %v2643
        %v2645 = vrot.slane %v2644, 1
        %v2646 = vadd.f32 %v2644, %v2645
        %v2647 = vrot.slane %v2604, 4
        %v2648 = vadd.f32 %v2604, %v2647
        %v2649 = vrot.slane %v2648, 2
        %v2650 = vadd.f32 %v2648, %v2649
        %v2651 = vrot.slane %v2650, 1
        %v2652 = vadd.f32 %v2650, %v2651
        %v2653 = vrot.slane %v2609, 4
        %v2654 = vadd.f32 %v2609, %v2653
        %v2655 = vrot.slane %v2654, 2
        %v2656 = vadd.f32 %v2654, %v2655
        %v2657 = vrot.slane %v2656, 1
        %v2658 = vadd.f32 %v2656, %v2657
        %v2659 = vrot.slane %v2610, 4
        %v2660 = vadd.f32 %v2610, %v2659
        %v2661 = vrot.slane %v2660, 2
        %v2662 = vadd.f32 %v2660, %v2661
        %v2663 = vrot.slane %v2662, 1
        %v2664 = vadd.f32 %v2662, %v2663
        %v2665 = vrot.slane %v2611, 4
        %v2666 = vadd.f32 %v2611, %v2665
        %v2667 = vrot.slane %v2666, 2
        %v2668 = vadd.f32 %v2666, %v2667
        %v2669 = vrot.slane %v2668, 1
        %v2670 = vadd.f32 %v2668, %v2669
        %v2671 = vrot.slane %v2612, 4
        %v2672 = vadd.f32 %v2612, %v2671
        %v2673 = vrot.slane %v2672, 2
        %v2674 = vadd.f32 %v2672, %v2673
        %v2675 = vrot.slane %v2674, 1
        %v2676 = vadd.f32 %v2674, %v2675
        %v2677 = vrot.slane %v2617, 4
        %v2678 = vadd.f32 %v2617, %v2677
        %v2679 = vrot.slane %v2678, 2
        %v2680 = vadd.f32 %v2678, %v2679
        %v2681 = vrot.slane %v2680, 1
        %v2682 = vadd.f32 %v2680, %v2681
        %v2683 = vrot.slane %v2618, 4
        %v2684 = vadd.f32 %v2618, %v2683
        %v2685 = vrot.slane %v2684, 2
        %v2686 = vadd.f32 %v2684, %v2685
        %v2687 = vrot.slane %v2686, 1
        %v2688 = vadd.f32 %v2686, %v2687
        %v2689 = vrot.slane %v2619, 4
        %v2690 = vadd.f32 %v2619, %v2689
        %v2691 = vrot.slane %v2690, 2
        %v2692 = vadd.f32 %v2690, %v2691
        %v2693 = vrot.slane %v2692, 1
        %v2694 = vadd.f32 %v2692, %v2693
        %v2695 = vrot.slane %v2620, 4
        %v2696 = vadd.f32 %v2620, %v2695
        %v2697 = vrot.slane %v2696, 2
        %v2698 = vadd.f32 %v2696, %v2697
        %v2699 = vrot.slane %v2698, 1
        %v2700 = vadd.f32 %v2698, %v2699
        %v2701 = vrot.slane %v2625, 4
        %v2702 = vadd.f32 %v2625, %v2701
        %v2703 = vrot.slane %v2702, 2
        %v2704 = vadd.f32 %v2702, %v2703
        %v2705 = vrot.slane %v2704, 1
        %v2706 = vadd.f32 %v2704, %v2705
        %v2707 = vrot.slane %v2626, 4
        %v2708 = vadd.f32 %v2626, %v2707
        %v2709 = vrot.slane %v2708, 2
        %v2710 = vadd.f32 %v2708, %v2709
        %v2711 = vrot.slane %v2710, 1
        %v2712 = vadd.f32 %v2710, %v2711
        %v2713 = vrot.slane %v2627, 4
        %v2714 = vadd.f32 %v2627, %v2713
        %v2715 = vrot.slane %v2714, 2
        %v2716 = vadd.f32 %v2714, %v2715
        %v2717 = vrot.slane %v2716, 1
        %v2718 = vadd.f32 %v2716, %v2717
        %v2719 = vrot.slane %v2628, 4
        %v2720 = vadd.f32 %v2628, %v2719
        %v2721 = vrot.slane %v2720, 2
        %v2722 = vadd.f32 %v2720, %v2721
        %v2723 = vrot.slane %v2722, 1
        %v2724 = vadd.f32 %v2722, %v2723
        %v2725 = vsub.f32 %v2634, 2.0
        %v2726 = vsub.f32 %v2640, 2.0
        %v2727 = vsub.f32 %v2646, 2.0
        %v2728 = vsub.f32 %v2652, 2.0
        %v2729 = vmul.f32 %v2725, 1.442695
        %v2730 = vpow.pop %v2729
        %v2731 = vmul.f32 %v2726, 1.442695
        %v2732 = vpow.pop %v2731
        %v2733 = vmul.f32 %v2727, 1.442695
        %v2734 = vpow.pop %v2733
        %v2735 = vmul.f32 %v2728, 1.442695
        %v2736 = vpow.pop %v2735
        %v2737 = vxor.u32 %v2658, 2147483648
        %v2738 = vxor.u32 %v2664, 2147483648
        %v2739 = vxor.u32 %v2670, 2147483648
        %v2740 = vxor.u32 %v2676, 2147483648
        %v2741 = vmul.f32 %v2737, 1.442695
        %v2742 = vpow.pop %v2741
        %v2743 = vmul.f32 %v2738, 1.442695
        %v2744 = vpow.pop %v2743
        %v2745 = vmul.f32 %v2739, 1.442695
        %v2746 = vpow.pop %v2745
        %v2747 = vmul.f32 %v2740, 1.442695
        %v2748 = vpow.pop %v2747
        %v2749 = vadd.f32 %v2742, 1.0
        %v2750 = vadd.f32 %v2744, 1.0
        %v2751 = vadd.f32 %v2746, 1.0
        %v2752 = vadd.f32 %v2748, 1.0
        %v2753 = vrcp.pop %v2749
        %v2754 = vmul.f32 %v2749, %v2753
        %v2755 = vsub.f32 1.0, %v2754
        %v2756 = vmul.f32 %v2753, %v2755
        %v2757 = vadd.f32 %v2753, %v2756
        %vm2758 = vweird.f32 %v2749
        %vm2759 = vweird.f32 %v2753
        %vm2760 = vmor %vm2758, %vm2759
        %v2761 = vsel %vm2760, %v2753, %v2757
        %v2762 = vand.u32 2147483647, %v2749
        %vm2763 = vcmp.eq.f32.partialorder %v2762, 8.507059e+37
        %v2764 = vand.u32 %v2749, 2147483648
        %v2765 = vor.u32 1.1754944e-38, %v2764
        %v2766 = vsel %vm2763, %v2765, %v2761
        %v2767 = vmul.f32 1.0, %v2766
        %v2768 = vrcp.pop %v2750
        %v2769 = vmul.f32 %v2750, %v2768
        %v2770 = vsub.f32 1.0, %v2769
        %v2771 = vmul.f32 %v2768, %v2770
        %v2772 = vadd.f32 %v2768, %v2771
        %vm2773 = vweird.f32 %v2750
        %vm2774 = vweird.f32 %v2768
        %vm2775 = vmor %vm2773, %vm2774
        %v2776 = vsel %vm2775, %v2768, %v2772
        %v2777 = vand.u32 2147483647, %v2750
        %vm2778 = vcmp.eq.f32.partialorder %v2777, 8.507059e+37
        %v2779 = vand.u32 %v2750, 2147483648
        %v2780 = vor.u32 1.1754944e-38, %v2779
        %v2781 = vsel %vm2778, %v2780, %v2776
        %v2782 = vmul.f32 1.0, %v2781
        %v2783 = vrcp.pop %v2751
        %v2784 = vmul.f32 %v2751, %v2783
        %v2785 = vsub.f32 1.0, %v2784
        %v2786 = vmul.f32 %v2783, %v2785
        %v2787 = vadd.f32 %v2783, %v2786
        %vm2788 = vweird.f32 %v2751
        %vm2789 = vweird.f32 %v2783
        %vm2790 = vmor %vm2788, %vm2789
        %v2791 = vsel %vm2790, %v2783, %v2787
        %v2792 = vand.u32 2147483647, %v2751
        %vm2793 = vcmp.eq.f32.partialorder %v2792, 8.507059e+37
        %v2794 = vand.u32 %v2751, 2147483648
        %v2795 = vor.u32 1.1754944e-38, %v2794
        %v2796 = vsel %vm2793, %v2795, %v2791
        %v2797 = vmul.f32 1.0, %v2796
        %v2798 = vrcp.pop %v2752
        %v2799 = vmul.f32 %v2752, %v2798
        %v2800 = vsub.f32 1.0, %v2799
        %v2801 = vmul.f32 %v2798, %v2800
        %v2802 = vadd.f32 %v2798, %v2801
        %vm2803 = vweird.f32 %v2752
        %vm2804 = vweird.f32 %v2798
        %vm2805 = vmor %vm2803, %vm2804
        %v2806 = vsel %vm2805, %v2798, %v2802
        %v2807 = vand.u32 2147483647, %v2752
        %vm2808 = vcmp.eq.f32.partialorder %v2807, 8.507059e+37
        %v2809 = vand.u32 %v2752, 2147483648
        %v2810 = vor.u32 1.1754944e-38, %v2809
        %v2811 = vsel %vm2808, %v2810, %v2806
        %v2812 = vmul.f32 1.0, %v2811
        %v2813 = vxor.u32 %v2682, 2147483648
        %v2814 = vxor.u32 %v2688, 2147483648
        %v2815 = vxor.u32 %v2694, 2147483648
        %v2816 = vxor.u32 %v2700, 2147483648
        %v2817 = vmul.f32 %v2813, 1.442695
        %v2818 = vpow.pop %v2817
        %v2819 = vmul.f32 %v2814, 1.442695
        %v2820 = vpow.pop %v2819
        %v2821 = vmul.f32 %v2815, 1.442695
        %v2822 = vpow.pop %v2821
        %v2823 = vmul.f32 %v2816, 1.442695
        %v2824 = vpow.pop %v2823
        %v2825 = vadd.f32 %v2818, 1.0
        %v2826 = vadd.f32 %v2820, 1.0
        %v2827 = vadd.f32 %v2822, 1.0
        %v2828 = vadd.f32 %v2824, 1.0
        %v2829 = vrcp.pop %v2825
        %v2830 = vmul.f32 %v2825, %v2829
        %v2831 = vsub.f32 1.0, %v2830
        %v2832 = vmul.f32 %v2829, %v2831
        %v2833 = vadd.f32 %v2829, %v2832
        %vm2834 = vweird.f32 %v2825
        %vm2835 = vweird.f32 %v2829
        %vm2836 = vmor %vm2834, %vm2835
        %v2837 = vsel %vm2836, %v2829, %v2833
        %v2838 = vand.u32 2147483647, %v2825
        %vm2839 = vcmp.eq.f32.partialorder %v2838, 8.507059e+37
        %v2840 = vand.u32 %v2825, 2147483648
        %v2841 = vor.u32 1.1754944e-38, %v2840
        %v2842 = vsel %vm2839, %v2841, %v2837
        %v2843 = vmul.f32 1.0, %v2842
        %v2844 = vrcp.pop %v2826
        %v2845 = vmul.f32 %v2826, %v2844
        %v2846 = vsub.f32 1.0, %v2845
        %v2847 = vmul.f32 %v2844, %v2846
        %v2848 = vadd.f32 %v2844, %v2847
        %vm2849 = vweird.f32 %v2826
        %vm2850 = vweird.f32 %v2844
        %vm2851 = vmor %vm2849, %vm2850
        %v2852 = vsel %vm2851, %v2844, %v2848
        %v2853 = vand.u32 2147483647, %v2826
        %vm2854 = vcmp.eq.f32.partialorder %v2853, 8.507059e+37
        %v2855 = vand.u32 %v2826, 2147483648
        %v2856 = vor.u32 1.1754944e-38, %v2855
        %v2857 = vsel %vm2854, %v2856, %v2852
        %v2858 = vmul.f32 1.0, %v2857
        %v2859 = vrcp.pop %v2827
        %v2860 = vmul.f32 %v2827, %v2859
        %v2861 = vsub.f32 1.0, %v2860
        %v2862 = vmul.f32 %v2859, %v2861
        %v2863 = vadd.f32 %v2859, %v2862
        %vm2864 = vweird.f32 %v2827
        %vm2865 = vweird.f32 %v2859
        %vm2866 = vmor %vm2864, %vm2865
        %v2867 = vsel %vm2866, %v2859, %v2863
        %v2868 = vand.u32 2147483647, %v2827
        %vm2869 = vcmp.eq.f32.partialorder %v2868, 8.507059e+37
        %v2870 = vand.u32 %v2827, 2147483648
        %v2871 = vor.u32 1.1754944e-38, %v2870
        %v2872 = vsel %vm2869, %v2871, %v2867
        %v2873 = vmul.f32 1.0, %v2872
        %v2874 = vrcp.pop %v2828
        %v2875 = vmul.f32 %v2828, %v2874
        %v2876 = vsub.f32 1.0, %v2875
        %v2877 = vmul.f32 %v2874, %v2876
        %v2878 = vadd.f32 %v2874, %v2877
        %vm2879 = vweird.f32 %v2828
        %vm2880 = vweird.f32 %v2874
        %vm2881 = vmor %vm2879, %vm2880
        %v2882 = vsel %vm2881, %v2874, %v2878
        %v2883 = vand.u32 2147483647, %v2828
        %vm2884 = vcmp.eq.f32.partialorder %v2883, 8.507059e+37
        %v2885 = vand.u32 %v2828, 2147483648
        %v2886 = vor.u32 1.1754944e-38, %v2885
        %v2887 = vsel %vm2884, %v2886, %v2882
        %v2888 = vmul.f32 1.0, %v2887
        %v2889 = vxor.u32 %v2706, 2147483648
        %v2890 = vxor.u32 %v2712, 2147483648
        %v2891 = vxor.u32 %v2718, 2147483648
        %v2892 = vxor.u32 %v2724, 2147483648
        %v2893 = vmul.f32 %v2889, 1.442695
        %v2894 = vpow.pop %v2893
        %v2895 = vmul.f32 %v2890, 1.442695
        %v2896 = vpow.pop %v2895
        %v2897 = vmul.f32 %v2891, 1.442695
        %v2898 = vpow.pop %v2897
        %v2899 = vmul.f32 %v2892, 1.442695
        %v2900 = vpow.pop %v2899
        %v2901 = vadd.f32 %v2894, 1.0
        %v2902 = vadd.f32 %v2896, 1.0
        %v2903 = vadd.f32 %v2898, 1.0
        %v2904 = vadd.f32 %v2900, 1.0
        %v2905 = vrcp.pop %v2901
        %v2906 = vmul.f32 %v2901, %v2905
        %v2907 = vsub.f32 1.0, %v2906
        %v2908 = vmul.f32 %v2905, %v2907
        %v2909 = vadd.f32 %v2905, %v2908
        %vm2910 = vweird.f32 %v2901
        %vm2911 = vweird.f32 %v2905
        %vm2912 = vmor %vm2910, %vm2911
        %v2913 = vsel %vm2912, %v2905, %v2909
        %v2914 = vand.u32 2147483647, %v2901
        %vm2915 = vcmp.eq.f32.partialorder %v2914, 8.507059e+37
        %v2916 = vand.u32 %v2901, 2147483648
        %v2917 = vor.u32 1.1754944e-38, %v2916
        %v2918 = vsel %vm2915, %v2917, %v2913
        %v2919 = vmul.f32 1.0, %v2918
        %v2920 = vrcp.pop %v2902
        %v2921 = vmul.f32 %v2902, %v2920
        %v2922 = vsub.f32 1.0, %v2921
        %v2923 = vmul.f32 %v2920, %v2922
        %v2924 = vadd.f32 %v2920, %v2923
        %vm2925 = vweird.f32 %v2902
        %vm2926 = vweird.f32 %v2920
        %vm2927 = vmor %vm2925, %vm2926
        %v2928 = vsel %vm2927, %v2920, %v2924
        %v2929 = vand.u32 2147483647, %v2902
        %vm2930 = vcmp.eq.f32.partialorder %v2929, 8.507059e+37
        %v2931 = vand.u32 %v2902, 2147483648
        %v2932 = vor.u32 1.1754944e-38, %v2931
        %v2933 = vsel %vm2930, %v2932, %v2928
        %v2934 = vmul.f32 1.0, %v2933
        %v2935 = vrcp.pop %v2903
        %v2936 = vmul.f32 %v2903, %v2935
        %v2937 = vsub.f32 1.0, %v2936
        %v2938 = vmul.f32 %v2935, %v2937
        %v2939 = vadd.f32 %v2935, %v2938
        %vm2940 = vweird.f32 %v2903
        %vm2941 = vweird.f32 %v2935
        %vm2942 = vmor %vm2940, %vm2941
        %v2943 = vsel %vm2942, %v2935, %v2939
        %v2944 = vand.u32 2147483647, %v2903
        %vm2945 = vcmp.eq.f32.partialorder %v2944, 8.507059e+37
        %v2946 = vand.u32 %v2903, 2147483648
        %v2947 = vor.u32 1.1754944e-38, %v2946
        %v2948 = vsel %vm2945, %v2947, %v2943
        %v2949 = vmul.f32 1.0, %v2948
        %v2950 = vrcp.pop %v2904
        %v2951 = vmul.f32 %v2904, %v2950
        %v2952 = vsub.f32 1.0, %v2951
        %v2953 = vmul.f32 %v2950, %v2952
        %v2954 = vadd.f32 %v2950, %v2953
        %vm2955 = vweird.f32 %v2904
        %vm2956 = vweird.f32 %v2950
        %vm2957 = vmor %vm2955, %vm2956
        %v2958 = vsel %vm2957, %v2950, %v2954
        %v2959 = vand.u32 2147483647, %v2904
        %vm2960 = vcmp.eq.f32.partialorder %v2959, 8.507059e+37
        %v2961 = vand.u32 %v2904, 2147483648
        %v2962 = vor.u32 1.1754944e-38, %v2961
        %v2963 = vsel %vm2960, %v2962, %v2958
        %v2964 = vmul.f32 1.0, %v2963
        %v2965 = vsel %vm2070, %v2767, %v2843
        %v2966 = vsel %vm2070, %v2782, %v2858
        %v2967 = vsel %vm2070, %v2797, %v2873
        %v2968 = vsel %vm2070, %v2812, %v2888
        %v2969 = vsel %vm2075, %v2965, %v2919
        %v2970 = vsel %vm2075, %v2966, %v2934
        %v2971 = vsel %vm2075, %v2967, %v2949
        %v2972 = vsel %vm2075, %v2968, %v2964
        %v2973 = vmul.f32 %v2969, %v2730
        %v2974 = vmul.f32 %v2970, %v2732
        %v2975 = vmul.f32 %v2971, %v2734
        %v2976 = vmul.f32 %v2972, %v2736
        %v2981 = vrot.slane %v1595, 1
        %v2982 = vrot.slane %v1596, 1
        %v2983 = vrot.slane %v1597, 1
        %v2984 = vrot.slane %v1598, 1
        %v2993 = vrot.slane %v2973, 4
        %v2994 = vrot.slane %v2974, 4
        %v2995 = vrot.slane %v2975, 4
        %v2996 = vrot.slane %v2976, 4
        %v3001 = vsel %vm1628, %v2981, 0.0
        %v3002 = vsel %vm1628, %v2982, 0.0
        %v3003 = vsel %vm1628, %v2983, 0.0
        %v3004 = vsel %vm1628, %v2984, 0.0
        %v3005 = vsel %vm1707, %v3001, %v2993
        %v3006 = vsel %vm1707, %v3002, %v2994
        %v3007 = vsel %vm1707, %v3003, %v2995
        %v3008 = vsel %vm1707, %v3004, %v2996
        %v3009 = vsel %vm2098, %v3005, 0.0
        %v3010 = vsel %vm2098, %v3006, 0.0
        %v3011 = vsel %vm2098, %v3007, 0.0
        %v3012 = vsel %vm2098, %v3008, 0.0
        %3013 = vst [vmem:[%s299] sm:$0xff] %v3009
        %3014 = vst [vmem:[%s299 + $0x8] sm:$0xff] %v3010
        %3015 = vst [vmem:[%s299 + $0x10] sm:$0xff] %v3011
        %3016 = vst [vmem:[%s299 + $0x18] sm:$0xff] %v3012
        %s3017 = sand.u32 %s164, 1
        %s3018 = scalar_lea.sflag [#allocation4], %s3017
        %s3019 = sand.u32 %s164, 1
        %s3020 = smul.addr %s3019, 32
        %s3021 = scalar_lea.vmem [#allocation3], %s3020
        // Predicated region
        $region68: #{tpu_custom_call.1} parent=62 // pred_check
          %p3022 = pneg %p174
        $region69: #{tpu_custom_call.1} parent=62 // pred_check_branch
          %3024 = sbr.rel (%p3022) target = $region71
        $region70: #{tpu_custom_call.1} parent=62 // pred_region
          %s3025 = smul.u32 4, %s20
          %3027 = vsyncadd %s3018, 0
          %s3028 = smul.addr %s3025, 8
          %s3029 = scalar_lea.hbm %s6, %s3028
          %s3031 = sshll.u32 %s3021, 4
          %s3032 = int_to_ptr.vmem [resolvable:$true] %s3031
          %s3033 = sshll.u32 %s3029, 4
          %s3034 = int_to_ptr.hbm [resolvable:$true] %s3033
          %3036 = dma.vmem_to_hbm [thread:$0]  %s3032, 512, %s3034, %s3018
        $region71: #{tpu_custom_call.1} parent=62 // pred_fallthru
          _
      $region63: #{tpu_custom_call.1} parent=5 // pred_fallthru
        _
      %p3037 = scmp.le.s32.totalorder 2, %s15
      // Predicated region
      $region72: #{tpu_custom_call.1} parent=5 // pred_check
        %p3038 = pneg %p3037
      $region73: #{tpu_custom_call.1} parent=5 // pred_check_branch
        %3040 = sbr.rel (%p3038) target = $region75
      $region74: #{tpu_custom_call.1} parent=5 // pred_region
        %s3041 = ssub.s32 %s15, 2
        // Predicated region
        $region76: #{tpu_custom_call.1} parent=74 // pred_check
          %p3042 = pneg %p180
        $region77: #{tpu_custom_call.1} parent=74 // pred_check_branch
          %3044 = sbr.rel (%p3042) target = $region79
        $region78: #{tpu_custom_call.1} parent=74 // pred_region
          %s3045 = sand.u32 %s165, 1
          %s3046 = scalar_lea.sflag [#allocation4], %s3045
          %s3047 = sand.u32 %s165, 1
          %s3048 = smul.addr %s3047, 32
          %s3049 = scalar_lea.vmem [#allocation3], %s3048
          %3051 = dma.done %s3046, 512
        $region79: #{tpu_custom_call.1} parent=74 // pred_fallthru
          _
      $region75: #{tpu_custom_call.1} parent=5 // pred_fallthru
        _
    $region6: #{tpu_custom_call.1} parent=1 // loop_footer
      %s19 = sadd.s32 1, %s15
    $region7: #{tpu_custom_call.1} parent=1 // loop_footer_branch
      %14 = sbr.rel target = $region3
    $region8: #{tpu_custom_call.1} parent=1 // loop_exit
      _
    %3052 = vsyncpa [#allocation4], 1
    %s3053 = scalar_lea.sflag [#allocation4], 1
    %3054 = vsyncpa %s3053, 1

</llo_original>
